<compile_context>
chip_gen: v7x
topology: tpu7x:2x2x1
jax: 0.10.0
libtpu: 0.0.40
codegen_flags: <defaults>
</compile_context>

<pallas_src>
import jax
import jax.numpy as jnp
from jax.experimental import pallas as pl
from jax.experimental.pallas import tpu as pltpu


# ----------------------------------------------------------------------------
# Fused kernel (closure over the static shapes B, T, H)
# ----------------------------------------------------------------------------
def _make_fused_kernel(B, T, H):
    f32, bf16 = jnp.float32, jnp.bfloat16

    def kernel(x_ref, cw1_ref, cw2_ref, cw3_ref, cbn_ref,
               wih_ref, whh_ref, bl_ref,
               wa_ref, ba_ref, va_ref, sel_ref,
               w1_ref, b1_ref, w2_ref, b2_ref, w3_ref, b3_ref,
               o_ref, hs_ref):

        # -------- encoder: 3x [Conv1d -> ReLU -> eval-BatchNorm1d], time-major --------
        def conv_relu_bn(a, wk_ref, layer, t_in):
            # a: (t_in*B, Cin) with row = t*B + b ;  wk: (Cin*K, Cout) bf16
            wk = wk_ref[...]
            cin = a.shape[1]
            k_sz = wk.shape[0] // cin
            t_out = t_in - k_sz + 1
            # time-major: each im2col tap is ONE contiguous row slice (no per-batch gather)
            taps = [a[k * B:(k + t_out) * B, :] for k in range(k_sz)]
            cols = jnp.concatenate(taps, axis=1)                       # (t_out*B, Cin*K)
            y = jnp.dot(cols.astype(bf16), wk, preferred_element_type=f32)
            bias = cbn_ref[3 * layer + 0:3 * layer + 1, :]             # (1, Cout)
            scale = cbn_ref[3 * layer + 1:3 * layer + 2, :]
            shift = cbn_ref[3 * layer + 2:3 * layer + 3, :]
            y = jnp.maximum(y + bias, 0.0)        # conv bias + ReLU (module order Conv->ReLU->BN)
            y = y * scale + shift                 # eval BatchNorm1d folded to an affine
            return y, t_out

        a, t1 = conv_relu_bn(x_ref[...], cw1_ref, 0, T)
        a, t2 = conv_relu_bn(a, cw2_ref, 1, t1)
        a, t3 = conv_relu_bn(a, cw3_ref, 2, t2)                        # (t3*B, H), time-major

        # -------- fused LSTM pair (lstm1 | lstm2): 8H = 128-lane gates --------
        # Input projection for ALL timesteps hoisted into one matmul (bias folded in).
        xg = jnp.dot(a.astype(bf16), wih_ref[...],
                     preferred_element_type=f32) + bl_ref[...]         # (t3*B, 8H) f32
        whh = whh_ref[...]                                             # (2H, 8H) bf16, block-diag
        h_cat = jnp.zeros((B, 2 * H), f32)                             # [h1 | h2]
        c_cat = jnp.zeros((B, 2 * H), f32)                             # [c1 | c2]
        for t in range(t3):                                            # static unroll (t3 = 12)
            gates = xg[t * B:(t + 1) * B, :] + jnp.dot(                # contiguous (B, 8H) slice
                h_cat.astype(bf16), whh, preferred_element_type=f32)   # (B, 128)
            sig = jax.nn.sigmoid(gates[:, :6 * H])                     # [i1 i2 | f1 f2 | o1 o2]
            g_cat = jnp.tanh(gates[:, 6 * H:])                         # [g1 g2]
            c_cat = sig[:, 2 * H:4 * H] * c_cat + sig[:, :2 * H] * g_cat
            h_cat = sig[:, 4 * H:6 * H] * jnp.tanh(c_cat)
            hs_ref[t * B:(t + 1) * B, :] = h_cat                       # time-major VMEM store
        hs = hs_ref[...]                                               # (t3*B, 2H) f32
        hs_bf = hs.astype(bf16)

        # -------- fused SoftAttention pair, vectorized over batch (2D ops only) --------
        # score_t = tanh(W h_t + b) @ v ; softmax over time ; sum_t w_t * h_t
        proj = jnp.tanh(jnp.dot(hs_bf, wa_ref[...],
                                preferred_element_type=f32) + ba_ref[...])
        scores = jnp.dot(proj.astype(bf16), va_ref[...],
                         preferred_element_type=f32)                   # (t3*B, 2)
        # global max shift (constant within every softmax group -> exact softmax)
        gmax = jnp.max(jnp.max(scores, axis=1, keepdims=True), axis=0, keepdims=True)
        e = jnp.exp(scores - gmax)                                     # (t3*B, 2)
        e_full = jnp.concatenate(
            [jnp.broadcast_to(e[:, 0:1], (t3 * B, H)),
             jnp.broadcast_to(e[:, 1:2], (t3 * B, H))], axis=1)        # (t3*B, 2H)
        sel = sel_ref[...]                                             # (B, t3*B) 0/1, bf16
        # per-batch time reductions mapped onto the MXU via the selection matrix
        att_un = jnp.dot(sel, (e_full * hs).astype(bf16),
                         preferred_element_type=f32)                   # (B, 2H) unnormalized
        denom = jnp.dot(sel, e.astype(bf16), preferred_element_type=f32)   # (B, 2)
        inv = pl.reciprocal(denom, approx=True)                        # EUP slot
        inv_full = jnp.concatenate(
            [jnp.broadcast_to(inv[:, 0:1], (B, H)),
             jnp.broadcast_to(inv[:, 1:2], (B, H))], axis=1)
        att = att_un * inv_full                                        # (B, 2H) = [att1 | att2]

        # -------- fused MLP heads (age | gender); Dropout == identity in eval --------
        h1 = jnp.maximum(jnp.dot(att.astype(bf16), w1_ref[...],
                                 preferred_element_type=f32) + b1_ref[...], 0.0)
        h2 = jnp.maximum(jnp.dot(h1.astype(bf16), w2_ref[...],
                                 preferred_element_type=f32) + b2_ref[...], 0.0)
        # w3/b3 zero-padded to 128 output lanes -> lane-dense store; cols 0/1 = age/gender
        o_ref[...] = jnp.dot(h2.astype(bf16), w3_ref[...],
                             preferred_element_type=f32) + b3_ref[...]

    return kernel


# ----------------------------------------------------------------------------
# Wrapper-side weight fusion (trace-time; constant-folded under jit)
# ----------------------------------------------------------------------------
def _fused_weights(p, H, t3, B):
    f32, bf16 = jnp.float32, jnp.bfloat16

    def conv_w(cp):
        # (Cout, Cin, K) -> (K*Cin, Cout), row index = k*Cin + c (matches im2col columns)
        cout = cp["w"].shape[0]
        return jnp.transpose(cp["w"], (2, 1, 0)).reshape(-1, cout).astype(bf16)

    def bn_rows(cp):
        inv = 1.0 / jnp.sqrt(cp["var"] + 1e-5)
        scale = cp["gamma"] * inv
        shift = cp["beta"] - cp["mean"] * scale
        return [cp["b"], scale, shift]

    cbn = jnp.stack(bn_rows(p["conv1"]) + bn_rows(p["conv2"]) + bn_rows(p["conv3"]),
                    axis=0).astype(f32)                                # (9, H)

    # fused LSTM pair -- gate column order [i1 i2 f1 f2 o1 o2 g1 g2] (PyTorch rows i,f,g,o)
    lps = (p["lstm1"], p["lstm2"])
    gate_order = [(0, 0), (0, 1), (1, 0), (1, 1), (3, 0), (3, 1), (2, 0), (2, 1)]
    wih_blk, whh_blk, b_blk = [], [], []
    z = jnp.zeros((H, H), f32)
    for gk, j in gate_order:
        lp = lps[j]
        rows = slice(gk * H, (gk + 1) * H)
        wih_blk.append(lp["w_ih"][rows, :].T)                          # (H, H)
        b_blk.append(lp["b_ih"][rows] + lp["b_hh"][rows])
        blk = lp["w_hh"][rows, :].T                                    # reads h_j only
        whh_blk.append(jnp.concatenate([blk, z] if j == 0 else [z, blk], axis=0))  # (2H, H)
    wih = jnp.concatenate(wih_blk, axis=1).astype(bf16)                # (H, 8H)
    whh = jnp.concatenate(whh_blk, axis=1).astype(bf16)                # (2H, 8H) block-diag
    bl = jnp.concatenate(b_blk).reshape(1, 8 * H).astype(f32)

    # fused SoftAttention pair (block-diagonal)
    wa = jnp.concatenate(
        [jnp.concatenate([p["attn1"]["w"].T, z], axis=1),
         jnp.concatenate([z, p["attn2"]["w"].T], axis=1)], axis=0).astype(bf16)    # (2H, 2H)
    ba = jnp.concatenate([p["attn1"]["b"], p["attn2"]["b"]]).reshape(1, 2 * H).astype(f32)
    zv = jnp.zeros((H, 1), f32)
    va = jnp.concatenate(
        [jnp.concatenate([p["attn1"]["v"].reshape(H, 1), zv], axis=1),
         jnp.concatenate([zv, p["attn2"]["v"].reshape(H, 1)], axis=1)],
        axis=0).astype(bf16)                                           # (2H, 2)

    # 0/1 selection matrix: sel[b, t*B + b] = 1 -> per-batch time reductions as matmuls
    sel = (jnp.arange(t3 * B)[None, :] % B == jnp.arange(B)[:, None]).astype(bf16)  # (B, t3*B)

    # fused MLP heads (block-diagonal, pre-transposed to (in, out))
    def block_diag_t(w_age, w_gen):
        a, g = w_age.T, w_gen.T
        za = jnp.zeros((a.shape[0], g.shape[1]), f32)
        zg = jnp.zeros((g.shape[0], a.shape[1]), f32)
        return jnp.concatenate([jnp.concatenate([a, za], axis=1),
                                jnp.concatenate([zg, g], axis=1)], axis=0)

    ha, hg = p["age"], p["gender"]
    w1 = block_diag_t(ha["w1"], hg["w1"]).astype(bf16)
    b1 = jnp.concatenate([ha["b1"], hg["b1"]]).reshape(1, -1).astype(f32)
    w2 = block_diag_t(ha["w2"], hg["w2"]).astype(bf16)
    b2 = jnp.concatenate([ha["b2"], hg["b2"]]).reshape(1, -1).astype(f32)
    w3_small = block_diag_t(ha["w3"], hg["w3"])                        # (2*H4, 2)
    b3_small = jnp.concatenate([ha["b3"], hg["b3"]]).reshape(1, -1)
    # pad the final layer to 128 output lanes (lane-dense output store)
    w3 = jnp.zeros((w3_small.shape[0], 128), f32).at[:, :2].set(w3_small).astype(bf16)
    b3 = jnp.zeros((1, 128), f32).at[:, :2].set(b3_small)

    return (conv_w(p["conv1"]), conv_w(p["conv2"]), conv_w(p["conv3"]), cbn,
            wih, whh, bl, wa, ba, va, sel, w1, b1, w2, b2, w3, b3)


# ----------------------------------------------------------------------------
# Forward wrapper: single pallas_call, grid=(), everything resident in VMEM
# ----------------------------------------------------------------------------
def spectral_cnn_lstm_forward(x, p):
    # x: (B, 1, N_MFCC, T) -- PyTorch NCHW-style input
    B, _, n_mfcc, T = x.shape
    H = p["lstm1"]["w_hh"].shape[1]                     # hidden_size // 2
    t3 = T - 7 + 1 - 5 + 1 - 3 + 1                      # encoder output length

    # TIME-MAJOR tokens-on-rows layout (row = t*B + b): one cheap XLA relayout per call
    x_rows = jnp.squeeze(x, axis=1).transpose(2, 0, 1).reshape(T * B, n_mfcc)

    weights = _fused_weights(p, H, t3, B)
    kernel = _make_fused_kernel(B, T, H)
    vmem = pl.BlockSpec(memory_space=pltpu.MemorySpace.VMEM)

    # advisory cost estimate (helps XLA overlap this microsecond-scale custom call)
    t1, t2 = T - 6, T - 10
    flops = 2 * (t1 * B * (n_mfcc * 7) * H + t2 * B * (H * 5) * H + t3 * B * (H * 3) * H
                 + t3 * B * H * 8 * H + t3 * B * 2 * H * 8 * H
                 + t3 * B * 2 * H * 2 * H + t3 * B * 2 * H * 2
                 + 2 * B * t3 * B * 2 * H
                 + B * 2 * H * 2 * H + B * 2 * H * H + B * H * 128)
    transcendentals = t3 * B * (8 * H + 2 * H) + t3 * B * (2 * H + 2) + B * 2
    bytes_accessed = int(x_rows.size * 4
                         + sum(w.size * w.dtype.itemsize for w in weights)
                         + B * 128 * 4)

    out = pl.pallas_call(
        kernel,
        out_shape=jax.ShapeDtypeStruct((B, 128), jnp.float32),
        in_specs=[vmem] * (1 + len(weights)),
        out_specs=vmem,
        scratch_shapes=[pltpu.VMEM((t3 * B, 2 * H), jnp.float32)],      # time-major hs buffer
        cost_estimate=pl.CostEstimate(flops=int(flops),
                                      transcendentals=int(transcendentals),
                                      bytes_accessed=bytes_accessed),
    )(x_rows, *weights)

    age = out[:, 0:1]
    gender = out[:, 1:2]
    return age, gender


# ----------------------------------------------------------------------------
# Pure-JAX f32 reference (same eval semantics) for a correctness sanity check
# ----------------------------------------------------------------------------
def reference_forward(x, p):
    f32 = jnp.float32
    a = jnp.squeeze(x, axis=1).astype(f32)                              # (B, C, T)

    def conv1d(a, w, b):
        K, T = w.shape[2], a.shape[2]
        t_out = T - K + 1
        cols = jnp.stack([a[:, :, k:k + t_out] for k in range(K)], axis=-1)   # (B,Cin,T',K)
        return jnp.einsum("bitk,oik->bot", cols, w) + b[None, :, None]

    def enc_layer(a, cp):
        y = jnp.maximum(conv1d(a, cp["w"], cp["b"]), 0.0)
        inv = 1.0 / jnp.sqrt(cp["var"] + 1e-5)
        return ((y - cp["mean"][None, :, None]) * (cp["gamma"] * inv)[None, :, None]
                + cp["beta"][None, :, None])

    for name in ("conv1", "conv2", "conv3"):
        a = enc_layer(a, p[name])
    seq = jnp.transpose(a, (0, 2, 1))                                    # (B, T', H)
    B = seq.shape[0]
    Hh = p["lstm1"]["w_hh"].shape[1]

    def lstm(seq, lp):
        def step(carry, x_t):
            h, c = carry
            g = x_t @ lp["w_ih"].T + h @ lp["w_hh"].T + lp["b_ih"] + lp["b_hh"]
            i = jax.nn.sigmoid(g[:, 0:Hh])
            f = jax.nn.sigmoid(g[:, Hh:2 * Hh])
            gg = jnp.tanh(g[:, 2 * Hh:3 * Hh])
            o = jax.nn.sigmoid(g[:, 3 * Hh:4 * Hh])
            c = f * c + i * gg
            h = o * jnp.tanh(c)
            return (h, c), h
        init = (jnp.zeros((B, Hh), f32), jnp.zeros((B, Hh), f32))
        _, hs = jax.lax.scan(step, init, jnp.transpose(seq, (1, 0, 2)))
        return jnp.transpose(hs, (1, 0, 2))                              # (B, T', H)

    def soft_attn(h, ap):
        proj = jnp.tanh(jnp.einsum("bth,ah->bta", h, ap["w"]) + ap["b"])
        s = jnp.einsum("bta,a->bt", proj, ap["v"])
        w = jax.nn.softmax(s, axis=1)
        return jnp.einsum("bt,bth->bh", w, h)

    def head(z, hp):
        z = jnp.maximum(z @ hp["w1"].T + hp["b1"], 0.0)
        z = jnp.maximum(z @ hp["w2"].T + hp["b2"], 0.0)
        return z @ hp["w3"].T + hp["b3"]

    o1, o2 = lstm(seq, p["lstm1"]), lstm(seq, p["lstm2"])
    return (head(soft_attn(o1, p["attn1"]), p["age"]),
            head(soft_attn(o2, p["attn2"]), p["gender"]))


# ----------------------------------------------------------------------------
# Deterministic parameter initialization (shapes match the nn.Module __init__)
# ----------------------------------------------------------------------------
def init_params(key, n_mfcc, hidden_size):
    H2, H4 = hidden_size // 2, hidden_size // 4
    keys = iter(jax.random.split(key, 64))
    nk = lambda: next(keys)

    def u(shape, bound):
        return jax.random.uniform(nk(), shape, jnp.float32, -bound, bound)

    def conv_p(cin, cout, k):
        bd = 1.0 / (cin * k) ** 0.5
        return dict(
            w=u((cout, cin, k), bd), b=u((cout,), bd),
            gamma=1.0 + 0.1 * jax.random.normal(nk(), (cout,), jnp.float32),
            beta=0.1 * jax.random.normal(nk(), (cout,), jnp.float32),
            mean=0.1 * jax.random.normal(nk(), (cout,), jnp.float32),
            var=1.0 + 0.1 * jax.random.uniform(nk(), (cout,), jnp.float32))

    def lstm_p(h):
        bd = 1.0 / h ** 0.5
        return dict(w_ih=u((4 * h, h), bd), w_hh=u((4 * h, h), bd),
                    b_ih=u((4 * h,), bd), b_hh=u((4 * h,), bd))

    def attn_p(emb, att):
        bd = 1.0 / emb ** 0.5
        return dict(w=u((att, emb), bd), b=u((att,), bd),
                    v=u((att,), 1.0 / att ** 0.5))

    def lin(i, o):
        bd = 1.0 / i ** 0.5
        return u((o, i), bd), u((o,), bd)

    def head_p():
        w1, b1 = lin(H2, H2)
        w2, b2 = lin(H2, H4)
        w3, b3 = lin(H4, 1)
        return dict(w1=w1, b1=b1, w2=w2, b2=b2, w3=w3, b3=b3)

    return dict(conv1=conv_p(n_mfcc, H2, 7), conv2=conv_p(H2, H2, 5),
                conv3=conv_p(H2, H2, 3), lstm1=lstm_p(H2), lstm2=lstm_p(H2),
                attn1=attn_p(H2, H2), attn2=attn_p(H2, H2),
                age=head_p(), gender=head_p())


if __name__ == "__main__":
    N_MFCC = 8
    HIDDEN_SIZE = 32
    B, T = 2, 24

    key = jax.random.PRNGKey(0)
    pkey, xkey = jax.random.split(key)
    params = init_params(pkey, N_MFCC, HIDDEN_SIZE)
    x = jax.random.normal(xkey, (B, 1, N_MFCC, T), jnp.float32)

    fwd = jax.jit(lambda xx: spectral_cnn_lstm_forward(xx, params))
    age, gender = fwd(x)
    jax.block_until_ready((age, gender))

    assert age.shape == (B, 1) and gender.shape == (B, 1)
    assert age.dtype == jnp.float32 and gender.dtype == jnp.float32
    assert bool(jnp.all(jnp.isfinite(age))) and bool(jnp.all(jnp.isfinite(gender)))

    # Loose tolerance: kernel uses bf16 MXU operands (f32 accumulation) + approx reciprocal.
    age_ref, gender_ref = reference_forward(x, params)
    assert bool(jnp.allclose(age, age_ref, atol=5e-2, rtol=5e-2)), (
        f"age mismatch: max abs diff = {float(jnp.max(jnp.abs(age - age_ref)))}")
    assert bool(jnp.allclose(gender, gender_ref, atol=5e-2, rtol=5e-2)), (
        f"gender mismatch: max abs diff = {float(jnp.max(jnp.abs(gender - gender_ref)))}")

    print("KERNEL_OK")
</pallas_src>

<mosaic_0001>
module attributes {stable_mosaic.version = 11 : i64} {
  func.func @kernel(%arg0: memref<48x8xf32, #tpu.memory_space<vmem>>, %arg1: memref<56x16xbf16, #tpu.memory_space<vmem>>, %arg2: memref<80x16xbf16, #tpu.memory_space<vmem>>, %arg3: memref<48x16xbf16, #tpu.memory_space<vmem>>, %arg4: memref<9x16xf32, #tpu.memory_space<vmem>>, %arg5: memref<16x128xbf16, #tpu.memory_space<vmem>>, %arg6: memref<32x128xbf16, #tpu.memory_space<vmem>>, %arg7: memref<1x128xf32, #tpu.memory_space<vmem>>, %arg8: memref<32x32xbf16, #tpu.memory_space<vmem>>, %arg9: memref<1x32xf32, #tpu.memory_space<vmem>>, %arg10: memref<32x2xbf16, #tpu.memory_space<vmem>>, %arg11: memref<2x24xbf16, #tpu.memory_space<vmem>>, %arg12: memref<32x32xbf16, #tpu.memory_space<vmem>>, %arg13: memref<1x32xf32, #tpu.memory_space<vmem>>, %arg14: memref<32x16xbf16, #tpu.memory_space<vmem>>, %arg15: memref<1x16xf32, #tpu.memory_space<vmem>>, %arg16: memref<16x128xbf16, #tpu.memory_space<vmem>>, %arg17: memref<1x128xf32, #tpu.memory_space<vmem>>, %arg18: memref<2x128xf32, #tpu.memory_space<vmem>>, %arg19: memref<24x32xf32, #tpu.memory_space<vmem>>) attributes {dimension_semantics = [], scalar_prefetch = 0 : i64, scratch_operands = 1 : i64, tpu.core_type = #tpu.core_type<tc>} {
    %c0 = arith.constant 0 : index
    %c0_0 = arith.constant 0 : index
    %0 = vector.load %arg0[%c0, %c0_0] : memref<48x8xf32, #tpu.memory_space<vmem>>, vector<48x8xf32>
    %c0_1 = arith.constant 0 : index
    %c0_2 = arith.constant 0 : index
    %1 = vector.load %arg1[%c0_1, %c0_2] : memref<56x16xbf16, #tpu.memory_space<vmem>>, vector<56x16xbf16>
    %2 = vector.extract_strided_slice %0 {offsets = [0, 0], sizes = [36, 8], strides = [1, 1]} : vector<48x8xf32> to vector<36x8xf32>
    %3 = vector.extract_strided_slice %0 {offsets = [2, 0], sizes = [36, 8], strides = [1, 1]} : vector<48x8xf32> to vector<36x8xf32>
    %4 = vector.extract_strided_slice %0 {offsets = [4, 0], sizes = [36, 8], strides = [1, 1]} : vector<48x8xf32> to vector<36x8xf32>
    %5 = vector.extract_strided_slice %0 {offsets = [6, 0], sizes = [36, 8], strides = [1, 1]} : vector<48x8xf32> to vector<36x8xf32>
    %6 = vector.extract_strided_slice %0 {offsets = [8, 0], sizes = [36, 8], strides = [1, 1]} : vector<48x8xf32> to vector<36x8xf32>
    %7 = vector.extract_strided_slice %0 {offsets = [10, 0], sizes = [36, 8], strides = [1, 1]} : vector<48x8xf32> to vector<36x8xf32>
    %8 = vector.extract_strided_slice %0 {offsets = [12, 0], sizes = [36, 8], strides = [1, 1]} : vector<48x8xf32> to vector<36x8xf32>
    %9 = tpu.concatenate %2, %3, %4, %5, %6, %7, %8 in 1 : vector<36x8xf32>, vector<36x8xf32>, vector<36x8xf32>, vector<36x8xf32>, vector<36x8xf32>, vector<36x8xf32>, vector<36x8xf32> -> vector<36x56xf32>
    %10 = arith.truncf %9 : vector<36x56xf32> to vector<36x56xbf16>
    %cst = arith.constant dense<0.000000e+00> : vector<36x16xf32>
    %11 = tpu.matmul %10, %1, %cst {dimension_numbers = #tpu.dot_dimension_numbers<[1], [0], [0], [1], [0, 0, 1, 1], [], []>} : vector<36x56xbf16>, vector<56x16xbf16>, vector<36x16xf32> -> vector<36x16xf32>
    %c0_3 = arith.constant 0 : index
    %c0_4 = arith.constant 0 : index
    %12 = vector.load %arg4[%c0_3, %c0_4] : memref<9x16xf32, #tpu.memory_space<vmem>>, vector<1x16xf32>
    %c1 = arith.constant 1 : index
    %c0_5 = arith.constant 0 : index
    %13 = vector.load %arg4[%c1, %c0_5] : memref<9x16xf32, #tpu.memory_space<vmem>>, vector<1x16xf32>
    %c2 = arith.constant 2 : index
    %c0_6 = arith.constant 0 : index
    %14 = vector.load %arg4[%c2, %c0_6] : memref<9x16xf32, #tpu.memory_space<vmem>>, vector<1x16xf32>
    %15 = vector.broadcast %12 : vector<1x16xf32> to vector<36x16xf32>
    %16 = arith.addf %11, %15 : vector<36x16xf32>
    %cst_7 = arith.constant 0.000000e+00 : f32
    %17 = vector.broadcast %cst_7 : f32 to vector<36x16xf32>
    %18 = arith.maximumf %16, %17 : vector<36x16xf32>
    %19 = vector.broadcast %13 : vector<1x16xf32> to vector<36x16xf32>
    %20 = arith.mulf %18, %19 : vector<36x16xf32>
    %21 = vector.broadcast %14 : vector<1x16xf32> to vector<36x16xf32>
    %22 = arith.addf %20, %21 : vector<36x16xf32>
    %c0_8 = arith.constant 0 : index
    %c0_9 = arith.constant 0 : index
    %23 = vector.load %arg2[%c0_8, %c0_9] : memref<80x16xbf16, #tpu.memory_space<vmem>>, vector<80x16xbf16>
    %24 = vector.extract_strided_slice %22 {offsets = [0, 0], sizes = [28, 16], strides = [1, 1]} : vector<36x16xf32> to vector<28x16xf32>
    %25 = vector.extract_strided_slice %22 {offsets = [2, 0], sizes = [28, 16], strides = [1, 1]} : vector<36x16xf32> to vector<28x16xf32>
    %26 = vector.extract_strided_slice %22 {offsets = [4, 0], sizes = [28, 16], strides = [1, 1]} : vector<36x16xf32> to vector<28x16xf32>
    %27 = vector.extract_strided_slice %22 {offsets = [6, 0], sizes = [28, 16], strides = [1, 1]} : vector<36x16xf32> to vector<28x16xf32>
    %28 = vector.extract_strided_slice %22 {offsets = [8, 0], sizes = [28, 16], strides = [1, 1]} : vector<36x16xf32> to vector<28x16xf32>
    %29 = tpu.concatenate %24, %25, %26, %27, %28 in 1 : vector<28x16xf32>, vector<28x16xf32>, vector<28x16xf32>, vector<28x16xf32>, vector<28x16xf32> -> vector<28x80xf32>
    %30 = arith.truncf %29 : vector<28x80xf32> to vector<28x80xbf16>
    %cst_10 = arith.constant dense<0.000000e+00> : vector<28x16xf32>
    %31 = tpu.matmul %30, %23, %cst_10 {dimension_numbers = #tpu.dot_dimension_numbers<[1], [0], [0], [1], [0, 0, 1, 1], [], []>} : vector<28x80xbf16>, vector<80x16xbf16>, vector<28x16xf32> -> vector<28x16xf32>
    %c3 = arith.constant 3 : index
    %c0_11 = arith.constant 0 : index
    %32 = vector.load %arg4[%c3, %c0_11] : memref<9x16xf32, #tpu.memory_space<vmem>>, vector<1x16xf32>
    %c4 = arith.constant 4 : index
    %c0_12 = arith.constant 0 : index
    %33 = vector.load %arg4[%c4, %c0_12] : memref<9x16xf32, #tpu.memory_space<vmem>>, vector<1x16xf32>
    %c5 = arith.constant 5 : index
    %c0_13 = arith.constant 0 : index
    %34 = vector.load %arg4[%c5, %c0_13] : memref<9x16xf32, #tpu.memory_space<vmem>>, vector<1x16xf32>
    %35 = vector.broadcast %32 : vector<1x16xf32> to vector<28x16xf32>
    %36 = arith.addf %31, %35 : vector<28x16xf32>
    %cst_14 = arith.constant 0.000000e+00 : f32
    %37 = vector.broadcast %cst_14 : f32 to vector<28x16xf32>
    %38 = arith.maximumf %36, %37 : vector<28x16xf32>
    %39 = vector.broadcast %33 : vector<1x16xf32> to vector<28x16xf32>
    %40 = arith.mulf %38, %39 : vector<28x16xf32>
    %41 = vector.broadcast %34 : vector<1x16xf32> to vector<28x16xf32>
    %42 = arith.addf %40, %41 : vector<28x16xf32>
    %c0_15 = arith.constant 0 : index
    %c0_16 = arith.constant 0 : index
    %43 = vector.load %arg3[%c0_15, %c0_16] : memref<48x16xbf16, #tpu.memory_space<vmem>>, vector<48x16xbf16>
    %44 = vector.extract_strided_slice %42 {offsets = [0, 0], sizes = [24, 16], strides = [1, 1]} : vector<28x16xf32> to vector<24x16xf32>
    %45 = vector.extract_strided_slice %42 {offsets = [2, 0], sizes = [24, 16], strides = [1, 1]} : vector<28x16xf32> to vector<24x16xf32>
    %46 = vector.extract_strided_slice %42 {offsets = [4, 0], sizes = [24, 16], strides = [1, 1]} : vector<28x16xf32> to vector<24x16xf32>
    %47 = tpu.concatenate %44, %45, %46 in 1 : vector<24x16xf32>, vector<24x16xf32>, vector<24x16xf32> -> vector<24x48xf32>
    %48 = arith.truncf %47 : vector<24x48xf32> to vector<24x48xbf16>
    %cst_17 = arith.constant dense<0.000000e+00> : vector<24x16xf32>
    %49 = tpu.matmul %48, %43, %cst_17 {dimension_numbers = #tpu.dot_dimension_numbers<[1], [0], [0], [1], [0, 0, 1, 1], [], []>} : vector<24x48xbf16>, vector<48x16xbf16>, vector<24x16xf32> -> vector<24x16xf32>
    %c6 = arith.constant 6 : index
    %c0_18 = arith.constant 0 : index
    %50 = vector.load %arg4[%c6, %c0_18] : memref<9x16xf32, #tpu.memory_space<vmem>>, vector<1x16xf32>
    %c7 = arith.constant 7 : index
    %c0_19 = arith.constant 0 : index
    %51 = vector.load %arg4[%c7, %c0_19] : memref<9x16xf32, #tpu.memory_space<vmem>>, vector<1x16xf32>
    %c8 = arith.constant 8 : index
    %c0_20 = arith.constant 0 : index
    %52 = vector.load %arg4[%c8, %c0_20] : memref<9x16xf32, #tpu.memory_space<vmem>>, vector<1x16xf32>
    %53 = vector.broadcast %50 : vector<1x16xf32> to vector<24x16xf32>
    %54 = arith.addf %49, %53 : vector<24x16xf32>
    %cst_21 = arith.constant 0.000000e+00 : f32
    %55 = vector.broadcast %cst_21 : f32 to vector<24x16xf32>
    %56 = arith.maximumf %54, %55 : vector<24x16xf32>
    %57 = vector.broadcast %51 : vector<1x16xf32> to vector<24x16xf32>
    %58 = arith.mulf %56, %57 : vector<24x16xf32>
    %59 = vector.broadcast %52 : vector<1x16xf32> to vector<24x16xf32>
    %60 = arith.addf %58, %59 : vector<24x16xf32>
    %61 = arith.truncf %60 : vector<24x16xf32> to vector<24x16xbf16>
    %c0_22 = arith.constant 0 : index
    %c0_23 = arith.constant 0 : index
    %62 = vector.load %arg5[%c0_22, %c0_23] : memref<16x128xbf16, #tpu.memory_space<vmem>>, vector<16x128xbf16>
    %cst_24 = arith.constant dense<0.000000e+00> : vector<24x128xf32>
    %63 = tpu.matmul %61, %62, %cst_24 {dimension_numbers = #tpu.dot_dimension_numbers<[1], [0], [0], [1], [0, 0, 1, 1], [], []>} : vector<24x16xbf16>, vector<16x128xbf16>, vector<24x128xf32> -> vector<24x128xf32>
    %c0_25 = arith.constant 0 : index
    %c0_26 = arith.constant 0 : index
    %64 = vector.load %arg7[%c0_25, %c0_26] : memref<1x128xf32, #tpu.memory_space<vmem>>, vector<1x128xf32>
    %65 = vector.broadcast %64 : vector<1x128xf32> to vector<24x128xf32>
    %66 = arith.addf %63, %65 : vector<24x128xf32>
    %c0_27 = arith.constant 0 : index
    %c0_28 = arith.constant 0 : index
    %67 = vector.load %arg6[%c0_27, %c0_28] : memref<32x128xbf16, #tpu.memory_space<vmem>>, vector<32x128xbf16>
    %cst_29 = arith.constant 0.000000e+00 : f32
    %68 = vector.broadcast %cst_29 : f32 to vector<2x32xf32>
    %cst_30 = arith.constant 0.000000e+00 : f32
    %69 = vector.broadcast %cst_30 : f32 to vector<2x32xf32>
    %70 = vector.extract_strided_slice %66 {offsets = [0, 0], sizes = [2, 128], strides = [1, 1]} : vector<24x128xf32> to vector<2x128xf32>
    %71 = arith.truncf %68 : vector<2x32xf32> to vector<2x32xbf16>
    %cst_31 = arith.constant dense<0.000000e+00> : vector<2x128xf32>
    %72 = tpu.matmul %71, %67, %cst_31 {dimension_numbers = #tpu.dot_dimension_numbers<[1], [0], [0], [1], [0, 0, 1, 1], [], []>} : vector<2x32xbf16>, vector<32x128xbf16>, vector<2x128xf32> -> vector<2x128xf32>
    %73 = arith.addf %70, %72 : vector<2x128xf32>
    %74 = vector.extract_strided_slice %73 {offsets = [0, 0], sizes = [2, 96], strides = [1, 1]} : vector<2x128xf32> to vector<2x96xf32>
    %75 = arith.negf %74 : vector<2x96xf32>
    %76 = math.exp %75 : vector<2x96xf32>
    %cst_32 = arith.constant 1.000000e+00 : f32
    %77 = vector.broadcast %cst_32 : f32 to vector<2x96xf32>
    %78 = arith.addf %77, %76 : vector<2x96xf32>
    %79 = arith.divf %77, %78 : vector<2x96xf32>
    %80 = vector.extract_strided_slice %73 {offsets = [0, 96], sizes = [2, 32], strides = [1, 1]} : vector<2x128xf32> to vector<2x32xf32>
    %81 = math.tanh %80 : vector<2x32xf32>
    %82 = vector.extract_strided_slice %79 {offsets = [0, 32], sizes = [2, 32], strides = [1, 1]} : vector<2x96xf32> to vector<2x32xf32>
    %83 = arith.mulf %82, %69 : vector<2x32xf32>
    %84 = vector.extract_strided_slice %79 {offsets = [0, 0], sizes = [2, 32], strides = [1, 1]} : vector<2x96xf32> to vector<2x32xf32>
    %85 = arith.mulf %84, %81 : vector<2x32xf32>
    %86 = arith.addf %83, %85 : vector<2x32xf32>
    %87 = vector.extract_strided_slice %79 {offsets = [0, 64], sizes = [2, 32], strides = [1, 1]} : vector<2x96xf32> to vector<2x32xf32>
    %88 = math.tanh %86 : vector<2x32xf32>
    %89 = arith.mulf %87, %88 : vector<2x32xf32>
    %c0_33 = arith.constant 0 : index
    %c0_34 = arith.constant 0 : index
    %90 = vector.load %arg19[%c0_33, %c0_34] : memref<24x32xf32, #tpu.memory_space<vmem>>, vector<2x32xf32>
    tpu.vector_store %arg19[%c0_33, %c0_34], %89 {strides = array<i32>} : memref<24x32xf32, #tpu.memory_space<vmem>>, vector<2x32xf32>,
    %91 = vector.extract_strided_slice %66 {offsets = [2, 0], sizes = [2, 128], strides = [1, 1]} : vector<24x128xf32> to vector<2x128xf32>
    %92 = arith.truncf %89 : vector<2x32xf32> to vector<2x32xbf16>
    %cst_35 = arith.constant dense<0.000000e+00> : vector<2x128xf32>
    %93 = tpu.matmul %92, %67, %cst_35 {dimension_numbers = #tpu.dot_dimension_numbers<[1], [0], [0], [1], [0, 0, 1, 1], [], []>} : vector<2x32xbf16>, vector<32x128xbf16>, vector<2x128xf32> -> vector<2x128xf32>
    %94 = arith.addf %91, %93 : vector<2x128xf32>
    %95 = vector.extract_strided_slice %94 {offsets = [0, 0], sizes = [2, 96], strides = [1, 1]} : vector<2x128xf32> to vector<2x96xf32>
    %96 = arith.negf %95 : vector<2x96xf32>
    %97 = math.exp %96 : vector<2x96xf32>
    %cst_36 = arith.constant 1.000000e+00 : f32
    %98 = vector.broadcast %cst_36 : f32 to vector<2x96xf32>
    %99 = arith.addf %98, %97 : vector<2x96xf32>
    %100 = arith.divf %98, %99 : vector<2x96xf32>
    %101 = vector.extract_strided_slice %94 {offsets = [0, 96], sizes = [2, 32], strides = [1, 1]} : vector<2x128xf32> to vector<2x32xf32>
    %102 = math.tanh %101 : vector<2x32xf32>
    %103 = vector.extract_strided_slice %100 {offsets = [0, 32], sizes = [2, 32], strides = [1, 1]} : vector<2x96xf32> to vector<2x32xf32>
    %104 = arith.mulf %103, %86 : vector<2x32xf32>
    %105 = vector.extract_strided_slice %100 {offsets = [0, 0], sizes = [2, 32], strides = [1, 1]} : vector<2x96xf32> to vector<2x32xf32>
    %106 = arith.mulf %105, %102 : vector<2x32xf32>
    %107 = arith.addf %104, %106 : vector<2x32xf32>
    %108 = vector.extract_strided_slice %100 {offsets = [0, 64], sizes = [2, 32], strides = [1, 1]} : vector<2x96xf32> to vector<2x32xf32>
    %109 = math.tanh %107 : vector<2x32xf32>
    %110 = arith.mulf %108, %109 : vector<2x32xf32>
    %c2_37 = arith.constant 2 : index
    %c0_38 = arith.constant 0 : index
    %111 = vector.load %arg19[%c2_37, %c0_38] : memref<24x32xf32, #tpu.memory_space<vmem>>, vector<2x32xf32>
    tpu.vector_store %arg19[%c2_37, %c0_38], %110 {strides = array<i32>} : memref<24x32xf32, #tpu.memory_space<vmem>>, vector<2x32xf32>,
    %112 = vector.extract_strided_slice %66 {offsets = [4, 0], sizes = [2, 128], strides = [1, 1]} : vector<24x128xf32> to vector<2x128xf32>
    %113 = arith.truncf %110 : vector<2x32xf32> to vector<2x32xbf16>
    %cst_39 = arith.constant dense<0.000000e+00> : vector<2x128xf32>
    %114 = tpu.matmul %113, %67, %cst_39 {dimension_numbers = #tpu.dot_dimension_numbers<[1], [0], [0], [1], [0, 0, 1, 1], [], []>} : vector<2x32xbf16>, vector<32x128xbf16>, vector<2x128xf32> -> vector<2x128xf32>
    %115 = arith.addf %112, %114 : vector<2x128xf32>
    %116 = vector.extract_strided_slice %115 {offsets = [0, 0], sizes = [2, 96], strides = [1, 1]} : vector<2x128xf32> to vector<2x96xf32>
    %117 = arith.negf %116 : vector<2x96xf32>
    %118 = math.exp %117 : vector<2x96xf32>
    %cst_40 = arith.constant 1.000000e+00 : f32
    %119 = vector.broadcast %cst_40 : f32 to vector<2x96xf32>
    %120 = arith.addf %119, %118 : vector<2x96xf32>
    %121 = arith.divf %119, %120 : vector<2x96xf32>
    %122 = vector.extract_strided_slice %115 {offsets = [0, 96], sizes = [2, 32], strides = [1, 1]} : vector<2x128xf32> to vector<2x32xf32>
    %123 = math.tanh %122 : vector<2x32xf32>
    %124 = vector.extract_strided_slice %121 {offsets = [0, 32], sizes = [2, 32], strides = [1, 1]} : vector<2x96xf32> to vector<2x32xf32>
    %125 = arith.mulf %124, %107 : vector<2x32xf32>
    %126 = vector.extract_strided_slice %121 {offsets = [0, 0], sizes = [2, 32], strides = [1, 1]} : vector<2x96xf32> to vector<2x32xf32>
    %127 = arith.mulf %126, %123 : vector<2x32xf32>
    %128 = arith.addf %125, %127 : vector<2x32xf32>
    %129 = vector.extract_strided_slice %121 {offsets = [0, 64], sizes = [2, 32], strides = [1, 1]} : vector<2x96xf32> to vector<2x32xf32>
    %130 = math.tanh %128 : vector<2x32xf32>
    %131 = arith.mulf %129, %130 : vector<2x32xf32>
    %c4_41 = arith.constant 4 : index
    %c0_42 = arith.constant 0 : index
    %132 = vector.load %arg19[%c4_41, %c0_42] : memref<24x32xf32, #tpu.memory_space<vmem>>, vector<2x32xf32>
    tpu.vector_store %arg19[%c4_41, %c0_42], %131 {strides = array<i32>} : memref<24x32xf32, #tpu.memory_space<vmem>>, vector<2x32xf32>,
    %133 = vector.extract_strided_slice %66 {offsets = [6, 0], sizes = [2, 128], strides = [1, 1]} : vector<24x128xf32> to vector<2x128xf32>
    %134 = arith.truncf %131 : vector<2x32xf32> to vector<2x32xbf16>
    %cst_43 = arith.constant dense<0.000000e+00> : vector<2x128xf32>
    %135 = tpu.matmul %134, %67, %cst_43 {dimension_numbers = #tpu.dot_dimension_numbers<[1], [0], [0], [1], [0, 0, 1, 1], [], []>} : vector<2x32xbf16>, vector<32x128xbf16>, vector<2x128xf32> -> vector<2x128xf32>
    %136 = arith.addf %133, %135 : vector<2x128xf32>
    %137 = vector.extract_strided_slice %136 {offsets = [0, 0], sizes = [2, 96], strides = [1, 1]} : vector<2x128xf32> to vector<2x96xf32>
    %138 = arith.negf %137 : vector<2x96xf32>
    %139 = math.exp %138 : vector<2x96xf32>
    %cst_44 = arith.constant 1.000000e+00 : f32
    %140 = vector.broadcast %cst_44 : f32 to vector<2x96xf32>
    %141 = arith.addf %140, %139 : vector<2x96xf32>
    %142 = arith.divf %140, %141 : vector<2x96xf32>
    %143 = vector.extract_strided_slice %136 {offsets = [0, 96], sizes = [2, 32], strides = [1, 1]} : vector<2x128xf32> to vector<2x32xf32>
    %144 = math.tanh %143 : vector<2x32xf32>
    %145 = vector.extract_strided_slice %142 {offsets = [0, 32], sizes = [2, 32], strides = [1, 1]} : vector<2x96xf32> to vector<2x32xf32>
    %146 = arith.mulf %145, %128 : vector<2x32xf32>
    %147 = vector.extract_strided_slice %142 {offsets = [0, 0], sizes = [2, 32], strides = [1, 1]} : vector<2x96xf32> to vector<2x32xf32>
    %148 = arith.mulf %147, %144 : vector<2x32xf32>
    %149 = arith.addf %146, %148 : vector<2x32xf32>
    %150 = vector.extract_strided_slice %142 {offsets = [0, 64], sizes = [2, 32], strides = [1, 1]} : vector<2x96xf32> to vector<2x32xf32>
    %151 = math.tanh %149 : vector<2x32xf32>
    %152 = arith.mulf %150, %151 : vector<2x32xf32>
    %c6_45 = arith.constant 6 : index
    %c0_46 = arith.constant 0 : index
    %153 = vector.load %arg19[%c6_45, %c0_46] : memref<24x32xf32, #tpu.memory_space<vmem>>, vector<2x32xf32>
    tpu.vector_store %arg19[%c6_45, %c0_46], %152 {strides = array<i32>} : memref<24x32xf32, #tpu.memory_space<vmem>>, vector<2x32xf32>,
    %154 = vector.extract_strided_slice %66 {offsets = [8, 0], sizes = [2, 128], strides = [1, 1]} : vector<24x128xf32> to vector<2x128xf32>
    %155 = arith.truncf %152 : vector<2x32xf32> to vector<2x32xbf16>
    %cst_47 = arith.constant dense<0.000000e+00> : vector<2x128xf32>
    %156 = tpu.matmul %155, %67, %cst_47 {dimension_numbers = #tpu.dot_dimension_numbers<[1], [0], [0], [1], [0, 0, 1, 1], [], []>} : vector<2x32xbf16>, vector<32x128xbf16>, vector<2x128xf32> -> vector<2x128xf32>
    %157 = arith.addf %154, %156 : vector<2x128xf32>
    %158 = vector.extract_strided_slice %157 {offsets = [0, 0], sizes = [2, 96], strides = [1, 1]} : vector<2x128xf32> to vector<2x96xf32>
    %159 = arith.negf %158 : vector<2x96xf32>
    %160 = math.exp %159 : vector<2x96xf32>
    %cst_48 = arith.constant 1.000000e+00 : f32
    %161 = vector.broadcast %cst_48 : f32 to vector<2x96xf32>
    %162 = arith.addf %161, %160 : vector<2x96xf32>
    %163 = arith.divf %161, %162 : vector<2x96xf32>
    %164 = vector.extract_strided_slice %157 {offsets = [0, 96], sizes = [2, 32], strides = [1, 1]} : vector<2x128xf32> to vector<2x32xf32>
    %165 = math.tanh %164 : vector<2x32xf32>
    %166 = vector.extract_strided_slice %163 {offsets = [0, 32], sizes = [2, 32], strides = [1, 1]} : vector<2x96xf32> to vector<2x32xf32>
    %167 = arith.mulf %166, %149 : vector<2x32xf32>
    %168 = vector.extract_strided_slice %163 {offsets = [0, 0], sizes = [2, 32], strides = [1, 1]} : vector<2x96xf32> to vector<2x32xf32>
    %169 = arith.mulf %168, %165 : vector<2x32xf32>
    %170 = arith.addf %167, %169 : vector<2x32xf32>
    %171 = vector.extract_strided_slice %163 {offsets = [0, 64], sizes = [2, 32], strides = [1, 1]} : vector<2x96xf32> to vector<2x32xf32>
    %172 = math.tanh %170 : vector<2x32xf32>
    %173 = arith.mulf %171, %172 : vector<2x32xf32>
    %c8_49 = arith.constant 8 : index
    %c0_50 = arith.constant 0 : index
    %174 = vector.load %arg19[%c8_49, %c0_50] : memref<24x32xf32, #tpu.memory_space<vmem>>, vector<2x32xf32>
    tpu.vector_store %arg19[%c8_49, %c0_50], %173 {strides = array<i32>} : memref<24x32xf32, #tpu.memory_space<vmem>>, vector<2x32xf32>,
    %175 = vector.extract_strided_slice %66 {offsets = [10, 0], sizes = [2, 128], strides = [1, 1]} : vector<24x128xf32> to vector<2x128xf32>
    %176 = arith.truncf %173 : vector<2x32xf32> to vector<2x32xbf16>
    %cst_51 = arith.constant dense<0.000000e+00> : vector<2x128xf32>
    %177 = tpu.matmul %176, %67, %cst_51 {dimension_numbers = #tpu.dot_dimension_numbers<[1], [0], [0], [1], [0, 0, 1, 1], [], []>} : vector<2x32xbf16>, vector<32x128xbf16>, vector<2x128xf32> -> vector<2x128xf32>
    %178 = arith.addf %175, %177 : vector<2x128xf32>
    %179 = vector.extract_strided_slice %178 {offsets = [0, 0], sizes = [2, 96], strides = [1, 1]} : vector<2x128xf32> to vector<2x96xf32>
    %180 = arith.negf %179 : vector<2x96xf32>
    %181 = math.exp %180 : vector<2x96xf32>
    %cst_52 = arith.constant 1.000000e+00 : f32
    %182 = vector.broadcast %cst_52 : f32 to vector<2x96xf32>
    %183 = arith.addf %182, %181 : vector<2x96xf32>
    %184 = arith.divf %182, %183 : vector<2x96xf32>
    %185 = vector.extract_strided_slice %178 {offsets = [0, 96], sizes = [2, 32], strides = [1, 1]} : vector<2x128xf32> to vector<2x32xf32>
    %186 = math.tanh %185 : vector<2x32xf32>
    %187 = vector.extract_strided_slice %184 {offsets = [0, 32], sizes = [2, 32], strides = [1, 1]} : vector<2x96xf32> to vector<2x32xf32>
    %188 = arith.mulf %187, %170 : vector<2x32xf32>
    %189 = vector.extract_strided_slice %184 {offsets = [0, 0], sizes = [2, 32], strides = [1, 1]} : vector<2x96xf32> to vector<2x32xf32>
    %190 = arith.mulf %189, %186 : vector<2x32xf32>
    %191 = arith.addf %188, %190 : vector<2x32xf32>
    %192 = vector.extract_strided_slice %184 {offsets = [0, 64], sizes = [2, 32], strides = [1, 1]} : vector<2x96xf32> to vector<2x32xf32>
    %193 = math.tanh %191 : vector<2x32xf32>
    %194 = arith.mulf %192, %193 : vector<2x32xf32>
    %c10 = arith.constant 10 : index
    %c0_53 = arith.constant 0 : index
    %195 = vector.load %arg19[%c10, %c0_53] : memref<24x32xf32, #tpu.memory_space<vmem>>, vector<2x32xf32>
    tpu.vector_store %arg19[%c10, %c0_53], %194 {strides = array<i32>} : memref<24x32xf32, #tpu.memory_space<vmem>>, vector<2x32xf32>,
    %196 = vector.extract_strided_slice %66 {offsets = [12, 0], sizes = [2, 128], strides = [1, 1]} : vector<24x128xf32> to vector<2x128xf32>
    %197 = arith.truncf %194 : vector<2x32xf32> to vector<2x32xbf16>
    %cst_54 = arith.constant dense<0.000000e+00> : vector<2x128xf32>
    %198 = tpu.matmul %197, %67, %cst_54 {dimension_numbers = #tpu.dot_dimension_numbers<[1], [0], [0], [1], [0, 0, 1, 1], [], []>} : vector<2x32xbf16>, vector<32x128xbf16>, vector<2x128xf32> -> vector<2x128xf32>
    %199 = arith.addf %196, %198 : vector<2x128xf32>
    %200 = vector.extract_strided_slice %199 {offsets = [0, 0], sizes = [2, 96], strides = [1, 1]} : vector<2x128xf32> to vector<2x96xf32>
    %201 = arith.negf %200 : vector<2x96xf32>
    %202 = math.exp %201 : vector<2x96xf32>
    %cst_55 = arith.constant 1.000000e+00 : f32
    %203 = vector.broadcast %cst_55 : f32 to vector<2x96xf32>
    %204 = arith.addf %203, %202 : vector<2x96xf32>
    %205 = arith.divf %203, %204 : vector<2x96xf32>
    %206 = vector.extract_strided_slice %199 {offsets = [0, 96], sizes = [2, 32], strides = [1, 1]} : vector<2x128xf32> to vector<2x32xf32>
    %207 = math.tanh %206 : vector<2x32xf32>
    %208 = vector.extract_strided_slice %205 {offsets = [0, 32], sizes = [2, 32], strides = [1, 1]} : vector<2x96xf32> to vector<2x32xf32>
    %209 = arith.mulf %208, %191 : vector<2x32xf32>
    %210 = vector.extract_strided_slice %205 {offsets = [0, 0], sizes = [2, 32], strides = [1, 1]} : vector<2x96xf32> to vector<2x32xf32>
    %211 = arith.mulf %210, %207 : vector<2x32xf32>
    %212 = arith.addf %209, %211 : vector<2x32xf32>
    %213 = vector.extract_strided_slice %205 {offsets = [0, 64], sizes = [2, 32], strides = [1, 1]} : vector<2x96xf32> to vector<2x32xf32>
    %214 = math.tanh %212 : vector<2x32xf32>
    %215 = arith.mulf %213, %214 : vector<2x32xf32>
    %c12 = arith.constant 12 : index
    %c0_56 = arith.constant 0 : index
    %216 = vector.load %arg19[%c12, %c0_56] : memref<24x32xf32, #tpu.memory_space<vmem>>, vector<2x32xf32>
    tpu.vector_store %arg19[%c12, %c0_56], %215 {strides = array<i32>} : memref<24x32xf32, #tpu.memory_space<vmem>>, vector<2x32xf32>,
    %217 = vector.extract_strided_slice %66 {offsets = [14, 0], sizes = [2, 128], strides = [1, 1]} : vector<24x128xf32> to vector<2x128xf32>
    %218 = arith.truncf %215 : vector<2x32xf32> to vector<2x32xbf16>
    %cst_57 = arith.constant dense<0.000000e+00> : vector<2x128xf32>
    %219 = tpu.matmul %218, %67, %cst_57 {dimension_numbers = #tpu.dot_dimension_numbers<[1], [0], [0], [1], [0, 0, 1, 1], [], []>} : vector<2x32xbf16>, vector<32x128xbf16>, vector<2x128xf32> -> vector<2x128xf32>
    %220 = arith.addf %217, %219 : vector<2x128xf32>
    %221 = vector.extract_strided_slice %220 {offsets = [0, 0], sizes = [2, 96], strides = [1, 1]} : vector<2x128xf32> to vector<2x96xf32>
    %222 = arith.negf %221 : vector<2x96xf32>
    %223 = math.exp %222 : vector<2x96xf32>
    %cst_58 = arith.constant 1.000000e+00 : f32
    %224 = vector.broadcast %cst_58 : f32 to vector<2x96xf32>
    %225 = arith.addf %224, %223 : vector<2x96xf32>
    %226 = arith.divf %224, %225 : vector<2x96xf32>
    %227 = vector.extract_strided_slice %220 {offsets = [0, 96], sizes = [2, 32], strides = [1, 1]} : vector<2x128xf32> to vector<2x32xf32>
    %228 = math.tanh %227 : vector<2x32xf32>
    %229 = vector.extract_strided_slice %226 {offsets = [0, 32], sizes = [2, 32], strides = [1, 1]} : vector<2x96xf32> to vector<2x32xf32>
    %230 = arith.mulf %229, %212 : vector<2x32xf32>
    %231 = vector.extract_strided_slice %226 {offsets = [0, 0], sizes = [2, 32], strides = [1, 1]} : vector<2x96xf32> to vector<2x32xf32>
    %232 = arith.mulf %231, %228 : vector<2x32xf32>
    %233 = arith.addf %230, %232 : vector<2x32xf32>
    %234 = vector.extract_strided_slice %226 {offsets = [0, 64], sizes = [2, 32], strides = [1, 1]} : vector<2x96xf32> to vector<2x32xf32>
    %235 = math.tanh %233 : vector<2x32xf32>
    %236 = arith.mulf %234, %235 : vector<2x32xf32>
    %c14 = arith.constant 14 : index
    %c0_59 = arith.constant 0 : index
    %237 = vector.load %arg19[%c14, %c0_59] : memref<24x32xf32, #tpu.memory_space<vmem>>, vector<2x32xf32>
    tpu.vector_store %arg19[%c14, %c0_59], %236 {strides = array<i32>} : memref<24x32xf32, #tpu.memory_space<vmem>>, vector<2x32xf32>,
    %238 = vector.extract_strided_slice %66 {offsets = [16, 0], sizes = [2, 128], strides = [1, 1]} : vector<24x128xf32> to vector<2x128xf32>
    %239 = arith.truncf %236 : vector<2x32xf32> to vector<2x32xbf16>
    %cst_60 = arith.constant dense<0.000000e+00> : vector<2x128xf32>
    %240 = tpu.matmul %239, %67, %cst_60 {dimension_numbers = #tpu.dot_dimension_numbers<[1], [0], [0], [1], [0, 0, 1, 1], [], []>} : vector<2x32xbf16>, vector<32x128xbf16>, vector<2x128xf32> -> vector<2x128xf32>
    %241 = arith.addf %238, %240 : vector<2x128xf32>
    %242 = vector.extract_strided_slice %241 {offsets = [0, 0], sizes = [2, 96], strides = [1, 1]} : vector<2x128xf32> to vector<2x96xf32>
    %243 = arith.negf %242 : vector<2x96xf32>
    %244 = math.exp %243 : vector<2x96xf32>
    %cst_61 = arith.constant 1.000000e+00 : f32
    %245 = vector.broadcast %cst_61 : f32 to vector<2x96xf32>
    %246 = arith.addf %245, %244 : vector<2x96xf32>
    %247 = arith.divf %245, %246 : vector<2x96xf32>
    %248 = vector.extract_strided_slice %241 {offsets = [0, 96], sizes = [2, 32], strides = [1, 1]} : vector<2x128xf32> to vector<2x32xf32>
    %249 = math.tanh %248 : vector<2x32xf32>
    %250 = vector.extract_strided_slice %247 {offsets = [0, 32], sizes = [2, 32], strides = [1, 1]} : vector<2x96xf32> to vector<2x32xf32>
    %251 = arith.mulf %250, %233 : vector<2x32xf32>
    %252 = vector.extract_strided_slice %247 {offsets = [0, 0], sizes = [2, 32], strides = [1, 1]} : vector<2x96xf32> to vector<2x32xf32>
    %253 = arith.mulf %252, %249 : vector<2x32xf32>
    %254 = arith.addf %251, %253 : vector<2x32xf32>
    %255 = vector.extract_strided_slice %247 {offsets = [0, 64], sizes = [2, 32], strides = [1, 1]} : vector<2x96xf32> to vector<2x32xf32>
    %256 = math.tanh %254 : vector<2x32xf32>
    %257 = arith.mulf %255, %256 : vector<2x32xf32>
    %c16 = arith.constant 16 : index
    %c0_62 = arith.constant 0 : index
    %258 = vector.load %arg19[%c16, %c0_62] : memref<24x32xf32, #tpu.memory_space<vmem>>, vector<2x32xf32>
    tpu.vector_store %arg19[%c16, %c0_62], %257 {strides = array<i32>} : memref<24x32xf32, #tpu.memory_space<vmem>>, vector<2x32xf32>,
    %259 = vector.extract_strided_slice %66 {offsets = [18, 0], sizes = [2, 128], strides = [1, 1]} : vector<24x128xf32> to vector<2x128xf32>
    %260 = arith.truncf %257 : vector<2x32xf32> to vector<2x32xbf16>
    %cst_63 = arith.constant dense<0.000000e+00> : vector<2x128xf32>
    %261 = tpu.matmul %260, %67, %cst_63 {dimension_numbers = #tpu.dot_dimension_numbers<[1], [0], [0], [1], [0, 0, 1, 1], [], []>} : vector<2x32xbf16>, vector<32x128xbf16>, vector<2x128xf32> -> vector<2x128xf32>
    %262 = arith.addf %259, %261 : vector<2x128xf32>
    %263 = vector.extract_strided_slice %262 {offsets = [0, 0], sizes = [2, 96], strides = [1, 1]} : vector<2x128xf32> to vector<2x96xf32>
    %264 = arith.negf %263 : vector<2x96xf32>
    %265 = math.exp %264 : vector<2x96xf32>
    %cst_64 = arith.constant 1.000000e+00 : f32
    %266 = vector.broadcast %cst_64 : f32 to vector<2x96xf32>
    %267 = arith.addf %266, %265 : vector<2x96xf32>
    %268 = arith.divf %266, %267 : vector<2x96xf32>
    %269 = vector.extract_strided_slice %262 {offsets = [0, 96], sizes = [2, 32], strides = [1, 1]} : vector<2x128xf32> to vector<2x32xf32>
    %270 = math.tanh %269 : vector<2x32xf32>
    %271 = vector.extract_strided_slice %268 {offsets = [0, 32], sizes = [2, 32], strides = [1, 1]} : vector<2x96xf32> to vector<2x32xf32>
    %272 = arith.mulf %271, %254 : vector<2x32xf32>
    %273 = vector.extract_strided_slice %268 {offsets = [0, 0], sizes = [2, 32], strides = [1, 1]} : vector<2x96xf32> to vector<2x32xf32>
    %274 = arith.mulf %273, %270 : vector<2x32xf32>
    %275 = arith.addf %272, %274 : vector<2x32xf32>
    %276 = vector.extract_strided_slice %268 {offsets = [0, 64], sizes = [2, 32], strides = [1, 1]} : vector<2x96xf32> to vector<2x32xf32>
    %277 = math.tanh %275 : vector<2x32xf32>
    %278 = arith.mulf %276, %277 : vector<2x32xf32>
    %c18 = arith.constant 18 : index
    %c0_65 = arith.constant 0 : index
    %279 = vector.load %arg19[%c18, %c0_65] : memref<24x32xf32, #tpu.memory_space<vmem>>, vector<2x32xf32>
    tpu.vector_store %arg19[%c18, %c0_65], %278 {strides = array<i32>} : memref<24x32xf32, #tpu.memory_space<vmem>>, vector<2x32xf32>,
    %280 = vector.extract_strided_slice %66 {offsets = [20, 0], sizes = [2, 128], strides = [1, 1]} : vector<24x128xf32> to vector<2x128xf32>
    %281 = arith.truncf %278 : vector<2x32xf32> to vector<2x32xbf16>
    %cst_66 = arith.constant dense<0.000000e+00> : vector<2x128xf32>
    %282 = tpu.matmul %281, %67, %cst_66 {dimension_numbers = #tpu.dot_dimension_numbers<[1], [0], [0], [1], [0, 0, 1, 1], [], []>} : vector<2x32xbf16>, vector<32x128xbf16>, vector<2x128xf32> -> vector<2x128xf32>
    %283 = arith.addf %280, %282 : vector<2x128xf32>
    %284 = vector.extract_strided_slice %283 {offsets = [0, 0], sizes = [2, 96], strides = [1, 1]} : vector<2x128xf32> to vector<2x96xf32>
    %285 = arith.negf %284 : vector<2x96xf32>
    %286 = math.exp %285 : vector<2x96xf32>
    %cst_67 = arith.constant 1.000000e+00 : f32
    %287 = vector.broadcast %cst_67 : f32 to vector<2x96xf32>
    %288 = arith.addf %287, %286 : vector<2x96xf32>
    %289 = arith.divf %287, %288 : vector<2x96xf32>
    %290 = vector.extract_strided_slice %283 {offsets = [0, 96], sizes = [2, 32], strides = [1, 1]} : vector<2x128xf32> to vector<2x32xf32>
    %291 = math.tanh %290 : vector<2x32xf32>
    %292 = vector.extract_strided_slice %289 {offsets = [0, 32], sizes = [2, 32], strides = [1, 1]} : vector<2x96xf32> to vector<2x32xf32>
    %293 = arith.mulf %292, %275 : vector<2x32xf32>
    %294 = vector.extract_strided_slice %289 {offsets = [0, 0], sizes = [2, 32], strides = [1, 1]} : vector<2x96xf32> to vector<2x32xf32>
    %295 = arith.mulf %294, %291 : vector<2x32xf32>
    %296 = arith.addf %293, %295 : vector<2x32xf32>
    %297 = vector.extract_strided_slice %289 {offsets = [0, 64], sizes = [2, 32], strides = [1, 1]} : vector<2x96xf32> to vector<2x32xf32>
    %298 = math.tanh %296 : vector<2x32xf32>
    %299 = arith.mulf %297, %298 : vector<2x32xf32>
    %c20 = arith.constant 20 : index
    %c0_68 = arith.constant 0 : index
    %300 = vector.load %arg19[%c20, %c0_68] : memref<24x32xf32, #tpu.memory_space<vmem>>, vector<2x32xf32>
    tpu.vector_store %arg19[%c20, %c0_68], %299 {strides = array<i32>} : memref<24x32xf32, #tpu.memory_space<vmem>>, vector<2x32xf32>,
    %301 = vector.extract_strided_slice %66 {offsets = [22, 0], sizes = [2, 128], strides = [1, 1]} : vector<24x128xf32> to vector<2x128xf32>
    %302 = arith.truncf %299 : vector<2x32xf32> to vector<2x32xbf16>
    %cst_69 = arith.constant dense<0.000000e+00> : vector<2x128xf32>
    %303 = tpu.matmul %302, %67, %cst_69 {dimension_numbers = #tpu.dot_dimension_numbers<[1], [0], [0], [1], [0, 0, 1, 1], [], []>} : vector<2x32xbf16>, vector<32x128xbf16>, vector<2x128xf32> -> vector<2x128xf32>
    %304 = arith.addf %301, %303 : vector<2x128xf32>
    %305 = vector.extract_strided_slice %304 {offsets = [0, 0], sizes = [2, 96], strides = [1, 1]} : vector<2x128xf32> to vector<2x96xf32>
    %306 = arith.negf %305 : vector<2x96xf32>
    %307 = math.exp %306 : vector<2x96xf32>
    %cst_70 = arith.constant 1.000000e+00 : f32
    %308 = vector.broadcast %cst_70 : f32 to vector<2x96xf32>
    %309 = arith.addf %308, %307 : vector<2x96xf32>
    %310 = arith.divf %308, %309 : vector<2x96xf32>
    %311 = vector.extract_strided_slice %304 {offsets = [0, 96], sizes = [2, 32], strides = [1, 1]} : vector<2x128xf32> to vector<2x32xf32>
    %312 = math.tanh %311 : vector<2x32xf32>
    %313 = vector.extract_strided_slice %310 {offsets = [0, 32], sizes = [2, 32], strides = [1, 1]} : vector<2x96xf32> to vector<2x32xf32>
    %314 = arith.mulf %313, %296 : vector<2x32xf32>
    %315 = vector.extract_strided_slice %310 {offsets = [0, 0], sizes = [2, 32], strides = [1, 1]} : vector<2x96xf32> to vector<2x32xf32>
    %316 = arith.mulf %315, %312 : vector<2x32xf32>
    %317 = arith.addf %314, %316 : vector<2x32xf32>
    %318 = vector.extract_strided_slice %310 {offsets = [0, 64], sizes = [2, 32], strides = [1, 1]} : vector<2x96xf32> to vector<2x32xf32>
    %319 = math.tanh %317 : vector<2x32xf32>
    %320 = arith.mulf %318, %319 : vector<2x32xf32>
    %c22 = arith.constant 22 : index
    %c0_71 = arith.constant 0 : index
    %321 = vector.load %arg19[%c22, %c0_71] : memref<24x32xf32, #tpu.memory_space<vmem>>, vector<2x32xf32>
    tpu.vector_store %arg19[%c22, %c0_71], %320 {strides = array<i32>} : memref<24x32xf32, #tpu.memory_space<vmem>>, vector<2x32xf32>,
    %c0_72 = arith.constant 0 : index
    %c0_73 = arith.constant 0 : index
    %322 = vector.load %arg19[%c0_72, %c0_73] : memref<24x32xf32, #tpu.memory_space<vmem>>, vector<24x32xf32>
    %323 = arith.truncf %322 : vector<24x32xf32> to vector<24x32xbf16>
    %c0_74 = arith.constant 0 : index
    %c0_75 = arith.constant 0 : index
    %324 = vector.load %arg8[%c0_74, %c0_75] : memref<32x32xbf16, #tpu.memory_space<vmem>>, vector<32x32xbf16>
    %cst_76 = arith.constant dense<0.000000e+00> : vector<24x32xf32>
    %325 = tpu.matmul %323, %324, %cst_76 {dimension_numbers = #tpu.dot_dimension_numbers<[1], [0], [0], [1], [0, 0, 1, 1], [], []>} : vector<24x32xbf16>, vector<32x32xbf16>, vector<24x32xf32> -> vector<24x32xf32>
    %c0_77 = arith.constant 0 : index
    %c0_78 = arith.constant 0 : index
    %326 = vector.load %arg9[%c0_77, %c0_78] : memref<1x32xf32, #tpu.memory_space<vmem>>, vector<1x32xf32>
    %327 = vector.broadcast %326 : vector<1x32xf32> to vector<24x32xf32>
    %328 = arith.addf %325, %327 : vector<24x32xf32>
    %329 = math.tanh %328 : vector<24x32xf32>
    %330 = arith.truncf %329 : vector<24x32xf32> to vector<24x32xbf16>
    %c0_79 = arith.constant 0 : index
    %c0_80 = arith.constant 0 : index
    %331 = vector.load %arg10[%c0_79, %c0_80] : memref<32x2xbf16, #tpu.memory_space<vmem>>, vector<32x2xbf16>
    %cst_81 = arith.constant dense<0.000000e+00> : vector<24x2xf32>
    %332 = tpu.matmul %330, %331, %cst_81 {dimension_numbers = #tpu.dot_dimension_numbers<[1], [0], [0], [1], [0, 0, 1, 1], [], []>} : vector<24x32xbf16>, vector<32x2xbf16>, vector<24x2xf32> -> vector<24x2xf32>
    %cst_82 = arith.constant dense<0xFF800000> : vector<24xf32>
    %333 = vector.multi_reduction <maximumf>, %332, %cst_82 [1] : vector<24x2xf32> to vector<24xf32>
    %334 = vector.shape_cast %333 : vector<24xf32> to vector<24x1xf32>
    %cst_83 = arith.constant dense<0xFF800000> : vector<1xf32>
    %335 = vector.multi_reduction <maximumf>, %334, %cst_83 [0] : vector<24x1xf32> to vector<1xf32>
    %336 = vector.shape_cast %335 : vector<1xf32> to vector<1x1xf32>
    %337 = vector.broadcast %336 : vector<1x1xf32> to vector<24x2xf32>
    %338 = arith.subf %332, %337 : vector<24x2xf32>
    %339 = math.exp %338 : vector<24x2xf32>
    %340 = vector.extract_strided_slice %339 {offsets = [0, 0], sizes = [24, 1], strides = [1, 1]} : vector<24x2xf32> to vector<24x1xf32>
    %341 = vector.shape_cast %340 : vector<24x1xf32> to vector<24x1xf32>
    %342 = vector.broadcast %341 : vector<24x1xf32> to vector<24x16xf32>
    %343 = vector.extract_strided_slice %339 {offsets = [0, 1], sizes = [24, 1], strides = [1, 1]} : vector<24x2xf32> to vector<24x1xf32>
    %344 = vector.shape_cast %343 : vector<24x1xf32> to vector<24x1xf32>
    %345 = vector.broadcast %344 : vector<24x1xf32> to vector<24x16xf32>
    %346 = tpu.concatenate %342, %345 in 1 : vector<24x16xf32>, vector<24x16xf32> -> vector<24x32xf32>
    %c0_84 = arith.constant 0 : index
    %c0_85 = arith.constant 0 : index
    %347 = vector.load %arg11[%c0_84, %c0_85] : memref<2x24xbf16, #tpu.memory_space<vmem>>, vector<2x24xbf16>
    %348 = arith.mulf %346, %322 : vector<24x32xf32>
    %349 = arith.truncf %348 : vector<24x32xf32> to vector<24x32xbf16>
    %cst_86 = arith.constant dense<0.000000e+00> : vector<2x32xf32>
    %350 = tpu.matmul %347, %349, %cst_86 {dimension_numbers = #tpu.dot_dimension_numbers<[1], [0], [0], [1], [0, 0, 1, 1], [], []>} : vector<2x24xbf16>, vector<24x32xbf16>, vector<2x32xf32> -> vector<2x32xf32>
    %351 = arith.truncf %339 : vector<24x2xf32> to vector<24x2xbf16>
    %cst_87 = arith.constant dense<0.000000e+00> : vector<2x2xf32>
    %352 = tpu.matmul %347, %351, %cst_87 {dimension_numbers = #tpu.dot_dimension_numbers<[1], [0], [0], [1], [0, 0, 1, 1], [], []>} : vector<2x24xbf16>, vector<24x2xbf16>, vector<2x2xf32> -> vector<2x2xf32>
    %353 = tpu.reciprocal %352 {approx = true} : vector<2x2xf32> -> vector<2x2xf32>
    %354 = vector.extract_strided_slice %353 {offsets = [0, 0], sizes = [2, 1], strides = [1, 1]} : vector<2x2xf32> to vector<2x1xf32>
    %355 = vector.shape_cast %354 : vector<2x1xf32> to vector<2x1xf32>
    %356 = vector.broadcast %355 : vector<2x1xf32> to vector<2x16xf32>
    %357 = vector.extract_strided_slice %353 {offsets = [0, 1], sizes = [2, 1], strides = [1, 1]} : vector<2x2xf32> to vector<2x1xf32>
    %358 = vector.shape_cast %357 : vector<2x1xf32> to vector<2x1xf32>
    %359 = vector.broadcast %358 : vector<2x1xf32> to vector<2x16xf32>
    %360 = tpu.concatenate %356, %359 in 1 : vector<2x16xf32>, vector<2x16xf32> -> vector<2x32xf32>
    %361 = arith.mulf %350, %360 : vector<2x32xf32>
    %362 = arith.truncf %361 : vector<2x32xf32> to vector<2x32xbf16>
    %c0_88 = arith.constant 0 : index
    %c0_89 = arith.constant 0 : index
    %363 = vector.load %arg12[%c0_88, %c0_89] : memref<32x32xbf16, #tpu.memory_space<vmem>>, vector<32x32xbf16>
    %cst_90 = arith.constant dense<0.000000e+00> : vector<2x32xf32>
    %364 = tpu.matmul %362, %363, %cst_90 {dimension_numbers = #tpu.dot_dimension_numbers<[1], [0], [0], [1], [0, 0, 1, 1], [], []>} : vector<2x32xbf16>, vector<32x32xbf16>, vector<2x32xf32> -> vector<2x32xf32>
    %c0_91 = arith.constant 0 : index
    %c0_92 = arith.constant 0 : index
    %365 = vector.load %arg13[%c0_91, %c0_92] : memref<1x32xf32, #tpu.memory_space<vmem>>, vector<1x32xf32>
    %366 = vector.broadcast %365 : vector<1x32xf32> to vector<2x32xf32>
    %367 = arith.addf %364, %366 : vector<2x32xf32>
    %cst_93 = arith.constant 0.000000e+00 : f32
    %368 = vector.broadcast %cst_93 : f32 to vector<2x32xf32>
    %369 = arith.maximumf %367, %368 : vector<2x32xf32>
    %370 = arith.truncf %369 : vector<2x32xf32> to vector<2x32xbf16>
    %c0_94 = arith.constant 0 : index
    %c0_95 = arith.constant 0 : index
    %371 = vector.load %arg14[%c0_94, %c0_95] : memref<32x16xbf16, #tpu.memory_space<vmem>>, vector<32x16xbf16>
    %cst_96 = arith.constant dense<0.000000e+00> : vector<2x16xf32>
    %372 = tpu.matmul %370, %371, %cst_96 {dimension_numbers = #tpu.dot_dimension_numbers<[1], [0], [0], [1], [0, 0, 1, 1], [], []>} : vector<2x32xbf16>, vector<32x16xbf16>, vector<2x16xf32> -> vector<2x16xf32>
    %c0_97 = arith.constant 0 : index
    %c0_98 = arith.constant 0 : index
    %373 = vector.load %arg15[%c0_97, %c0_98] : memref<1x16xf32, #tpu.memory_space<vmem>>, vector<1x16xf32>
    %374 = vector.broadcast %373 : vector<1x16xf32> to vector<2x16xf32>
    %375 = arith.addf %372, %374 : vector<2x16xf32>
    %cst_99 = arith.constant 0.000000e+00 : f32
    %376 = vector.broadcast %cst_99 : f32 to vector<2x16xf32>
    %377 = arith.maximumf %375, %376 : vector<2x16xf32>
    %378 = arith.truncf %377 : vector<2x16xf32> to vector<2x16xbf16>
    %c0_100 = arith.constant 0 : index
    %c0_101 = arith.constant 0 : index
    %379 = vector.load %arg16[%c0_100, %c0_101] : memref<16x128xbf16, #tpu.memory_space<vmem>>, vector<16x128xbf16>
    %cst_102 = arith.constant dense<0.000000e+00> : vector<2x128xf32>
    %380 = tpu.matmul %378, %379, %cst_102 {dimension_numbers = #tpu.dot_dimension_numbers<[1], [0], [0], [1], [0, 0, 1, 1], [], []>} : vector<2x16xbf16>, vector<16x128xbf16>, vector<2x128xf32> -> vector<2x128xf32>
    %c0_103 = arith.constant 0 : index
    %c0_104 = arith.constant 0 : index
    %381 = vector.load %arg17[%c0_103, %c0_104] : memref<1x128xf32, #tpu.memory_space<vmem>>, vector<1x128xf32>
    %382 = vector.broadcast %381 : vector<1x128xf32> to vector<2x128xf32>
    %383 = arith.addf %380, %382 : vector<2x128xf32>
    %c0_105 = arith.constant 0 : index
    %c0_106 = arith.constant 0 : index
    %384 = vector.load %arg18[%c0_105, %c0_106] : memref<2x128xf32, #tpu.memory_space<vmem>>, vector<2x128xf32>
    tpu.vector_store %arg18[%c0_105, %c0_106], %383 {strides = array<i32>} : memref<2x128xf32, #tpu.memory_space<vmem>>, vector<2x128xf32>,
    return
  }
}

</mosaic_0001>

<llo_original>
// kernel: _lambda_.1
$region0: #{_lambda_.1}
  #allocation0 [shape = 'u32[]', space=smem, size = 0x4, offset = 0x4, fixed_abs, tag = 'smem constant byte address 0x4 - core index']
  #allocation1 [shape = 'u32[144,128]{1,0:T(1,128)}', space=vmem, size = 0x12000, scoped, tag = 'internal scratch']
  #allocation2 [shape = 'f32[24,32]{1,0:T(8,128)}', space=vmem, size = 0x3000, scoped, tag = 'scratch operand']
  %s0 = inlined_call_operand.vmem [shape: f32[48,8], index: 0, kind: input, shape index: {}]
  %s1 = inlined_call_operand.vmem [shape: bf16[56,16], index: 1, kind: input, shape index: {}]
  %s2 = inlined_call_operand.vmem [shape: bf16[80,16], index: 2, kind: input, shape index: {}]
  %s3 = inlined_call_operand.vmem [shape: bf16[48,16], index: 3, kind: input, shape index: {}]
  %s4 = inlined_call_operand.hbm [shape: f32[9,16], index: 4, kind: input, shape index: {}]
  %s5 = inlined_call_operand.vmem [shape: bf16[16,128], index: 5, kind: input, shape index: {}]
  %s6 = inlined_call_operand.vmem [shape: bf16[32,128], index: 6, kind: input, shape index: {}]
  %s7 = inlined_call_operand.vmem [shape: f32[1,128], index: 7, kind: input, shape index: {}]
  %s8 = inlined_call_operand.vmem [shape: bf16[32,32], index: 8, kind: input, shape index: {}]
  %s9 = inlined_call_operand.hbm [shape: f32[1,32], index: 9, kind: input, shape index: {}]
  %s10 = inlined_call_operand.vmem [shape: bf16[32,2], index: 10, kind: input, shape index: {}]
  %s11 = inlined_call_operand.vmem [shape: bf16[2,24], index: 11, kind: input, shape index: {}]
  %s12 = inlined_call_operand.vmem [shape: bf16[32,32], index: 12, kind: input, shape index: {}]
  %s13 = inlined_call_operand.hbm [shape: f32[1,32], index: 13, kind: input, shape index: {}]
  %s14 = inlined_call_operand.vmem [shape: bf16[32,16], index: 14, kind: input, shape index: {}]
  %s15 = inlined_call_operand.hbm [shape: f32[1,16], index: 15, kind: input, shape index: {}]
  %s16 = inlined_call_operand.vmem [shape: bf16[16,128], index: 16, kind: input, shape index: {}]
  %s17 = inlined_call_operand.vmem [shape: f32[1,128], index: 17, kind: input, shape index: {}]
  %s18 = inlined_call_operand.vmem [shape: f32[2,128], index: 18, kind: output, shape index: {}]
  %s19 = sld [smem:[#allocation0]]
  $region98: #{_lambda_.1} parent=0
    _
  %s21 = ssub.s32 1, %s19
  %s22 = scalar_select 0, %s21, %s19
  $region1: #{_lambda_.1} parent=0
    #allocation3 [shape = 'u8[8192]{0}', space=vmem, size = 0x2000, scoped, tag = 'input window, operand 4, single buffered']
    #allocation4 [shape = 's32[1]{0}', space=sflag, size = 0x4, scoped, tag = 'scoped memory for _lambda_.1']
    #allocation5 [shape = 'u8[512]{0}', space=vmem, size = 0x400, scoped, tag = 'input window, operand 9, single buffered']
    #allocation6 [shape = 's32[1]{0}', space=sflag, size = 0x4, scoped, tag = 'scoped memory for _lambda_.1']
    #allocation7 [shape = 'u8[512]{0}', space=vmem, size = 0x400, scoped, tag = 'input window, operand 13, single buffered']
    #allocation8 [shape = 'u8[512]{0}', space=vmem, size = 0x400, scoped, tag = 'input window, operand 15, single buffered']
    #allocation9 [shape = 's32[1]{0}', space=sflag, size = 0x4, scoped, tag = 'scoped memory for _lambda_.1']
    %23 = vsyncpa [#allocation4], 0
    %24 = vsyncpa [#allocation6], 0
    %25 = vsyncpa [#allocation9], 0
    // Predicated region
    $region2: #{_lambda_.1} parent=1 // pred_check
      _
    $region3: #{_lambda_.1} parent=1 // pred_check_branch
      %27 = sbr.rel (0) target = $region5
    $region4: #{_lambda_.1} parent=1 // pred_region
      _
    $region5: #{_lambda_.1} parent=1 // pred_fallthru
      _
    // Predicated region
    $region6: #{_lambda_.1} parent=1 // pred_check
      _
    $region7: #{_lambda_.1} parent=1 // pred_check_branch
      %29 = sbr.rel (0) target = $region9
    $region8: #{_lambda_.1} parent=1 // pred_region
      _
    $region9: #{_lambda_.1} parent=1 // pred_fallthru
      _
    // Predicated region
    $region10: #{_lambda_.1} parent=1 // pred_check
      _
    $region11: #{_lambda_.1} parent=1 // pred_check_branch
      %31 = sbr.rel (0) target = $region13
    $region12: #{_lambda_.1} parent=1 // pred_region
      _
    $region13: #{_lambda_.1} parent=1 // pred_fallthru
      _
    // Predicated region
    $region14: #{_lambda_.1} parent=1 // pred_check
      _
    $region15: #{_lambda_.1} parent=1 // pred_check_branch
      %33 = sbr.rel (0) target = $region17
    $region16: #{_lambda_.1} parent=1 // pred_region
      _
    $region17: #{_lambda_.1} parent=1 // pred_fallthru
      _
    // Predicated region
    $region18: #{_lambda_.1} parent=1 // pred_check
      _
    $region19: #{_lambda_.1} parent=1 // pred_check_branch
      %35 = sbr.rel (0) target = $region21
    $region20: #{_lambda_.1} parent=1 // pred_region
      %s37 = ssub.s32 256, 256
      %38 = vsyncadd [#allocation4], %s37
      %s39 = sshll.u32 [#allocation3], 4
      %s40 = int_to_ptr.vmem [resolvable:$true] %s39
      %45 = dma.hbm_to_vmem [thread:$0]  %s4, 256, %s40, [#allocation4], 128, 128, 8
    $region21: #{_lambda_.1} parent=1 // pred_fallthru
      _
    // Predicated region
    $region22: #{_lambda_.1} parent=1 // pred_check
      _
    $region23: #{_lambda_.1} parent=1 // pred_check_branch
      %47 = sbr.rel (0) target = $region25
    $region24: #{_lambda_.1} parent=1 // pred_region
      _
    $region25: #{_lambda_.1} parent=1 // pred_fallthru
      _
    // Predicated region
    $region26: #{_lambda_.1} parent=1 // pred_check
      _
    $region27: #{_lambda_.1} parent=1 // pred_check_branch
      %49 = sbr.rel (0) target = $region29
    $region28: #{_lambda_.1} parent=1 // pred_region
      _
    $region29: #{_lambda_.1} parent=1 // pred_fallthru
      _
    // Predicated region
    $region30: #{_lambda_.1} parent=1 // pred_check
      _
    $region31: #{_lambda_.1} parent=1 // pred_check_branch
      %51 = sbr.rel (0) target = $region33
    $region32: #{_lambda_.1} parent=1 // pred_region
      _
    $region33: #{_lambda_.1} parent=1 // pred_fallthru
      _
    // Predicated region
    $region34: #{_lambda_.1} parent=1 // pred_check
      _
    $region35: #{_lambda_.1} parent=1 // pred_check_branch
      %53 = sbr.rel (0) target = $region37
    $region36: #{_lambda_.1} parent=1 // pred_region
      _
    $region37: #{_lambda_.1} parent=1 // pred_fallthru
      _
    // Predicated region
    $region38: #{_lambda_.1} parent=1 // pred_check
      _
    $region39: #{_lambda_.1} parent=1 // pred_check_branch
      %55 = sbr.rel (0) target = $region41
    $region40: #{_lambda_.1} parent=1 // pred_region
      %s57 = ssub.s32 16, 16
      %58 = vsyncadd [#allocation6], %s57
      %s60 = sshll.u32 [#allocation5], 4
      %s61 = int_to_ptr.vmem [resolvable:$true] %s60
      %63 = dma.hbm_to_vmem [thread:$0]  %s9, 16, %s61, [#allocation6]
    $region41: #{_lambda_.1} parent=1 // pred_fallthru
      _
    // Predicated region
    $region42: #{_lambda_.1} parent=1 // pred_check
      _
    $region43: #{_lambda_.1} parent=1 // pred_check_branch
      %65 = sbr.rel (0) target = $region45
    $region44: #{_lambda_.1} parent=1 // pred_region
      _
    $region45: #{_lambda_.1} parent=1 // pred_fallthru
      _
    // Predicated region
    $region46: #{_lambda_.1} parent=1 // pred_check
      _
    $region47: #{_lambda_.1} parent=1 // pred_check_branch
      %67 = sbr.rel (0) target = $region49
    $region48: #{_lambda_.1} parent=1 // pred_region
      _
    $region49: #{_lambda_.1} parent=1 // pred_fallthru
      _
    // Predicated region
    $region50: #{_lambda_.1} parent=1 // pred_check
      _
    $region51: #{_lambda_.1} parent=1 // pred_check_branch
      %69 = sbr.rel (0) target = $region53
    $region52: #{_lambda_.1} parent=1 // pred_region
      _
    $region53: #{_lambda_.1} parent=1 // pred_fallthru
      _
    // Predicated region
    $region54: #{_lambda_.1} parent=1 // pred_check
      _
    $region55: #{_lambda_.1} parent=1 // pred_check_branch
      %71 = sbr.rel (0) target = $region57
    $region56: #{_lambda_.1} parent=1 // pred_region
      %s73 = ssub.s32 16, 16
      %74 = vsyncadd [#allocation6], %s73
      %s76 = sshll.u32 [#allocation7], 4
      %s77 = int_to_ptr.vmem [resolvable:$true] %s76
      %79 = dma.hbm_to_vmem [thread:$0]  %s13, 16, %s77, [#allocation6]
    $region57: #{_lambda_.1} parent=1 // pred_fallthru
      _
    // Predicated region
    $region58: #{_lambda_.1} parent=1 // pred_check
      _
    $region59: #{_lambda_.1} parent=1 // pred_check_branch
      %81 = sbr.rel (0) target = $region61
    $region60: #{_lambda_.1} parent=1 // pred_region
      _
    $region61: #{_lambda_.1} parent=1 // pred_fallthru
      _
    // Predicated region
    $region62: #{_lambda_.1} parent=1 // pred_check
      _
    $region63: #{_lambda_.1} parent=1 // pred_check_branch
      %83 = sbr.rel (0) target = $region65
    $region64: #{_lambda_.1} parent=1 // pred_region
      %s85 = ssub.s32 16, 16
      %86 = vsyncadd [#allocation9], %s85
      %s88 = sshll.u32 [#allocation8], 4
      %s89 = int_to_ptr.vmem [resolvable:$true] %s88
      %91 = dma.hbm_to_vmem [thread:$0]  %s15, 16, %s89, [#allocation9]
    $region65: #{_lambda_.1} parent=1 // pred_fallthru
      _
    // Predicated region
    $region66: #{_lambda_.1} parent=1 // pred_check
      _
    $region67: #{_lambda_.1} parent=1 // pred_check_branch
      %93 = sbr.rel (0) target = $region69
    $region68: #{_lambda_.1} parent=1 // pred_region
      _
    $region69: #{_lambda_.1} parent=1 // pred_fallthru
      _
    // Predicated region
    $region70: #{_lambda_.1} parent=1 // pred_check
      _
    $region71: #{_lambda_.1} parent=1 // pred_check_branch
      %95 = sbr.rel (0) target = $region73
    $region72: #{_lambda_.1} parent=1 // pred_region
      _
    $region73: #{_lambda_.1} parent=1 // pred_fallthru
      _
    // Predicated region
    $region74: #{_lambda_.1} parent=1 // pred_check
      _
    $region75: #{_lambda_.1} parent=1 // pred_check_branch
      %97 = sbr.rel (0) target = $region77
    $region76: #{_lambda_.1} parent=1 // pred_region
      %98 = dma.done [#allocation4], 256
    $region77: #{_lambda_.1} parent=1 // pred_fallthru
      _
    // Predicated region
    $region78: #{_lambda_.1} parent=1 // pred_check
      _
    $region79: #{_lambda_.1} parent=1 // pred_check_branch
      %100 = sbr.rel (0) target = $region81
    $region80: #{_lambda_.1} parent=1 // pred_region
      %101 = dma.done [#allocation6], 16
    $region81: #{_lambda_.1} parent=1 // pred_fallthru
      _
    // Predicated region
    $region82: #{_lambda_.1} parent=1 // pred_check
      _
    $region83: #{_lambda_.1} parent=1 // pred_check_branch
      %103 = sbr.rel (0) target = $region85
    $region84: #{_lambda_.1} parent=1 // pred_region
      %104 = dma.done [#allocation6], 16
    $region85: #{_lambda_.1} parent=1 // pred_fallthru
      _
    // Predicated region
    $region86: #{_lambda_.1} parent=1 // pred_check
      _
    $region87: #{_lambda_.1} parent=1 // pred_check_branch
      %106 = sbr.rel (0) target = $region89
    $region88: #{_lambda_.1} parent=1 // pred_region
      %107 = dma.done [#allocation9], 16
    $region89: #{_lambda_.1} parent=1 // pred_fallthru
      _
    %v109 = vld [vmem:[%s0] sm:$0xff]
    %v110 = vld [vmem:[%s0 + $0x8] sm:$0xff]
    %v111 = vld [vmem:[%s0 + $0x10] sm:$0xff]
    %v112 = vld [vmem:[%s0 + $0x18] sm:$0xff]
    %v113 = vld [vmem:[%s0 + $0x20] sm:$0xff]
    %v114 = vld [vmem:[%s0 + $0x28] sm:$0xff]
    %v115 = vld [vmem:[%s1] sm:$0xf]
    %v116 = vld [vmem:[%s1 + $0x4] sm:$0xf]
    %v117 = vld [vmem:[%s1 + $0x8] sm:$0xf]
    %v118 = vld [vmem:[%s1 + $0xc] sm:$0xf]
    %v119 = vld [vmem:[%s1 + $0x10] sm:$0xf]
    %v120 = vld [vmem:[%s1 + $0x14] sm:$0xf]
    %v121 = vld [vmem:[%s1 + $0x18] sm:$0xf]
    %vm127 = vcmask 1045504
    %v128 = vrot.slane %v109, 2
    %v129 = vrot.slane %v110, 2
    %v130 = vsel %vm127, %v128, %v129
    %v131 = vrot.slane %v111, 2
    %v132 = vsel %vm127, %v129, %v131
    %v133 = vrot.slane %v112, 2
    %v134 = vsel %vm127, %v131, %v133
    %v135 = vrot.slane %v113, 2
    %v136 = vsel %vm127, %v133, %v135
    %137 = vrot.lane.b32.xlu0 %v130, 8
    %v138 = vpop.permute.xlu0 %137
    %139 = vrot.lane.b32.xlu0 %v132, 8
    %v140 = vpop.permute.xlu0 %139
    %141 = vrot.lane.b32.xlu0 %v134, 8
    %v142 = vpop.permute.xlu0 %141
    %143 = vrot.lane.b32.xlu0 %v136, 8
    %v144 = vpop.permute.xlu0 %143
    %145 = vrot.lane.b32.xlu0 %v135, 8
    %v146 = vpop.permute.xlu0 %145
    %vm152 = vcmask 1043456
    %v153 = vrot.slane %v109, 4
    %v154 = vrot.slane %v110, 4
    %v155 = vsel %vm152, %v153, %v154
    %v156 = vrot.slane %v111, 4
    %v157 = vsel %vm152, %v154, %v156
    %v158 = vrot.slane %v112, 4
    %v159 = vsel %vm152, %v156, %v158
    %v160 = vrot.slane %v113, 4
    %v161 = vsel %vm152, %v158, %v160
    %162 = vrot.lane.b32.xlu0 %v155, 16
    %v163 = vpop.permute.xlu0 %162
    %164 = vrot.lane.b32.xlu0 %v157, 16
    %v165 = vpop.permute.xlu0 %164
    %166 = vrot.lane.b32.xlu0 %v159, 16
    %v167 = vpop.permute.xlu0 %166
    %168 = vrot.lane.b32.xlu0 %v161, 16
    %v169 = vpop.permute.xlu0 %168
    %170 = vrot.lane.b32.xlu0 %v160, 16
    %v171 = vpop.permute.xlu0 %170
    %vm178 = vcmask 1041408
    %v179 = vrot.slane %v109, 6
    %v180 = vrot.slane %v110, 6
    %v181 = vsel %vm178, %v179, %v180
    %v182 = vrot.slane %v111, 6
    %v183 = vsel %vm178, %v180, %v182
    %v184 = vrot.slane %v112, 6
    %v185 = vsel %vm178, %v182, %v184
    %v186 = vrot.slane %v113, 6
    %v187 = vsel %vm178, %v184, %v186
    %v188 = vrot.slane %v114, 6
    %v189 = vsel %vm178, %v186, %v188
    %190 = vrot.lane.b32.xlu0 %v181, 24
    %v191 = vpop.permute.xlu0 %190
    %192 = vrot.lane.b32.xlu0 %v183, 24
    %v193 = vpop.permute.xlu0 %192
    %194 = vrot.lane.b32.xlu0 %v185, 24
    %v195 = vpop.permute.xlu0 %194
    %196 = vrot.lane.b32.xlu0 %v187, 24
    %v197 = vpop.permute.xlu0 %196
    %198 = vrot.lane.b32.xlu0 %v189, 24
    %v199 = vpop.permute.xlu0 %198
    %205 = vrot.lane.b32.xlu0 %v110, 32
    %v206 = vpop.permute.xlu0 %205
    %207 = vrot.lane.b32.xlu0 %v111, 32
    %v208 = vpop.permute.xlu0 %207
    %209 = vrot.lane.b32.xlu0 %v112, 32
    %v210 = vpop.permute.xlu0 %209
    %211 = vrot.lane.b32.xlu0 %v113, 32
    %v212 = vpop.permute.xlu0 %211
    %213 = vrot.lane.b32.xlu0 %v114, 32
    %v214 = vpop.permute.xlu0 %213
    %v220 = vrot.slane %v114, 2
    %v221 = vsel %vm127, %v135, %v220
    %222 = vrot.lane.b32.xlu0 %v132, 40
    %v223 = vpop.permute.xlu0 %222
    %224 = vrot.lane.b32.xlu0 %v134, 40
    %v225 = vpop.permute.xlu0 %224
    %226 = vrot.lane.b32.xlu0 %v136, 40
    %v227 = vpop.permute.xlu0 %226
    %228 = vrot.lane.b32.xlu0 %v221, 40
    %v229 = vpop.permute.xlu0 %228
    %230 = vrot.lane.b32.xlu0 %v220, 40
    %v231 = vpop.permute.xlu0 %230
    %v237 = vrot.slane %v114, 4
    %v238 = vsel %vm152, %v160, %v237
    %239 = vrot.lane.b32.xlu0 %v157, 48
    %v240 = vpop.permute.xlu0 %239
    %241 = vrot.lane.b32.xlu0 %v159, 48
    %v242 = vpop.permute.xlu0 %241
    %243 = vrot.lane.b32.xlu0 %v161, 48
    %v244 = vpop.permute.xlu0 %243
    %245 = vrot.lane.b32.xlu0 %v238, 48
    %v246 = vpop.permute.xlu0 %245
    %247 = vrot.lane.b32.xlu0 %v237, 48
    %v248 = vpop.permute.xlu0 %247
    %vm254 = vcmask 64512
    %v255 = vsel %vm254, %v109, %v138
    %v256 = vsel %vm254, %v110, %v140
    %v257 = vsel %vm254, %v111, %v142
    %v258 = vsel %vm254, %v112, %v144
    %v259 = vsel %vm254, %v113, %v146
    %vm260 = vcmask 130048
    %v261 = vsel %vm260, %v255, %v163
    %v262 = vsel %vm260, %v256, %v165
    %v263 = vsel %vm260, %v257, %v167
    %v264 = vsel %vm260, %v258, %v169
    %v265 = vsel %vm260, %v259, %v171
    %vm266 = vcmask 195584
    %v267 = vsel %vm266, %v261, %v191
    %v268 = vsel %vm266, %v262, %v193
    %v269 = vsel %vm266, %v263, %v195
    %v270 = vsel %vm266, %v264, %v197
    %v271 = vsel %vm266, %v265, %v199
    %vm272 = vcmask 261120
    %v273 = vsel %vm272, %v267, %v206
    %v274 = vsel %vm272, %v268, %v208
    %v275 = vsel %vm272, %v269, %v210
    %v276 = vsel %vm272, %v270, %v212
    %v277 = vsel %vm272, %v271, %v214
    %vm278 = vcmask 326656
    %v279 = vsel %vm278, %v273, %v223
    %v280 = vsel %vm278, %v274, %v225
    %v281 = vsel %vm278, %v275, %v227
    %v282 = vsel %vm278, %v276, %v229
    %v283 = vsel %vm278, %v277, %v231
    %vm284 = vcmask 392192
    %v285 = vsel %vm284, %v279, %v240
    %v286 = vsel %vm284, %v280, %v242
    %v287 = vsel %vm284, %v281, %v244
    %v288 = vsel %vm284, %v282, %v246
    %v289 = vsel %vm284, %v283, %v248
    %v290 = vpack.c.bf16 %v286, %v285
    %v291 = vpack.c.bf16 %v288, %v287
    %v292 = vpack.c.bf16 %v289, %v289
    %v293 = vld [vmem:[#allocation3] sm:$0x1]
    %v294 = vld [vmem:[#allocation3 + $0x1] sm:$0x1]
    %v295 = vld [vmem:[#allocation3 + $0x2] sm:$0x1]
    %v296 = vlaneseq
    %v297 = vshrl.u32 %v296, 7
    %v298 = vsub.s32 0, %v297
    %v299 = vrot.slane %v293, %v298
    %v307 = vunpack.c.l.b16 %v115
    %v308 = vunpack.c.l.b16 %v116
    %v309 = vunpack.c.l.b16 %v117
    %v310 = vunpack.c.l.b16 %v118
    %v311 = vunpack.c.l.b16 %v119
    %v312 = vunpack.c.l.b16 %v120
    %v313 = vunpack.c.l.b16 %v121
    %v314 = vpack.c.b16 %v308, %v307
    %v315 = vpack.c.b16 %v310, %v309
    %v316 = vpack.c.b16 %v312, %v311
    %v317 = vpack.c.b16 %v313, %v313
    %vm321 = vcmask 457728
    %v323 = vsel %vm321, %v290, 0
    %v326 = vsel %vm321, %v291, 0
    %v329 = vsel %vm321, %v292, 0
    %v332 = vsel %vm152, %v317, 0
    %334 = vmatprep.subr.bf16.mxu0 0
    %335 = vmatpush1.bf16.msra.mxu0 %v314
    %336 = vmatprep.subr.bf16.mxu0 0
    %337 = vmatpush1.bf16.msra.mxu0 %v315
    %338 = vmatprep.subr.bf16.mxu0 0
    %339 = vmatpush1.bf16.msra.mxu0 %v316
    %340 = vmatprep.subr.bf16.mxu0 0
    %341 = vmatpush1.bf16.msra.mxu0 %v332
    %342 = vmatprep.subr.bf16.mxu0 0
    %343 = vmatpush1.bf16.msra.mxu0 0
    %344 = vmatprep.subr.bf16.mxu0 0
    %345 = vmatpush1.bf16.msra.mxu0 0
    %346 = vmatprep.subr.bf16.mxu0 0
    %347 = vmatpush1.bf16.msra.mxu0 0
    %348 = vmatprep.subr.bf16.mxu0 0
    %349 = vmatpush1.bf16.msra.mxu0 0
    %350 = vmatprep.subr.bf16.mxu0 0
    %351 = vmatpush1.bf16.msra.mxu0 0
    %352 = vmatprep.subr.bf16.mxu0 0
    %353 = vmatpush1.bf16.msra.mxu0 0
    %354 = vmatprep.subr.bf16.mxu0 0
    %355 = vmatpush1.bf16.msra.mxu0 0
    %356 = vmatprep.subr.bf16.mxu0 0
    %357 = vmatpush1.bf16.msra.mxu0 0
    %358 = vmatprep.subr.bf16.mxu0 0
    %359 = vmatpush1.bf16.msra.mxu0 0
    %360 = vmatprep.subr.bf16.mxu0 0
    %361 = vmatpush1.bf16.msra.mxu0 0
    %362 = vmatprep.subr.bf16.mxu0 0
    %363 = vmatpush1.bf16.msra.mxu0 0
    %364 = vmatprep.subr.bf16.mxu0 0
    %365 = vmatpush1.bf16.msra.mxu0 0
    %366 = vmatprep.mubr.bf16.mxu0 0
    %367 = vmatmul.mubr.bf16.gmra.mrb[0].mxu0 %v323
    %v368 = vpop.f32.mrb[0].mxu0
    %v369 = vadd.f32 %v299, %v368
    %v370 = vpop.f32.mrb[0].mxu0
    %v371 = vpop.f32.mrb[0].mxu0
    %v372 = vadd.f32 %v299, %v371
    %v373 = vpop.f32.mrb[0].mxu0
    %374 = vmatprep.mubr.bf16.mxu0 0
    %375 = vmatmul.mubr.bf16.gmra.mrb[0].mxu0 %v326
    %v376 = vpop.f32.mrb[0].mxu0
    %v377 = vadd.f32 %v299, %v376
    %v378 = vpop.f32.mrb[0].mxu0
    %v379 = vpop.f32.mrb[0].mxu0
    %v380 = vadd.f32 %v299, %v379
    %v381 = vpop.f32.mrb[0].mxu0
    %382 = vmatprep.mubr.bf16.mxu0 0
    %383 = vmatmul.mubr.bf16.gmra.mrb[0].mxu0 %v329
    %v384 = vpop.f32.mrb[0].mxu0
    %v385 = vadd.f32 %v299, %v384
    %v386 = vpop.f32.mrb[0].mxu0
    %v387 = vpop.f32.mrb[0].mxu0
    %v388 = vpop.f32.mrb[0].mxu0
    %389 = vdwg.mxu0
    %v390 = vmax.f32 %v369, 0.0
    %v391 = vmax.f32 %v372, 0.0
    %v392 = vmax.f32 %v377, 0.0
    %v393 = vmax.f32 %v380, 0.0
    %v394 = vmax.f32 %v385, 0.0
    %v395 = vlaneseq
    %v396 = vshrl.u32 %v395, 7
    %v397 = vsub.s32 0, %v396
    %v398 = vrot.slane %v294, %v397
    %v399 = vmul.f32 %v390, %v398
    %v400 = vmul.f32 %v391, %v398
    %v401 = vmul.f32 %v392, %v398
    %v402 = vmul.f32 %v393, %v398
    %v403 = vmul.f32 %v394, %v398
    %v404 = vlaneseq
    %v405 = vshrl.u32 %v404, 7
    %v406 = vsub.s32 0, %v405
    %v407 = vrot.slane %v295, %v406
    %v408 = vadd.f32 %v399, %v407
    %v409 = vadd.f32 %v400, %v407
    %v410 = vadd.f32 %v401, %v407
    %v411 = vadd.f32 %v402, %v407
    %v412 = vadd.f32 %v403, %v407
    %v413 = vld [vmem:[%s2] sm:$0xf]
    %v414 = vld [vmem:[%s2 + $0x4] sm:$0xf]
    %v415 = vld [vmem:[%s2 + $0x8] sm:$0xf]
    %v416 = vld [vmem:[%s2 + $0xc] sm:$0xf]
    %v417 = vld [vmem:[%s2 + $0x10] sm:$0xf]
    %v418 = vld [vmem:[%s2 + $0x14] sm:$0xf]
    %v419 = vld [vmem:[%s2 + $0x18] sm:$0xf]
    %v420 = vld [vmem:[%s2 + $0x1c] sm:$0xf]
    %v421 = vld [vmem:[%s2 + $0x20] sm:$0xf]
    %v422 = vld [vmem:[%s2 + $0x24] sm:$0xf]
    %v427 = vrot.slane %v408, 2
    %v428 = vrot.slane %v409, 2
    %v429 = vsel %vm127, %v427, %v428
    %v430 = vrot.slane %v410, 2
    %v431 = vsel %vm127, %v428, %v430
    %v432 = vrot.slane %v411, 2
    %v433 = vsel %vm127, %v430, %v432
    %434 = vrot.lane.b32.xlu0 %v429, 16
    %v435 = vpop.permute.xlu0 %434
    %436 = vrot.lane.b32.xlu0 %v431, 16
    %v437 = vpop.permute.xlu0 %436
    %438 = vrot.lane.b32.xlu0 %v433, 16
    %v439 = vpop.permute.xlu0 %438
    %440 = vrot.lane.b32.xlu0 %v432, 16
    %v441 = vpop.permute.xlu0 %440
    %v446 = vrot.slane %v408, 4
    %v447 = vrot.slane %v409, 4
    %v448 = vsel %vm152, %v446, %v447
    %v449 = vrot.slane %v410, 4
    %v450 = vsel %vm152, %v447, %v449
    %v451 = vrot.slane %v411, 4
    %v452 = vsel %vm152, %v449, %v451
    %453 = vrot.lane.b32.xlu0 %v448, 32
    %v454 = vpop.permute.xlu0 %453
    %455 = vrot.lane.b32.xlu0 %v450, 32
    %v456 = vpop.permute.xlu0 %455
    %457 = vrot.lane.b32.xlu0 %v452, 32
    %v458 = vpop.permute.xlu0 %457
    %459 = vrot.lane.b32.xlu0 %v451, 32
    %v460 = vpop.permute.xlu0 %459
    %v466 = vrot.slane %v408, 6
    %v467 = vrot.slane %v409, 6
    %v468 = vsel %vm178, %v466, %v467
    %v469 = vrot.slane %v410, 6
    %v470 = vsel %vm178, %v467, %v469
    %v471 = vrot.slane %v411, 6
    %v472 = vsel %vm178, %v469, %v471
    %v473 = vrot.slane %v412, 6
    %v474 = vsel %vm178, %v471, %v473
    %475 = vrot.lane.b32.xlu0 %v468, 48
    %v476 = vpop.permute.xlu0 %475
    %477 = vrot.lane.b32.xlu0 %v470, 48
    %v478 = vpop.permute.xlu0 %477
    %479 = vrot.lane.b32.xlu0 %v472, 48
    %v480 = vpop.permute.xlu0 %479
    %481 = vrot.lane.b32.xlu0 %v474, 48
    %v482 = vpop.permute.xlu0 %481
    %487 = vrot.lane.b32.xlu0 %v409, 64
    %v488 = vpop.permute.xlu0 %487
    %489 = vrot.lane.b32.xlu0 %v410, 64
    %v490 = vpop.permute.xlu0 %489
    %491 = vrot.lane.b32.xlu0 %v411, 64
    %v492 = vpop.permute.xlu0 %491
    %493 = vrot.lane.b32.xlu0 %v412, 64
    %v494 = vpop.permute.xlu0 %493
    %v499 = vsel %vm260, %v408, %v435
    %v500 = vsel %vm260, %v409, %v437
    %v501 = vsel %vm260, %v410, %v439
    %v502 = vsel %vm260, %v411, %v441
    %v503 = vsel %vm272, %v499, %v454
    %v504 = vsel %vm272, %v500, %v456
    %v505 = vsel %vm272, %v501, %v458
    %v506 = vsel %vm272, %v502, %v460
    %v507 = vsel %vm284, %v503, %v476
    %v508 = vsel %vm284, %v504, %v478
    %v509 = vsel %vm284, %v505, %v480
    %v510 = vsel %vm284, %v506, %v482
    %vm511 = vcmask 523264
    %v512 = vsel %vm511, %v507, %v488
    %v513 = vsel %vm511, %v508, %v490
    %v514 = vsel %vm511, %v509, %v492
    %v515 = vsel %vm511, %v510, %v494
    %v516 = vpack.c.bf16 %v513, %v512
    %v517 = vpack.c.bf16 %v515, %v514
    %v518 = vld [vmem:[#allocation3 + $0x3] sm:$0x1]
    %v519 = vld [vmem:[#allocation3 + $0x4] sm:$0x1]
    %v520 = vld [vmem:[#allocation3 + $0x5] sm:$0x1]
    %v521 = vlaneseq
    %v522 = vshrl.u32 %v521, 7
    %v523 = vsub.s32 0, %v522
    %v524 = vrot.slane %v518, %v523
    %v535 = vunpack.c.l.b16 %v413
    %v536 = vunpack.c.l.b16 %v414
    %v537 = vunpack.c.l.b16 %v415
    %v538 = vunpack.c.l.b16 %v416
    %v539 = vunpack.c.l.b16 %v417
    %v540 = vunpack.c.l.b16 %v418
    %v541 = vunpack.c.l.b16 %v419
    %v542 = vunpack.c.l.b16 %v420
    %v543 = vunpack.c.l.b16 %v421
    %v544 = vunpack.c.l.b16 %v422
    %v545 = vpack.c.b16 %v536, %v535
    %v546 = vpack.c.b16 %v538, %v537
    %v547 = vpack.c.b16 %v540, %v539
    %v548 = vpack.c.b16 %v542, %v541
    %v549 = vpack.c.b16 %v544, %v543
    %vm555 = vcmask 654336
    %v557 = vsel %vm555, %v516, 0
    %v560 = vsel %vm555, %v517, 0
    %562 = vmatprep.subr.bf16.mxu0 0
    %563 = vmatpush1.bf16.msra.mxu0 %v545
    %564 = vmatprep.subr.bf16.mxu0 0
    %565 = vmatpush1.bf16.msra.mxu0 %v546
    %566 = vmatprep.subr.bf16.mxu0 0
    %567 = vmatpush1.bf16.msra.mxu0 %v547
    %568 = vmatprep.subr.bf16.mxu0 0
    %569 = vmatpush1.bf16.msra.mxu0 %v548
    %570 = vmatprep.subr.bf16.mxu0 0
    %571 = vmatpush1.bf16.msra.mxu0 %v549
    %572 = vmatprep.subr.bf16.mxu0 0
    %573 = vmatpush1.bf16.msra.mxu0 0
    %574 = vmatprep.subr.bf16.mxu0 0
    %575 = vmatpush1.bf16.msra.mxu0 0
    %576 = vmatprep.subr.bf16.mxu0 0
    %577 = vmatpush1.bf16.msra.mxu0 0
    %578 = vmatprep.subr.bf16.mxu0 0
    %579 = vmatpush1.bf16.msra.mxu0 0
    %580 = vmatprep.subr.bf16.mxu0 0
    %581 = vmatpush1.bf16.msra.mxu0 0
    %582 = vmatprep.subr.bf16.mxu0 0
    %583 = vmatpush1.bf16.msra.mxu0 0
    %584 = vmatprep.subr.bf16.mxu0 0
    %585 = vmatpush1.bf16.msra.mxu0 0
    %586 = vmatprep.subr.bf16.mxu0 0
    %587 = vmatpush1.bf16.msra.mxu0 0
    %588 = vmatprep.subr.bf16.mxu0 0
    %589 = vmatpush1.bf16.msra.mxu0 0
    %590 = vmatprep.subr.bf16.mxu0 0
    %591 = vmatpush1.bf16.msra.mxu0 0
    %592 = vmatprep.subr.bf16.mxu0 0
    %593 = vmatpush1.bf16.msra.mxu0 0
    %594 = vmatprep.mubr.bf16.mxu0 0
    %595 = vmatmul.mubr.bf16.gmra.mrb[0].mxu0 %v557
    %v596 = vpop.f32.mrb[0].mxu0
    %v597 = vadd.f32 %v524, %v596
    %v598 = vpop.f32.mrb[0].mxu0
    %v599 = vpop.f32.mrb[0].mxu0
    %v600 = vadd.f32 %v524, %v599
    %v601 = vpop.f32.mrb[0].mxu0
    %602 = vmatprep.mubr.bf16.mxu0 0
    %603 = vmatmul.mubr.bf16.gmra.mrb[0].mxu0 %v560
    %v604 = vpop.f32.mrb[0].mxu0
    %v605 = vadd.f32 %v524, %v604
    %v606 = vpop.f32.mrb[0].mxu0
    %v607 = vpop.f32.mrb[0].mxu0
    %v608 = vadd.f32 %v524, %v607
    %v609 = vpop.f32.mrb[0].mxu0
    %610 = vdwg.mxu0
    %v611 = vmax.f32 %v597, 0.0
    %v612 = vmax.f32 %v600, 0.0
    %v613 = vmax.f32 %v605, 0.0
    %v614 = vmax.f32 %v608, 0.0
    %v615 = vlaneseq
    %v616 = vshrl.u32 %v615, 7
    %v617 = vsub.s32 0, %v616
    %v618 = vrot.slane %v519, %v617
    %v619 = vmul.f32 %v611, %v618
    %v620 = vmul.f32 %v612, %v618
    %v621 = vmul.f32 %v613, %v618
    %v622 = vmul.f32 %v614, %v618
    %v623 = vlaneseq
    %v624 = vshrl.u32 %v623, 7
    %v625 = vsub.s32 0, %v624
    %v626 = vrot.slane %v520, %v625
    %v627 = vadd.f32 %v619, %v626
    %v628 = vadd.f32 %v620, %v626
    %v629 = vadd.f32 %v621, %v626
    %v630 = vadd.f32 %v622, %v626
    %v631 = vld [vmem:[%s3] sm:$0xf]
    %v632 = vld [vmem:[%s3 + $0x4] sm:$0xf]
    %v633 = vld [vmem:[%s3 + $0x8] sm:$0xf]
    %v634 = vld [vmem:[%s3 + $0xc] sm:$0xf]
    %v635 = vld [vmem:[%s3 + $0x10] sm:$0xf]
    %v636 = vld [vmem:[%s3 + $0x14] sm:$0xf]
    %v641 = vrot.slane %v627, 2
    %v642 = vrot.slane %v628, 2
    %v643 = vsel %vm127, %v641, %v642
    %v644 = vrot.slane %v629, 2
    %v645 = vsel %vm127, %v642, %v644
    %v646 = vrot.slane %v630, 2
    %v647 = vsel %vm127, %v644, %v646
    %648 = vrot.lane.b32.xlu0 %v643, 16
    %v649 = vpop.permute.xlu0 %648
    %650 = vrot.lane.b32.xlu0 %v645, 16
    %v651 = vpop.permute.xlu0 %650
    %652 = vrot.lane.b32.xlu0 %v647, 16
    %v653 = vpop.permute.xlu0 %652
    %v657 = vrot.slane %v627, 4
    %v658 = vrot.slane %v628, 4
    %v659 = vsel %vm152, %v657, %v658
    %v660 = vrot.slane %v629, 4
    %v661 = vsel %vm152, %v658, %v660
    %v662 = vrot.slane %v630, 4
    %v663 = vsel %vm152, %v660, %v662
    %664 = vrot.lane.b32.xlu0 %v659, 32
    %v665 = vpop.permute.xlu0 %664
    %666 = vrot.lane.b32.xlu0 %v661, 32
    %v667 = vpop.permute.xlu0 %666
    %668 = vrot.lane.b32.xlu0 %v663, 32
    %v669 = vpop.permute.xlu0 %668
    %v673 = vsel %vm260, %v627, %v649
    %v674 = vsel %vm260, %v628, %v651
    %v675 = vsel %vm260, %v629, %v653
    %v676 = vsel %vm272, %v673, %v665
    %v677 = vsel %vm272, %v674, %v667
    %v678 = vsel %vm272, %v675, %v669
    %v679 = vpack.c.bf16 %v677, %v676
    %v680 = vpack.c.bf16 %v678, %v678
    %v681 = vld [vmem:[#allocation3 + $0x6] sm:$0x1]
    %v682 = vld [vmem:[#allocation3 + $0x7] sm:$0x1]
    %v683 = vld [vmem:[#allocation3 + $0x8] sm:$0x1]
    %v684 = vlaneseq
    %v685 = vshrl.u32 %v684, 7
    %v686 = vsub.s32 0, %v685
    %v687 = vrot.slane %v681, %v686
    %v694 = vunpack.c.l.b16 %v631
    %v695 = vunpack.c.l.b16 %v632
    %v696 = vunpack.c.l.b16 %v633
    %v697 = vunpack.c.l.b16 %v634
    %v698 = vunpack.c.l.b16 %v635
    %v699 = vunpack.c.l.b16 %v636
    %v700 = vpack.c.b16 %v695, %v694
    %v701 = vpack.c.b16 %v697, %v696
    %v702 = vpack.c.b16 %v699, %v698
    %v707 = vsel %vm284, %v679, 0
    %v710 = vsel %vm284, %v680, 0
    %712 = vmatprep.subr.bf16.mxu0 0
    %713 = vmatpush1.bf16.msra.mxu0 %v700
    %714 = vmatprep.subr.bf16.mxu0 0
    %715 = vmatpush1.bf16.msra.mxu0 %v701
    %716 = vmatprep.subr.bf16.mxu0 0
    %717 = vmatpush1.bf16.msra.mxu0 %v702
    %718 = vmatprep.subr.bf16.mxu0 0
    %719 = vmatpush1.bf16.msra.mxu0 0
    %720 = vmatprep.subr.bf16.mxu0 0
    %721 = vmatpush1.bf16.msra.mxu0 0
    %722 = vmatprep.subr.bf16.mxu0 0
    %723 = vmatpush1.bf16.msra.mxu0 0
    %724 = vmatprep.subr.bf16.mxu0 0
    %725 = vmatpush1.bf16.msra.mxu0 0
    %726 = vmatprep.subr.bf16.mxu0 0
    %727 = vmatpush1.bf16.msra.mxu0 0
    %728 = vmatprep.subr.bf16.mxu0 0
    %729 = vmatpush1.bf16.msra.mxu0 0
    %730 = vmatprep.subr.bf16.mxu0 0
    %731 = vmatpush1.bf16.msra.mxu0 0
    %732 = vmatprep.subr.bf16.mxu0 0
    %733 = vmatpush1.bf16.msra.mxu0 0
    %734 = vmatprep.subr.bf16.mxu0 0
    %735 = vmatpush1.bf16.msra.mxu0 0
    %736 = vmatprep.subr.bf16.mxu0 0
    %737 = vmatpush1.bf16.msra.mxu0 0
    %738 = vmatprep.subr.bf16.mxu0 0
    %739 = vmatpush1.bf16.msra.mxu0 0
    %740 = vmatprep.subr.bf16.mxu0 0
    %741 = vmatpush1.bf16.msra.mxu0 0
    %742 = vmatprep.subr.bf16.mxu0 0
    %743 = vmatpush1.bf16.msra.mxu0 0
    %744 = vmatprep.mubr.bf16.mxu0 0
    %745 = vmatmul.mubr.bf16.gmra.mrb[0].mxu0 %v707
    %v746 = vpop.f32.mrb[0].mxu0
    %v747 = vadd.f32 %v687, %v746
    %v748 = vpop.f32.mrb[0].mxu0
    %v749 = vpop.f32.mrb[0].mxu0
    %v750 = vadd.f32 %v687, %v749
    %v751 = vpop.f32.mrb[0].mxu0
    %752 = vmatprep.mubr.bf16.mxu0 0
    %753 = vmatmul.mubr.bf16.gmra.mrb[0].mxu0 %v710
    %v754 = vpop.f32.mrb[0].mxu0
    %v755 = vadd.f32 %v687, %v754
    %v756 = vpop.f32.mrb[0].mxu0
    %v757 = vpop.f32.mrb[0].mxu0
    %v758 = vpop.f32.mrb[0].mxu0
    %759 = vdwg.mxu0
    %v760 = vmax.f32 %v747, 0.0
    %v761 = vmax.f32 %v750, 0.0
    %v762 = vmax.f32 %v755, 0.0
    %v763 = vlaneseq
    %v764 = vshrl.u32 %v763, 7
    %v765 = vsub.s32 0, %v764
    %v766 = vrot.slane %v682, %v765
    %v767 = vmul.f32 %v760, %v766
    %v768 = vmul.f32 %v761, %v766
    %v769 = vmul.f32 %v762, %v766
    %v770 = vlaneseq
    %v771 = vshrl.u32 %v770, 7
    %v772 = vsub.s32 0, %v771
    %v773 = vrot.slane %v683, %v772
    %v774 = vadd.f32 %v767, %v773
    %v775 = vadd.f32 %v768, %v773
    %v776 = vadd.f32 %v769, %v773
    %v777 = vpack.c.bf16 %v775, %v774
    %v778 = vpack.c.bf16 %v776, %v776
    %v779 = vld [vmem:[%s5] sm:$0xf]
    %v780 = vld [vmem:[%s5 + $0x4] sm:$0xf]
    %v781 = vld [vmem:[%s7] sm:$0x1]
    %v783 = vlaneseq
    %v784 = vshrl.u32 %v783, 7
    %v785 = vsub.s32 0, %v784
    %v786 = vrot.slane %v781, %v785
    %v790 = vunpack.c.l.b16 %v779
    %v791 = vunpack.c.l.b16 %v780
    %v792 = vpack.c.b16 %v791, %v790
    %v795 = vsel %vm260, %v777, 0
    %v798 = vsel %vm260, %v778, 0
    %800 = vmatprep.subr.bf16.mxu0 0
    %801 = vmatpush1.bf16.msra.mxu0 %v792
    %802 = vmatprep.subr.bf16.mxu0 0
    %803 = vmatpush1.bf16.msra.mxu0 0
    %804 = vmatprep.subr.bf16.mxu0 0
    %805 = vmatpush1.bf16.msra.mxu0 0
    %806 = vmatprep.subr.bf16.mxu0 0
    %807 = vmatpush1.bf16.msra.mxu0 0
    %808 = vmatprep.subr.bf16.mxu0 0
    %809 = vmatpush1.bf16.msra.mxu0 0
    %810 = vmatprep.subr.bf16.mxu0 0
    %811 = vmatpush1.bf16.msra.mxu0 0
    %812 = vmatprep.subr.bf16.mxu0 0
    %813 = vmatpush1.bf16.msra.mxu0 0
    %814 = vmatprep.subr.bf16.mxu0 0
    %815 = vmatpush1.bf16.msra.mxu0 0
    %816 = vmatprep.subr.bf16.mxu0 0
    %817 = vmatpush1.bf16.msra.mxu0 0
    %818 = vmatprep.subr.bf16.mxu0 0
    %819 = vmatpush1.bf16.msra.mxu0 0
    %820 = vmatprep.subr.bf16.mxu0 0
    %821 = vmatpush1.bf16.msra.mxu0 0
    %822 = vmatprep.subr.bf16.mxu0 0
    %823 = vmatpush1.bf16.msra.mxu0 0
    %824 = vmatprep.subr.bf16.mxu0 0
    %825 = vmatpush1.bf16.msra.mxu0 0
    %826 = vmatprep.subr.bf16.mxu0 0
    %827 = vmatpush1.bf16.msra.mxu0 0
    %828 = vmatprep.subr.bf16.mxu0 0
    %829 = vmatpush1.bf16.msra.mxu0 0
    %830 = vmatprep.subr.bf16.mxu0 0
    %831 = vmatpush1.bf16.msra.mxu0 0
    %832 = vmatprep.mubr.bf16.mxu0 0
    %833 = vmatmul.mubr.bf16.gmra.mrb[0].mxu0 %v795
    %v834 = vpop.f32.mrb[0].mxu0
    %v835 = vadd.f32 %v786, %v834
    %v836 = vpop.f32.mrb[0].mxu0
    %v837 = vpop.f32.mrb[0].mxu0
    %v838 = vadd.f32 %v786, %v837
    %v839 = vpop.f32.mrb[0].mxu0
    %840 = vmatprep.mubr.bf16.mxu0 0
    %841 = vmatmul.mubr.bf16.gmra.mrb[0].mxu0 %v798
    %v842 = vpop.f32.mrb[0].mxu0
    %v843 = vadd.f32 %v786, %v842
    %v844 = vpop.f32.mrb[0].mxu0
    %v845 = vpop.f32.mrb[0].mxu0
    %v846 = vpop.f32.mrb[0].mxu0
    %847 = vdwg.mxu0
    %v848 = vld [vmem:[%s6] sm:$0xf]
    %v849 = vld [vmem:[%s6 + $0x4] sm:$0xf]
    %v850 = vld [vmem:[%s6 + $0x8] sm:$0xf]
    %v851 = vld [vmem:[%s6 + $0xc] sm:$0xf]
    %v856 = vunpack.c.l.b16 %v848
    %v857 = vunpack.c.l.b16 %v849
    %v858 = vunpack.c.l.b16 %v850
    %v859 = vunpack.c.l.b16 %v851
    %v860 = vpack.c.b16 %v857, %v856
    %v861 = vpack.c.b16 %v859, %v858
    %v865 = vsel %vm272, 0, 0
    %867 = vmatprep.subr.bf16.mxu0 0
    %868 = vmatpush1.bf16.msra.mxu0 %v860
    %869 = vmatprep.subr.bf16.mxu0 0
    %870 = vmatpush1.bf16.msra.mxu0 %v861
    %871 = vmatprep.subr.bf16.mxu0 0
    %872 = vmatpush1.bf16.msra.mxu0 0
    %873 = vmatprep.subr.bf16.mxu0 0
    %874 = vmatpush1.bf16.msra.mxu0 0
    %875 = vmatprep.subr.bf16.mxu0 0
    %876 = vmatpush1.bf16.msra.mxu0 0
    %877 = vmatprep.subr.bf16.mxu0 0
    %878 = vmatpush1.bf16.msra.mxu0 0
    %879 = vmatprep.subr.bf16.mxu0 0
    %880 = vmatpush1.bf16.msra.mxu0 0
    %881 = vmatprep.subr.bf16.mxu0 0
    %882 = vmatpush1.bf16.msra.mxu0 0
    %883 = vmatprep.subr.bf16.mxu0 0
    %884 = vmatpush1.bf16.msra.mxu0 0
    %885 = vmatprep.subr.bf16.mxu0 0
    %886 = vmatpush1.bf16.msra.mxu0 0
    %887 = vmatprep.subr.bf16.mxu0 0
    %888 = vmatpush1.bf16.msra.mxu0 0
    %889 = vmatprep.subr.bf16.mxu0 0
    %890 = vmatpush1.bf16.msra.mxu0 0
    %891 = vmatprep.subr.bf16.mxu0 0
    %892 = vmatpush1.bf16.msra.mxu0 0
    %893 = vmatprep.subr.bf16.mxu0 0
    %894 = vmatpush1.bf16.msra.mxu0 0
    %895 = vmatprep.subr.bf16.mxu0 0
    %896 = vmatpush1.bf16.msra.mxu0 0
    %897 = vmatprep.subr.bf16.mxu0 0
    %898 = vmatpush1.bf16.msra.mxu0 0
    %899 = vmatprep.mubr.bf16.mxu0 0
    %900 = vmatmul.mubr.bf16.gmra.mrb[0].mxu0 %v865
    %v901 = vpop.f32.mrb[0].mxu0
    %v902 = vadd.f32 0.0, %v901
    %v903 = vpop.f32.mrb[0].mxu0
    %v904 = vpop.f32.mrb[0].mxu0
    %v905 = vpop.f32.mrb[0].mxu0
    %906 = vdwg.mxu0
    %v907 = vadd.f32 %v835, %v902
    %v908 = vxor.u32 %v907, 2147483648
    %v909 = vmul.f32 %v908, 1.442695
    %v910 = vpow.pop %v909
    %v911 = vadd.f32 %v910, 1.0
    %v912 = vrcp.pop %v911
    %v913 = vmul.f32 1.0, %v912
    %v914 = vtanh.pop %v907
    %v915 = vmul.f32 %v913, 0.0
    %917 = vrot.lane.b32.xlu0 %v914, 32
    %v918 = vpop.permute.xlu0 %917
    %v920 = vmul.f32 %v913, %v918
    %922 = vrot.lane.b32.xlu0 %v920, 32
    %v923 = vpop.permute.xlu0 %922
    %v925 = vadd.f32 %v915, %v923
    %v926 = vtanh.pop %v925
    %928 = vrot.lane.b32.xlu0 %v926, 32
    %v929 = vpop.permute.xlu0 %928
    %v931 = vmul.f32 %v913, %v929
    %933 = vrot.lane.b32.xlu0 %v931, 64
    %v934 = vpop.permute.xlu0 %933
    %vm936 = vcmask 254976
    %937 = vst.msk [vmem:[#allocation2] sm:$0x3] %vm936, %v934
    %v938 = vpack.c.bf16 %v931, %v931
    %940 = vrot.lane.b32.xlu0 %v938, 64
    %v941 = vpop.permute.xlu0 %940
    %v943 = vsel %vm272, %v941, 0
    %945 = vmatprep.subr.bf16.mxu0 0
    %946 = vmatpush1.bf16.msra.mxu0 %v860
    %947 = vmatprep.subr.bf16.mxu0 0
    %948 = vmatpush1.bf16.msra.mxu0 %v861
    %949 = vmatprep.subr.bf16.mxu0 0
    %950 = vmatpush1.bf16.msra.mxu0 0
    %951 = vmatprep.subr.bf16.mxu0 0
    %952 = vmatpush1.bf16.msra.mxu0 0
    %953 = vmatprep.subr.bf16.mxu0 0
    %954 = vmatpush1.bf16.msra.mxu0 0
    %955 = vmatprep.subr.bf16.mxu0 0
    %956 = vmatpush1.bf16.msra.mxu0 0
    %957 = vmatprep.subr.bf16.mxu0 0
    %958 = vmatpush1.bf16.msra.mxu0 0
    %959 = vmatprep.subr.bf16.mxu0 0
    %960 = vmatpush1.bf16.msra.mxu0 0
    %961 = vmatprep.subr.bf16.mxu0 0
    %962 = vmatpush1.bf16.msra.mxu0 0
    %963 = vmatprep.subr.bf16.mxu0 0
    %964 = vmatpush1.bf16.msra.mxu0 0
    %965 = vmatprep.subr.bf16.mxu0 0
    %966 = vmatpush1.bf16.msra.mxu0 0
    %967 = vmatprep.subr.bf16.mxu0 0
    %968 = vmatpush1.bf16.msra.mxu0 0
    %969 = vmatprep.subr.bf16.mxu0 0
    %970 = vmatpush1.bf16.msra.mxu0 0
    %971 = vmatprep.subr.bf16.mxu0 0
    %972 = vmatpush1.bf16.msra.mxu0 0
    %973 = vmatprep.subr.bf16.mxu0 0
    %974 = vmatpush1.bf16.msra.mxu0 0
    %975 = vmatprep.subr.bf16.mxu0 0
    %976 = vmatpush1.bf16.msra.mxu0 0
    %977 = vmatprep.mubr.bf16.mxu0 0
    %978 = vmatmul.mubr.bf16.gmra.mrb[0].mxu0 %v943
    %v979 = vpop.f32.mrb[0].mxu0
    %v980 = vadd.f32 0.0, %v979
    %v981 = vpop.f32.mrb[0].mxu0
    %v982 = vpop.f32.mrb[0].mxu0
    %v983 = vpop.f32.mrb[0].mxu0
    %984 = vdwg.mxu0
    %v986 = vrot.slane %v980, 6
    %v988 = vadd.f32 %v835, %v986
    %v989 = vxor.u32 %v988, 2147483648
    %v990 = vmul.f32 %v989, 1.442695
    %v991 = vpow.pop %v990
    %v992 = vadd.f32 %v991, 1.0
    %v993 = vrcp.pop %v992
    %v994 = vmul.f32 1.0, %v993
    %v995 = vtanh.pop %v988
    %v997 = vrot.slane %v925, 6
    %v999 = vmul.f32 %v994, %v997
    %1001 = vrot.lane.b32.xlu0 %v995, 32
    %v1002 = vpop.permute.xlu0 %1001
    %v1004 = vmul.f32 %v994, %v1002
    %1006 = vrot.lane.b32.xlu0 %v1004, 32
    %v1007 = vpop.permute.xlu0 %1006
    %v1009 = vadd.f32 %v999, %v1007
    %v1010 = vtanh.pop %v1009
    %1012 = vrot.lane.b32.xlu0 %v1010, 32
    %v1013 = vpop.permute.xlu0 %1012
    %v1015 = vmul.f32 %v994, %v1013
    %1017 = vrot.lane.b32.xlu0 %v1015, 64
    %v1018 = vpop.permute.xlu0 %1017
    %vm1020 = vcmask 257026
    %1021 = vst.msk [vmem:[#allocation2] sm:$0xc] %vm1020, %v1018
    %v1022 = vpack.c.bf16 %v1015, %v1015
    %v1024 = vrot.slane %v1022, 1
    %1025 = vrot.lane.b32.xlu0 %v1024, 64
    %v1026 = vpop.permute.xlu0 %1025
    %v1028 = vsel %vm272, %v1026, 0
    %1030 = vmatprep.subr.bf16.mxu0 0
    %1031 = vmatpush1.bf16.msra.mxu0 %v860
    %1032 = vmatprep.subr.bf16.mxu0 0
    %1033 = vmatpush1.bf16.msra.mxu0 %v861
    %1034 = vmatprep.subr.bf16.mxu0 0
    %1035 = vmatpush1.bf16.msra.mxu0 0
    %1036 = vmatprep.subr.bf16.mxu0 0
    %1037 = vmatpush1.bf16.msra.mxu0 0
    %1038 = vmatprep.subr.bf16.mxu0 0
    %1039 = vmatpush1.bf16.msra.mxu0 0
    %1040 = vmatprep.subr.bf16.mxu0 0
    %1041 = vmatpush1.bf16.msra.mxu0 0
    %1042 = vmatprep.subr.bf16.mxu0 0
    %1043 = vmatpush1.bf16.msra.mxu0 0
    %1044 = vmatprep.subr.bf16.mxu0 0
    %1045 = vmatpush1.bf16.msra.mxu0 0
    %1046 = vmatprep.subr.bf16.mxu0 0
    %1047 = vmatpush1.bf16.msra.mxu0 0
    %1048 = vmatprep.subr.bf16.mxu0 0
    %1049 = vmatpush1.bf16.msra.mxu0 0
    %1050 = vmatprep.subr.bf16.mxu0 0
    %1051 = vmatpush1.bf16.msra.mxu0 0
    %1052 = vmatprep.subr.bf16.mxu0 0
    %1053 = vmatpush1.bf16.msra.mxu0 0
    %1054 = vmatprep.subr.bf16.mxu0 0
    %1055 = vmatpush1.bf16.msra.mxu0 0
    %1056 = vmatprep.subr.bf16.mxu0 0
    %1057 = vmatpush1.bf16.msra.mxu0 0
    %1058 = vmatprep.subr.bf16.mxu0 0
    %1059 = vmatpush1.bf16.msra.mxu0 0
    %1060 = vmatprep.subr.bf16.mxu0 0
    %1061 = vmatpush1.bf16.msra.mxu0 0
    %1062 = vmatprep.mubr.bf16.mxu0 0
    %1063 = vmatmul.mubr.bf16.gmra.mrb[0].mxu0 %v1028
    %v1064 = vpop.f32.mrb[0].mxu0
    %v1065 = vadd.f32 0.0, %v1064
    %v1066 = vpop.f32.mrb[0].mxu0
    %v1067 = vpop.f32.mrb[0].mxu0
    %v1068 = vpop.f32.mrb[0].mxu0
    %1069 = vdwg.mxu0
    %v1071 = vrot.slane %v1065, 4
    %v1073 = vadd.f32 %v835, %v1071
    %v1074 = vxor.u32 %v1073, 2147483648
    %v1075 = vmul.f32 %v1074, 1.442695
    %v1076 = vpow.pop %v1075
    %v1077 = vadd.f32 %v1076, 1.0
    %v1078 = vrcp.pop %v1077
    %v1079 = vmul.f32 1.0, %v1078
    %v1080 = vtanh.pop %v1073
    %v1082 = vrot.slane %v1009, 6
    %v1084 = vmul.f32 %v1079, %v1082
    %1086 = vrot.lane.b32.xlu0 %v1080, 32
    %v1087 = vpop.permute.xlu0 %1086
    %v1089 = vmul.f32 %v1079, %v1087
    %1091 = vrot.lane.b32.xlu0 %v1089, 32
    %v1092 = vpop.permute.xlu0 %1091
    %v1094 = vadd.f32 %v1084, %v1092
    %v1095 = vtanh.pop %v1094
    %1097 = vrot.lane.b32.xlu0 %v1095, 32
    %v1098 = vpop.permute.xlu0 %1097
    %v1100 = vmul.f32 %v1079, %v1098
    %1102 = vrot.lane.b32.xlu0 %v1100, 64
    %v1103 = vpop.permute.xlu0 %1102
    %vm1105 = vcmask 259076
    %1106 = vst.msk [vmem:[#allocation2] sm:$0x30] %vm1105, %v1103
    %v1107 = vpack.c.bf16 %v1100, %v1100
    %v1109 = vrot.slane %v1107, 2
    %1110 = vrot.lane.b32.xlu0 %v1109, 64
    %v1111 = vpop.permute.xlu0 %1110
    %v1113 = vsel %vm272, %v1111, 0
    %1115 = vmatprep.subr.bf16.mxu0 0
    %1116 = vmatpush1.bf16.msra.mxu0 %v860
    %1117 = vmatprep.subr.bf16.mxu0 0
    %1118 = vmatpush1.bf16.msra.mxu0 %v861
    %1119 = vmatprep.subr.bf16.mxu0 0
    %1120 = vmatpush1.bf16.msra.mxu0 0
    %1121 = vmatprep.subr.bf16.mxu0 0
    %1122 = vmatpush1.bf16.msra.mxu0 0
    %1123 = vmatprep.subr.bf16.mxu0 0
    %1124 = vmatpush1.bf16.msra.mxu0 0
    %1125 = vmatprep.subr.bf16.mxu0 0
    %1126 = vmatpush1.bf16.msra.mxu0 0
    %1127 = vmatprep.subr.bf16.mxu0 0
    %1128 = vmatpush1.bf16.msra.mxu0 0
    %1129 = vmatprep.subr.bf16.mxu0 0
    %1130 = vmatpush1.bf16.msra.mxu0 0
    %1131 = vmatprep.subr.bf16.mxu0 0
    %1132 = vmatpush1.bf16.msra.mxu0 0
    %1133 = vmatprep.subr.bf16.mxu0 0
    %1134 = vmatpush1.bf16.msra.mxu0 0
    %1135 = vmatprep.subr.bf16.mxu0 0
    %1136 = vmatpush1.bf16.msra.mxu0 0
    %1137 = vmatprep.subr.bf16.mxu0 0
    %1138 = vmatpush1.bf16.msra.mxu0 0
    %1139 = vmatprep.subr.bf16.mxu0 0
    %1140 = vmatpush1.bf16.msra.mxu0 0
    %1141 = vmatprep.subr.bf16.mxu0 0
    %1142 = vmatpush1.bf16.msra.mxu0 0
    %1143 = vmatprep.subr.bf16.mxu0 0
    %1144 = vmatpush1.bf16.msra.mxu0 0
    %1145 = vmatprep.subr.bf16.mxu0 0
    %1146 = vmatpush1.bf16.msra.mxu0 0
    %1147 = vmatprep.mubr.bf16.mxu0 0
    %1148 = vmatmul.mubr.bf16.gmra.mrb[0].mxu0 %v1113
    %v1149 = vpop.f32.mrb[0].mxu0
    %v1150 = vadd.f32 0.0, %v1149
    %v1151 = vpop.f32.mrb[0].mxu0
    %v1152 = vpop.f32.mrb[0].mxu0
    %v1153 = vpop.f32.mrb[0].mxu0
    %1154 = vdwg.mxu0
    %v1156 = vrot.slane %v1150, 2
    %v1158 = vadd.f32 %v835, %v1156
    %v1159 = vxor.u32 %v1158, 2147483648
    %v1160 = vmul.f32 %v1159, 1.442695
    %v1161 = vpow.pop %v1160
    %v1162 = vadd.f32 %v1161, 1.0
    %v1163 = vrcp.pop %v1162
    %v1164 = vmul.f32 1.0, %v1163
    %v1165 = vtanh.pop %v1158
    %v1167 = vrot.slane %v1094, 6
    %v1169 = vmul.f32 %v1164, %v1167
    %1171 = vrot.lane.b32.xlu0 %v1165, 32
    %v1172 = vpop.permute.xlu0 %1171
    %v1174 = vmul.f32 %v1164, %v1172
    %1176 = vrot.lane.b32.xlu0 %v1174, 32
    %v1177 = vpop.permute.xlu0 %1176
    %v1179 = vadd.f32 %v1169, %v1177
    %v1180 = vtanh.pop %v1179
    %1182 = vrot.lane.b32.xlu0 %v1180, 32
    %v1183 = vpop.permute.xlu0 %1182
    %v1185 = vmul.f32 %v1164, %v1183
    %1187 = vrot.lane.b32.xlu0 %v1185, 64
    %v1188 = vpop.permute.xlu0 %1187
    %vm1190 = vcmask 261126
    %1191 = vst.msk [vmem:[#allocation2] sm:$0xc0] %vm1190, %v1188
    %v1192 = vpack.c.bf16 %v1185, %v1185
    %v1194 = vrot.slane %v1192, 3
    %1195 = vrot.lane.b32.xlu0 %v1194, 64
    %v1196 = vpop.permute.xlu0 %1195
    %v1198 = vsel %vm272, %v1196, 0
    %1200 = vmatprep.subr.bf16.mxu0 0
    %1201 = vmatpush1.bf16.msra.mxu0 %v860
    %1202 = vmatprep.subr.bf16.mxu0 0
    %1203 = vmatpush1.bf16.msra.mxu0 %v861
    %1204 = vmatprep.subr.bf16.mxu0 0
    %1205 = vmatpush1.bf16.msra.mxu0 0
    %1206 = vmatprep.subr.bf16.mxu0 0
    %1207 = vmatpush1.bf16.msra.mxu0 0
    %1208 = vmatprep.subr.bf16.mxu0 0
    %1209 = vmatpush1.bf16.msra.mxu0 0
    %1210 = vmatprep.subr.bf16.mxu0 0
    %1211 = vmatpush1.bf16.msra.mxu0 0
    %1212 = vmatprep.subr.bf16.mxu0 0
    %1213 = vmatpush1.bf16.msra.mxu0 0
    %1214 = vmatprep.subr.bf16.mxu0 0
    %1215 = vmatpush1.bf16.msra.mxu0 0
    %1216 = vmatprep.subr.bf16.mxu0 0
    %1217 = vmatpush1.bf16.msra.mxu0 0
    %1218 = vmatprep.subr.bf16.mxu0 0
    %1219 = vmatpush1.bf16.msra.mxu0 0
    %1220 = vmatprep.subr.bf16.mxu0 0
    %1221 = vmatpush1.bf16.msra.mxu0 0
    %1222 = vmatprep.subr.bf16.mxu0 0
    %1223 = vmatpush1.bf16.msra.mxu0 0
    %1224 = vmatprep.subr.bf16.mxu0 0
    %1225 = vmatpush1.bf16.msra.mxu0 0
    %1226 = vmatprep.subr.bf16.mxu0 0
    %1227 = vmatpush1.bf16.msra.mxu0 0
    %1228 = vmatprep.subr.bf16.mxu0 0
    %1229 = vmatpush1.bf16.msra.mxu0 0
    %1230 = vmatprep.subr.bf16.mxu0 0
    %1231 = vmatpush1.bf16.msra.mxu0 0
    %1232 = vmatprep.mubr.bf16.mxu0 0
    %1233 = vmatmul.mubr.bf16.gmra.mrb[0].mxu0 %v1198
    %v1234 = vpop.f32.mrb[0].mxu0
    %v1235 = vadd.f32 0.0, %v1234
    %v1236 = vpop.f32.mrb[0].mxu0
    %v1237 = vpop.f32.mrb[0].mxu0
    %v1238 = vpop.f32.mrb[0].mxu0
    %1239 = vdwg.mxu0
    %v1240 = vadd.f32 %v838, %v1235
    %v1241 = vxor.u32 %v1240, 2147483648
    %v1242 = vmul.f32 %v1241, 1.442695
    %v1243 = vpow.pop %v1242
    %v1244 = vadd.f32 %v1243, 1.0
    %v1245 = vrcp.pop %v1244
    %v1246 = vmul.f32 1.0, %v1245
    %v1247 = vtanh.pop %v1240
    %v1249 = vrot.slane %v1179, 6
    %v1251 = vmul.f32 %v1246, %v1249
    %1253 = vrot.lane.b32.xlu0 %v1247, 32
    %v1254 = vpop.permute.xlu0 %1253
    %v1256 = vmul.f32 %v1246, %v1254
    %1258 = vrot.lane.b32.xlu0 %v1256, 32
    %v1259 = vpop.permute.xlu0 %1258
    %v1261 = vadd.f32 %v1251, %v1259
    %v1262 = vtanh.pop %v1261
    %1264 = vrot.lane.b32.xlu0 %v1262, 32
    %v1265 = vpop.permute.xlu0 %1264
    %v1267 = vmul.f32 %v1246, %v1265
    %1269 = vrot.lane.b32.xlu0 %v1267, 64
    %v1270 = vpop.permute.xlu0 %1269
    %1272 = vst.msk [vmem:[#allocation2 + $0x8] sm:$0x3] %vm936, %v1270
    %v1273 = vpack.c.bf16 %v1267, %v1267
    %1275 = vrot.lane.b32.xlu0 %v1273, 64
    %v1276 = vpop.permute.xlu0 %1275
    %v1278 = vsel %vm272, %v1276, 0
    %1280 = vmatprep.subr.bf16.mxu0 0
    %1281 = vmatpush1.bf16.msra.mxu0 %v860
    %1282 = vmatprep.subr.bf16.mxu0 0
    %1283 = vmatpush1.bf16.msra.mxu0 %v861
    %1284 = vmatprep.subr.bf16.mxu0 0
    %1285 = vmatpush1.bf16.msra.mxu0 0
    %1286 = vmatprep.subr.bf16.mxu0 0
    %1287 = vmatpush1.bf16.msra.mxu0 0
    %1288 = vmatprep.subr.bf16.mxu0 0
    %1289 = vmatpush1.bf16.msra.mxu0 0
    %1290 = vmatprep.subr.bf16.mxu0 0
    %1291 = vmatpush1.bf16.msra.mxu0 0
    %1292 = vmatprep.subr.bf16.mxu0 0
    %1293 = vmatpush1.bf16.msra.mxu0 0
    %1294 = vmatprep.subr.bf16.mxu0 0
    %1295 = vmatpush1.bf16.msra.mxu0 0
    %1296 = vmatprep.subr.bf16.mxu0 0
    %1297 = vmatpush1.bf16.msra.mxu0 0
    %1298 = vmatprep.subr.bf16.mxu0 0
    %1299 = vmatpush1.bf16.msra.mxu0 0
    %1300 = vmatprep.subr.bf16.mxu0 0
    %1301 = vmatpush1.bf16.msra.mxu0 0
    %1302 = vmatprep.subr.bf16.mxu0 0
    %1303 = vmatpush1.bf16.msra.mxu0 0
    %1304 = vmatprep.subr.bf16.mxu0 0
    %1305 = vmatpush1.bf16.msra.mxu0 0
    %1306 = vmatprep.subr.bf16.mxu0 0
    %1307 = vmatpush1.bf16.msra.mxu0 0
    %1308 = vmatprep.subr.bf16.mxu0 0
    %1309 = vmatpush1.bf16.msra.mxu0 0
    %1310 = vmatprep.subr.bf16.mxu0 0
    %1311 = vmatpush1.bf16.msra.mxu0 0
    %1312 = vmatprep.mubr.bf16.mxu0 0
    %1313 = vmatmul.mubr.bf16.gmra.mrb[0].mxu0 %v1278
    %v1314 = vpop.f32.mrb[0].mxu0
    %v1315 = vadd.f32 0.0, %v1314
    %v1316 = vpop.f32.mrb[0].mxu0
    %v1317 = vpop.f32.mrb[0].mxu0
    %v1318 = vpop.f32.mrb[0].mxu0
    %1319 = vdwg.mxu0
    %v1321 = vrot.slane %v1315, 6
    %v1323 = vadd.f32 %v838, %v1321
    %v1324 = vxor.u32 %v1323, 2147483648
    %v1325 = vmul.f32 %v1324, 1.442695
    %v1326 = vpow.pop %v1325
    %v1327 = vadd.f32 %v1326, 1.0
    %v1328 = vrcp.pop %v1327
    %v1329 = vmul.f32 1.0, %v1328
    %v1330 = vtanh.pop %v1323
    %v1332 = vrot.slane %v1261, 6
    %v1334 = vmul.f32 %v1329, %v1332
    %1336 = vrot.lane.b32.xlu0 %v1330, 32
    %v1337 = vpop.permute.xlu0 %1336
    %v1339 = vmul.f32 %v1329, %v1337
    %1341 = vrot.lane.b32.xlu0 %v1339, 32
    %v1342 = vpop.permute.xlu0 %1341
    %v1344 = vadd.f32 %v1334, %v1342
    %v1345 = vtanh.pop %v1344
    %1347 = vrot.lane.b32.xlu0 %v1345, 32
    %v1348 = vpop.permute.xlu0 %1347
    %v1350 = vmul.f32 %v1329, %v1348
    %1352 = vrot.lane.b32.xlu0 %v1350, 64
    %v1353 = vpop.permute.xlu0 %1352
    %1355 = vst.msk [vmem:[#allocation2 + $0x8] sm:$0xc] %vm1020, %v1353
    %v1356 = vpack.c.bf16 %v1350, %v1350
    %v1358 = vrot.slane %v1356, 1
    %1359 = vrot.lane.b32.xlu0 %v1358, 64
    %v1360 = vpop.permute.xlu0 %1359
    %v1362 = vsel %vm272, %v1360, 0
    %1364 = vmatprep.subr.bf16.mxu0 0
    %1365 = vmatpush1.bf16.msra.mxu0 %v860
    %1366 = vmatprep.subr.bf16.mxu0 0
    %1367 = vmatpush1.bf16.msra.mxu0 %v861
    %1368 = vmatprep.subr.bf16.mxu0 0
    %1369 = vmatpush1.bf16.msra.mxu0 0
    %1370 = vmatprep.subr.bf16.mxu0 0
    %1371 = vmatpush1.bf16.msra.mxu0 0
    %1372 = vmatprep.subr.bf16.mxu0 0
    %1373 = vmatpush1.bf16.msra.mxu0 0
    %1374 = vmatprep.subr.bf16.mxu0 0
    %1375 = vmatpush1.bf16.msra.mxu0 0
    %1376 = vmatprep.subr.bf16.mxu0 0
    %1377 = vmatpush1.bf16.msra.mxu0 0
    %1378 = vmatprep.subr.bf16.mxu0 0
    %1379 = vmatpush1.bf16.msra.mxu0 0
    %1380 = vmatprep.subr.bf16.mxu0 0
    %1381 = vmatpush1.bf16.msra.mxu0 0
    %1382 = vmatprep.subr.bf16.mxu0 0
    %1383 = vmatpush1.bf16.msra.mxu0 0
    %1384 = vmatprep.subr.bf16.mxu0 0
    %1385 = vmatpush1.bf16.msra.mxu0 0
    %1386 = vmatprep.subr.bf16.mxu0 0
    %1387 = vmatpush1.bf16.msra.mxu0 0
    %1388 = vmatprep.subr.bf16.mxu0 0
    %1389 = vmatpush1.bf16.msra.mxu0 0
    %1390 = vmatprep.subr.bf16.mxu0 0
    %1391 = vmatpush1.bf16.msra.mxu0 0
    %1392 = vmatprep.subr.bf16.mxu0 0
    %1393 = vmatpush1.bf16.msra.mxu0 0
    %1394 = vmatprep.subr.bf16.mxu0 0
    %1395 = vmatpush1.bf16.msra.mxu0 0
    %1396 = vmatprep.mubr.bf16.mxu0 0
    %1397 = vmatmul.mubr.bf16.gmra.mrb[0].mxu0 %v1362
    %v1398 = vpop.f32.mrb[0].mxu0
    %v1399 = vadd.f32 0.0, %v1398
    %v1400 = vpop.f32.mrb[0].mxu0
    %v1401 = vpop.f32.mrb[0].mxu0
    %v1402 = vpop.f32.mrb[0].mxu0
    %1403 = vdwg.mxu0
    %v1405 = vrot.slane %v1399, 4
    %v1407 = vadd.f32 %v838, %v1405
    %v1408 = vxor.u32 %v1407, 2147483648
    %v1409 = vmul.f32 %v1408, 1.442695
    %v1410 = vpow.pop %v1409
    %v1411 = vadd.f32 %v1410, 1.0
    %v1412 = vrcp.pop %v1411
    %v1413 = vmul.f32 1.0, %v1412
    %v1414 = vtanh.pop %v1407
    %v1416 = vrot.slane %v1344, 6
    %v1418 = vmul.f32 %v1413, %v1416
    %1420 = vrot.lane.b32.xlu0 %v1414, 32
    %v1421 = vpop.permute.xlu0 %1420
    %v1423 = vmul.f32 %v1413, %v1421
    %1425 = vrot.lane.b32.xlu0 %v1423, 32
    %v1426 = vpop.permute.xlu0 %1425
    %v1428 = vadd.f32 %v1418, %v1426
    %v1429 = vtanh.pop %v1428
    %1431 = vrot.lane.b32.xlu0 %v1429, 32
    %v1432 = vpop.permute.xlu0 %1431
    %v1434 = vmul.f32 %v1413, %v1432
    %1436 = vrot.lane.b32.xlu0 %v1434, 64
    %v1437 = vpop.permute.xlu0 %1436
    %1439 = vst.msk [vmem:[#allocation2 + $0x8] sm:$0x30] %vm1105, %v1437
    %v1440 = vpack.c.bf16 %v1434, %v1434
    %v1442 = vrot.slane %v1440, 2
    %1443 = vrot.lane.b32.xlu0 %v1442, 64
    %v1444 = vpop.permute.xlu0 %1443
    %v1446 = vsel %vm272, %v1444, 0
    %1448 = vmatprep.subr.bf16.mxu0 0
    %1449 = vmatpush1.bf16.msra.mxu0 %v860
    %1450 = vmatprep.subr.bf16.mxu0 0
    %1451 = vmatpush1.bf16.msra.mxu0 %v861
    %1452 = vmatprep.subr.bf16.mxu0 0
    %1453 = vmatpush1.bf16.msra.mxu0 0
    %1454 = vmatprep.subr.bf16.mxu0 0
    %1455 = vmatpush1.bf16.msra.mxu0 0
    %1456 = vmatprep.subr.bf16.mxu0 0
    %1457 = vmatpush1.bf16.msra.mxu0 0
    %1458 = vmatprep.subr.bf16.mxu0 0
    %1459 = vmatpush1.bf16.msra.mxu0 0
    %1460 = vmatprep.subr.bf16.mxu0 0
    %1461 = vmatpush1.bf16.msra.mxu0 0
    %1462 = vmatprep.subr.bf16.mxu0 0
    %1463 = vmatpush1.bf16.msra.mxu0 0
    %1464 = vmatprep.subr.bf16.mxu0 0
    %1465 = vmatpush1.bf16.msra.mxu0 0
    %1466 = vmatprep.subr.bf16.mxu0 0
    %1467 = vmatpush1.bf16.msra.mxu0 0
    %1468 = vmatprep.subr.bf16.mxu0 0
    %1469 = vmatpush1.bf16.msra.mxu0 0
    %1470 = vmatprep.subr.bf16.mxu0 0
    %1471 = vmatpush1.bf16.msra.mxu0 0
    %1472 = vmatprep.subr.bf16.mxu0 0
    %1473 = vmatpush1.bf16.msra.mxu0 0
    %1474 = vmatprep.subr.bf16.mxu0 0
    %1475 = vmatpush1.bf16.msra.mxu0 0
    %1476 = vmatprep.subr.bf16.mxu0 0
    %1477 = vmatpush1.bf16.msra.mxu0 0
    %1478 = vmatprep.subr.bf16.mxu0 0
    %1479 = vmatpush1.bf16.msra.mxu0 0
    %1480 = vmatprep.mubr.bf16.mxu0 0
    %1481 = vmatmul.mubr.bf16.gmra.mrb[0].mxu0 %v1446
    %v1482 = vpop.f32.mrb[0].mxu0
    %v1483 = vadd.f32 0.0, %v1482
    %v1484 = vpop.f32.mrb[0].mxu0
    %v1485 = vpop.f32.mrb[0].mxu0
    %v1486 = vpop.f32.mrb[0].mxu0
    %1487 = vdwg.mxu0
    %v1489 = vrot.slane %v1483, 2
    %v1491 = vadd.f32 %v838, %v1489
    %v1492 = vxor.u32 %v1491, 2147483648
    %v1493 = vmul.f32 %v1492, 1.442695
    %v1494 = vpow.pop %v1493
    %v1495 = vadd.f32 %v1494, 1.0
    %v1496 = vrcp.pop %v1495
    %v1497 = vmul.f32 1.0, %v1496
    %v1498 = vtanh.pop %v1491
    %v1500 = vrot.slane %v1428, 6
    %v1502 = vmul.f32 %v1497, %v1500
    %1504 = vrot.lane.b32.xlu0 %v1498, 32
    %v1505 = vpop.permute.xlu0 %1504
    %v1507 = vmul.f32 %v1497, %v1505
    %1509 = vrot.lane.b32.xlu0 %v1507, 32
    %v1510 = vpop.permute.xlu0 %1509
    %v1512 = vadd.f32 %v1502, %v1510
    %v1513 = vtanh.pop %v1512
    %1515 = vrot.lane.b32.xlu0 %v1513, 32
    %v1516 = vpop.permute.xlu0 %1515
    %v1518 = vmul.f32 %v1497, %v1516
    %1520 = vrot.lane.b32.xlu0 %v1518, 64
    %v1521 = vpop.permute.xlu0 %1520
    %1523 = vst.msk [vmem:[#allocation2 + $0x8] sm:$0xc0] %vm1190, %v1521
    %v1524 = vpack.c.bf16 %v1518, %v1518
    %v1526 = vrot.slane %v1524, 3
    %1527 = vrot.lane.b32.xlu0 %v1526, 64
    %v1528 = vpop.permute.xlu0 %1527
    %v1530 = vsel %vm272, %v1528, 0
    %1532 = vmatprep.subr.bf16.mxu0 0
    %1533 = vmatpush1.bf16.msra.mxu0 %v860
    %1534 = vmatprep.subr.bf16.mxu0 0
    %1535 = vmatpush1.bf16.msra.mxu0 %v861
    %1536 = vmatprep.subr.bf16.mxu0 0
    %1537 = vmatpush1.bf16.msra.mxu0 0
    %1538 = vmatprep.subr.bf16.mxu0 0
    %1539 = vmatpush1.bf16.msra.mxu0 0
    %1540 = vmatprep.subr.bf16.mxu0 0
    %1541 = vmatpush1.bf16.msra.mxu0 0
    %1542 = vmatprep.subr.bf16.mxu0 0
    %1543 = vmatpush1.bf16.msra.mxu0 0
    %1544 = vmatprep.subr.bf16.mxu0 0
    %1545 = vmatpush1.bf16.msra.mxu0 0
    %1546 = vmatprep.subr.bf16.mxu0 0
    %1547 = vmatpush1.bf16.msra.mxu0 0
    %1548 = vmatprep.subr.bf16.mxu0 0
    %1549 = vmatpush1.bf16.msra.mxu0 0
    %1550 = vmatprep.subr.bf16.mxu0 0
    %1551 = vmatpush1.bf16.msra.mxu0 0
    %1552 = vmatprep.subr.bf16.mxu0 0
    %1553 = vmatpush1.bf16.msra.mxu0 0
    %1554 = vmatprep.subr.bf16.mxu0 0
    %1555 = vmatpush1.bf16.msra.mxu0 0
    %1556 = vmatprep.subr.bf16.mxu0 0
    %1557 = vmatpush1.bf16.msra.mxu0 0
    %1558 = vmatprep.subr.bf16.mxu0 0
    %1559 = vmatpush1.bf16.msra.mxu0 0
    %1560 = vmatprep.subr.bf16.mxu0 0
    %1561 = vmatpush1.bf16.msra.mxu0 0
    %1562 = vmatprep.subr.bf16.mxu0 0
    %1563 = vmatpush1.bf16.msra.mxu0 0
    %1564 = vmatprep.mubr.bf16.mxu0 0
    %1565 = vmatmul.mubr.bf16.gmra.mrb[0].mxu0 %v1530
    %v1566 = vpop.f32.mrb[0].mxu0
    %v1567 = vadd.f32 0.0, %v1566
    %v1568 = vpop.f32.mrb[0].mxu0
    %v1569 = vpop.f32.mrb[0].mxu0
    %v1570 = vpop.f32.mrb[0].mxu0
    %1571 = vdwg.mxu0
    %v1572 = vadd.f32 %v843, %v1567
    %v1573 = vxor.u32 %v1572, 2147483648
    %v1574 = vmul.f32 %v1573, 1.442695
    %v1575 = vpow.pop %v1574
    %v1576 = vadd.f32 %v1575, 1.0
    %v1577 = vrcp.pop %v1576
    %v1578 = vmul.f32 1.0, %v1577
    %v1579 = vtanh.pop %v1572
    %v1581 = vrot.slane %v1512, 6
    %v1583 = vmul.f32 %v1578, %v1581
    %1585 = vrot.lane.b32.xlu0 %v1579, 32
    %v1586 = vpop.permute.xlu0 %1585
    %v1588 = vmul.f32 %v1578, %v1586
    %1590 = vrot.lane.b32.xlu0 %v1588, 32
    %v1591 = vpop.permute.xlu0 %1590
    %v1593 = vadd.f32 %v1583, %v1591
    %v1594 = vtanh.pop %v1593
    %1596 = vrot.lane.b32.xlu0 %v1594, 32
    %v1597 = vpop.permute.xlu0 %1596
    %v1599 = vmul.f32 %v1578, %v1597
    %1601 = vrot.lane.b32.xlu0 %v1599, 64
    %v1602 = vpop.permute.xlu0 %1601
    %1604 = vst.msk [vmem:[#allocation2 + $0x10] sm:$0x3] %vm936, %v1602
    %v1605 = vpack.c.bf16 %v1599, %v1599
    %1607 = vrot.lane.b32.xlu0 %v1605, 64
    %v1608 = vpop.permute.xlu0 %1607
    %v1610 = vsel %vm272, %v1608, 0
    %1612 = vmatprep.subr.bf16.mxu0 0
    %1613 = vmatpush1.bf16.msra.mxu0 %v860
    %1614 = vmatprep.subr.bf16.mxu0 0
    %1615 = vmatpush1.bf16.msra.mxu0 %v861
    %1616 = vmatprep.subr.bf16.mxu0 0
    %1617 = vmatpush1.bf16.msra.mxu0 0
    %1618 = vmatprep.subr.bf16.mxu0 0
    %1619 = vmatpush1.bf16.msra.mxu0 0
    %1620 = vmatprep.subr.bf16.mxu0 0
    %1621 = vmatpush1.bf16.msra.mxu0 0
    %1622 = vmatprep.subr.bf16.mxu0 0
    %1623 = vmatpush1.bf16.msra.mxu0 0
    %1624 = vmatprep.subr.bf16.mxu0 0
    %1625 = vmatpush1.bf16.msra.mxu0 0
    %1626 = vmatprep.subr.bf16.mxu0 0
    %1627 = vmatpush1.bf16.msra.mxu0 0
    %1628 = vmatprep.subr.bf16.mxu0 0
    %1629 = vmatpush1.bf16.msra.mxu0 0
    %1630 = vmatprep.subr.bf16.mxu0 0
    %1631 = vmatpush1.bf16.msra.mxu0 0
    %1632 = vmatprep.subr.bf16.mxu0 0
    %1633 = vmatpush1.bf16.msra.mxu0 0
    %1634 = vmatprep.subr.bf16.mxu0 0
    %1635 = vmatpush1.bf16.msra.mxu0 0
    %1636 = vmatprep.subr.bf16.mxu0 0
    %1637 = vmatpush1.bf16.msra.mxu0 0
    %1638 = vmatprep.subr.bf16.mxu0 0
    %1639 = vmatpush1.bf16.msra.mxu0 0
    %1640 = vmatprep.subr.bf16.mxu0 0
    %1641 = vmatpush1.bf16.msra.mxu0 0
    %1642 = vmatprep.subr.bf16.mxu0 0
    %1643 = vmatpush1.bf16.msra.mxu0 0
    %1644 = vmatprep.mubr.bf16.mxu0 0
    %1645 = vmatmul.mubr.bf16.gmra.mrb[0].mxu0 %v1610
    %v1646 = vpop.f32.mrb[0].mxu0
    %v1647 = vadd.f32 0.0, %v1646
    %v1648 = vpop.f32.mrb[0].mxu0
    %v1649 = vpop.f32.mrb[0].mxu0
    %v1650 = vpop.f32.mrb[0].mxu0
    %1651 = vdwg.mxu0
    %v1653 = vrot.slane %v1647, 6
    %v1655 = vadd.f32 %v843, %v1653
    %v1656 = vxor.u32 %v1655, 2147483648
    %v1657 = vmul.f32 %v1656, 1.442695
    %v1658 = vpow.pop %v1657
    %v1659 = vadd.f32 %v1658, 1.0
    %v1660 = vrcp.pop %v1659
    %v1661 = vmul.f32 1.0, %v1660
    %v1662 = vtanh.pop %v1655
    %v1664 = vrot.slane %v1593, 6
    %v1666 = vmul.f32 %v1661, %v1664
    %1668 = vrot.lane.b32.xlu0 %v1662, 32
    %v1669 = vpop.permute.xlu0 %1668
    %v1671 = vmul.f32 %v1661, %v1669
    %1673 = vrot.lane.b32.xlu0 %v1671, 32
    %v1674 = vpop.permute.xlu0 %1673
    %v1676 = vadd.f32 %v1666, %v1674
    %v1677 = vtanh.pop %v1676
    %1679 = vrot.lane.b32.xlu0 %v1677, 32
    %v1680 = vpop.permute.xlu0 %1679
    %v1682 = vmul.f32 %v1661, %v1680
    %1684 = vrot.lane.b32.xlu0 %v1682, 64
    %v1685 = vpop.permute.xlu0 %1684
    %1687 = vst.msk [vmem:[#allocation2 + $0x10] sm:$0xc] %vm1020, %v1685
    %v1688 = vpack.c.bf16 %v1682, %v1682
    %v1690 = vrot.slane %v1688, 1
    %1691 = vrot.lane.b32.xlu0 %v1690, 64
    %v1692 = vpop.permute.xlu0 %1691
    %v1694 = vsel %vm272, %v1692, 0
    %1696 = vmatprep.subr.bf16.mxu0 0
    %1697 = vmatpush1.bf16.msra.mxu0 %v860
    %1698 = vmatprep.subr.bf16.mxu0 0
    %1699 = vmatpush1.bf16.msra.mxu0 %v861
    %1700 = vmatprep.subr.bf16.mxu0 0
    %1701 = vmatpush1.bf16.msra.mxu0 0
    %1702 = vmatprep.subr.bf16.mxu0 0
    %1703 = vmatpush1.bf16.msra.mxu0 0
    %1704 = vmatprep.subr.bf16.mxu0 0
    %1705 = vmatpush1.bf16.msra.mxu0 0
    %1706 = vmatprep.subr.bf16.mxu0 0
    %1707 = vmatpush1.bf16.msra.mxu0 0
    %1708 = vmatprep.subr.bf16.mxu0 0
    %1709 = vmatpush1.bf16.msra.mxu0 0
    %1710 = vmatprep.subr.bf16.mxu0 0
    %1711 = vmatpush1.bf16.msra.mxu0 0
    %1712 = vmatprep.subr.bf16.mxu0 0
    %1713 = vmatpush1.bf16.msra.mxu0 0
    %1714 = vmatprep.subr.bf16.mxu0 0
    %1715 = vmatpush1.bf16.msra.mxu0 0
    %1716 = vmatprep.subr.bf16.mxu0 0
    %1717 = vmatpush1.bf16.msra.mxu0 0
    %1718 = vmatprep.subr.bf16.mxu0 0
    %1719 = vmatpush1.bf16.msra.mxu0 0
    %1720 = vmatprep.subr.bf16.mxu0 0
    %1721 = vmatpush1.bf16.msra.mxu0 0
    %1722 = vmatprep.subr.bf16.mxu0 0
    %1723 = vmatpush1.bf16.msra.mxu0 0
    %1724 = vmatprep.subr.bf16.mxu0 0
    %1725 = vmatpush1.bf16.msra.mxu0 0
    %1726 = vmatprep.subr.bf16.mxu0 0
    %1727 = vmatpush1.bf16.msra.mxu0 0
    %1728 = vmatprep.mubr.bf16.mxu0 0
    %1729 = vmatmul.mubr.bf16.gmra.mrb[0].mxu0 %v1694
    %v1730 = vpop.f32.mrb[0].mxu0
    %v1731 = vadd.f32 0.0, %v1730
    %v1732 = vpop.f32.mrb[0].mxu0
    %v1733 = vpop.f32.mrb[0].mxu0
    %v1734 = vpop.f32.mrb[0].mxu0
    %1735 = vdwg.mxu0
    %v1737 = vrot.slane %v1731, 4
    %v1739 = vadd.f32 %v843, %v1737
    %v1740 = vxor.u32 %v1739, 2147483648
    %v1741 = vmul.f32 %v1740, 1.442695
    %v1742 = vpow.pop %v1741
    %v1743 = vadd.f32 %v1742, 1.0
    %v1744 = vrcp.pop %v1743
    %v1745 = vmul.f32 1.0, %v1744
    %v1746 = vtanh.pop %v1739
    %v1748 = vrot.slane %v1676, 6
    %v1750 = vmul.f32 %v1745, %v1748
    %1752 = vrot.lane.b32.xlu0 %v1746, 32
    %v1753 = vpop.permute.xlu0 %1752
    %v1755 = vmul.f32 %v1745, %v1753
    %1757 = vrot.lane.b32.xlu0 %v1755, 32
    %v1758 = vpop.permute.xlu0 %1757
    %v1760 = vadd.f32 %v1750, %v1758
    %v1761 = vtanh.pop %v1760
    %1763 = vrot.lane.b32.xlu0 %v1761, 32
    %v1764 = vpop.permute.xlu0 %1763
    %v1766 = vmul.f32 %v1745, %v1764
    %1768 = vrot.lane.b32.xlu0 %v1766, 64
    %v1769 = vpop.permute.xlu0 %1768
    %1771 = vst.msk [vmem:[#allocation2 + $0x10] sm:$0x30] %vm1105, %v1769
    %v1772 = vpack.c.bf16 %v1766, %v1766
    %v1774 = vrot.slane %v1772, 2
    %1775 = vrot.lane.b32.xlu0 %v1774, 64
    %v1776 = vpop.permute.xlu0 %1775
    %v1778 = vsel %vm272, %v1776, 0
    %1780 = vmatprep.subr.bf16.mxu0 0
    %1781 = vmatpush1.bf16.msra.mxu0 %v860
    %1782 = vmatprep.subr.bf16.mxu0 0
    %1783 = vmatpush1.bf16.msra.mxu0 %v861
    %1784 = vmatprep.subr.bf16.mxu0 0
    %1785 = vmatpush1.bf16.msra.mxu0 0
    %1786 = vmatprep.subr.bf16.mxu0 0
    %1787 = vmatpush1.bf16.msra.mxu0 0
    %1788 = vmatprep.subr.bf16.mxu0 0
    %1789 = vmatpush1.bf16.msra.mxu0 0
    %1790 = vmatprep.subr.bf16.mxu0 0
    %1791 = vmatpush1.bf16.msra.mxu0 0
    %1792 = vmatprep.subr.bf16.mxu0 0
    %1793 = vmatpush1.bf16.msra.mxu0 0
    %1794 = vmatprep.subr.bf16.mxu0 0
    %1795 = vmatpush1.bf16.msra.mxu0 0
    %1796 = vmatprep.subr.bf16.mxu0 0
    %1797 = vmatpush1.bf16.msra.mxu0 0
    %1798 = vmatprep.subr.bf16.mxu0 0
    %1799 = vmatpush1.bf16.msra.mxu0 0
    %1800 = vmatprep.subr.bf16.mxu0 0
    %1801 = vmatpush1.bf16.msra.mxu0 0
    %1802 = vmatprep.subr.bf16.mxu0 0
    %1803 = vmatpush1.bf16.msra.mxu0 0
    %1804 = vmatprep.subr.bf16.mxu0 0
    %1805 = vmatpush1.bf16.msra.mxu0 0
    %1806 = vmatprep.subr.bf16.mxu0 0
    %1807 = vmatpush1.bf16.msra.mxu0 0
    %1808 = vmatprep.subr.bf16.mxu0 0
    %1809 = vmatpush1.bf16.msra.mxu0 0
    %1810 = vmatprep.subr.bf16.mxu0 0
    %1811 = vmatpush1.bf16.msra.mxu0 0
    %1812 = vmatprep.mubr.bf16.mxu0 0
    %1813 = vmatmul.mubr.bf16.gmra.mrb[0].mxu0 %v1778
    %v1814 = vpop.f32.mrb[0].mxu0
    %v1815 = vadd.f32 0.0, %v1814
    %v1816 = vpop.f32.mrb[0].mxu0
    %v1817 = vpop.f32.mrb[0].mxu0
    %v1818 = vpop.f32.mrb[0].mxu0
    %1819 = vdwg.mxu0
    %v1821 = vrot.slane %v1815, 2
    %v1823 = vadd.f32 %v843, %v1821
    %v1824 = vxor.u32 %v1823, 2147483648
    %v1825 = vmul.f32 %v1824, 1.442695
    %v1826 = vpow.pop %v1825
    %v1827 = vadd.f32 %v1826, 1.0
    %v1828 = vrcp.pop %v1827
    %v1829 = vmul.f32 1.0, %v1828
    %v1830 = vtanh.pop %v1823
    %v1832 = vrot.slane %v1760, 6
    %v1834 = vmul.f32 %v1829, %v1832
    %1836 = vrot.lane.b32.xlu0 %v1830, 32
    %v1837 = vpop.permute.xlu0 %1836
    %v1839 = vmul.f32 %v1829, %v1837
    %1841 = vrot.lane.b32.xlu0 %v1839, 32
    %v1842 = vpop.permute.xlu0 %1841
    %v1844 = vadd.f32 %v1834, %v1842
    %v1845 = vtanh.pop %v1844
    %1847 = vrot.lane.b32.xlu0 %v1845, 32
    %v1848 = vpop.permute.xlu0 %1847
    %v1850 = vmul.f32 %v1829, %v1848
    %1852 = vrot.lane.b32.xlu0 %v1850, 64
    %v1853 = vpop.permute.xlu0 %1852
    %1855 = vst.msk [vmem:[#allocation2 + $0x10] sm:$0xc0] %vm1190, %v1853
    %v1856 = vld [vmem:[#allocation2] sm:$0xff]
    %v1857 = vld [vmem:[#allocation2 + $0x8] sm:$0xff]
    %v1858 = vld [vmem:[#allocation2 + $0x10] sm:$0xff]
    %v1859 = vpack.c.bf16 %v1857, %v1856
    %v1860 = vpack.c.bf16 %v1858, %v1858
    %v1861 = vld [vmem:[%s8] sm:$0xf]
    %v1862 = vld [vmem:[%s8 + $0x4] sm:$0xf]
    %v1863 = vld [vmem:[%s8 + $0x8] sm:$0xf]
    %v1864 = vld [vmem:[%s8 + $0xc] sm:$0xf]
    %v1865 = vld [vmem:[#allocation5] sm:$0x1]
    %v1867 = vlaneseq
    %v1868 = vshrl.u32 %v1867, 7
    %v1869 = vsub.s32 0, %v1868
    %v1870 = vrot.slane %v1865, %v1869
    %v1876 = vunpack.c.l.b16 %v1861
    %v1877 = vunpack.c.l.b16 %v1862
    %v1878 = vunpack.c.l.b16 %v1863
    %v1879 = vunpack.c.l.b16 %v1864
    %v1880 = vpack.c.b16 %v1877, %v1876
    %v1881 = vpack.c.b16 %v1879, %v1878
    %v1885 = vsel %vm272, %v1859, 0
    %v1888 = vsel %vm272, %v1860, 0
    %1890 = vmatprep.subr.bf16.mxu0 0
    %1891 = vmatpush1.bf16.msra.mxu0 %v1880
    %1892 = vmatprep.subr.bf16.mxu0 0
    %1893 = vmatpush1.bf16.msra.mxu0 %v1881
    %1894 = vmatprep.subr.bf16.mxu0 0
    %1895 = vmatpush1.bf16.msra.mxu0 0
    %1896 = vmatprep.subr.bf16.mxu0 0
    %1897 = vmatpush1.bf16.msra.mxu0 0
    %1898 = vmatprep.subr.bf16.mxu0 0
    %1899 = vmatpush1.bf16.msra.mxu0 0
    %1900 = vmatprep.subr.bf16.mxu0 0
    %1901 = vmatpush1.bf16.msra.mxu0 0
    %1902 = vmatprep.subr.bf16.mxu0 0
    %1903 = vmatpush1.bf16.msra.mxu0 0
    %1904 = vmatprep.subr.bf16.mxu0 0
    %1905 = vmatpush1.bf16.msra.mxu0 0
    %1906 = vmatprep.subr.bf16.mxu0 0
    %1907 = vmatpush1.bf16.msra.mxu0 0
    %1908 = vmatprep.subr.bf16.mxu0 0
    %1909 = vmatpush1.bf16.msra.mxu0 0
    %1910 = vmatprep.subr.bf16.mxu0 0
    %1911 = vmatpush1.bf16.msra.mxu0 0
    %1912 = vmatprep.subr.bf16.mxu0 0
    %1913 = vmatpush1.bf16.msra.mxu0 0
    %1914 = vmatprep.subr.bf16.mxu0 0
    %1915 = vmatpush1.bf16.msra.mxu0 0
    %1916 = vmatprep.subr.bf16.mxu0 0
    %1917 = vmatpush1.bf16.msra.mxu0 0
    %1918 = vmatprep.subr.bf16.mxu0 0
    %1919 = vmatpush1.bf16.msra.mxu0 0
    %1920 = vmatprep.subr.bf16.mxu0 0
    %1921 = vmatpush1.bf16.msra.mxu0 0
    %1922 = vmatprep.mubr.bf16.mxu0 0
    %1923 = vmatmul.mubr.bf16.gmra.mrb[0].mxu0 %v1885
    %v1924 = vpop.f32.mrb[0].mxu0
    %v1925 = vadd.f32 %v1870, %v1924
    %v1926 = vpop.f32.mrb[0].mxu0
    %v1927 = vpop.f32.mrb[0].mxu0
    %v1928 = vadd.f32 %v1870, %v1927
    %v1929 = vpop.f32.mrb[0].mxu0
    %1930 = vmatprep.mubr.bf16.mxu0 0
    %1931 = vmatmul.mubr.bf16.gmra.mrb[0].mxu0 %v1888
    %v1932 = vpop.f32.mrb[0].mxu0
    %v1933 = vadd.f32 %v1870, %v1932
    %v1934 = vpop.f32.mrb[0].mxu0
    %v1935 = vpop.f32.mrb[0].mxu0
    %v1936 = vpop.f32.mrb[0].mxu0
    %1937 = vdwg.mxu0
    %v1938 = vtanh.pop %v1925
    %v1939 = vtanh.pop %v1928
    %v1940 = vtanh.pop %v1933
    %v1941 = vpack.c.bf16 %v1939, %v1938
    %v1942 = vpack.c.bf16 %v1940, %v1940
    %v1943 = vld [vmem:[%s10] sm:$0xf]
    %v1944 = vld [vmem:[%s10 + $0x4] sm:$0xf]
    %v1945 = vld [vmem:[%s10 + $0x8] sm:$0xf]
    %v1946 = vld [vmem:[%s10 + $0xc] sm:$0xf]
    %v1951 = vunpack.c.l.b16 %v1943
    %v1952 = vunpack.c.l.b16 %v1944
    %v1953 = vunpack.c.l.b16 %v1945
    %v1954 = vunpack.c.l.b16 %v1946
    %v1955 = vpack.c.b16 %v1952, %v1951
    %v1956 = vpack.c.b16 %v1954, %v1953
    %v1960 = vsel %vm272, %v1941, 0
    %v1963 = vsel %vm272, %v1942, 0
    %1965 = vmatprep.subr.bf16.mxu0 0
    %1966 = vmatpush1.bf16.msra.mxu0 %v1955
    %1967 = vmatprep.subr.bf16.mxu0 0
    %1968 = vmatpush1.bf16.msra.mxu0 %v1956
    %1969 = vmatprep.subr.bf16.mxu0 0
    %1970 = vmatpush1.bf16.msra.mxu0 0
    %1971 = vmatprep.subr.bf16.mxu0 0
    %1972 = vmatpush1.bf16.msra.mxu0 0
    %1973 = vmatprep.subr.bf16.mxu0 0
    %1974 = vmatpush1.bf16.msra.mxu0 0
    %1975 = vmatprep.subr.bf16.mxu0 0
    %1976 = vmatpush1.bf16.msra.mxu0 0
    %1977 = vmatprep.subr.bf16.mxu0 0
    %1978 = vmatpush1.bf16.msra.mxu0 0
    %1979 = vmatprep.subr.bf16.mxu0 0
    %1980 = vmatpush1.bf16.msra.mxu0 0
    %1981 = vmatprep.subr.bf16.mxu0 0
    %1982 = vmatpush1.bf16.msra.mxu0 0
    %1983 = vmatprep.subr.bf16.mxu0 0
    %1984 = vmatpush1.bf16.msra.mxu0 0
    %1985 = vmatprep.subr.bf16.mxu0 0
    %1986 = vmatpush1.bf16.msra.mxu0 0
    %1987 = vmatprep.subr.bf16.mxu0 0
    %1988 = vmatpush1.bf16.msra.mxu0 0
    %1989 = vmatprep.subr.bf16.mxu0 0
    %1990 = vmatpush1.bf16.msra.mxu0 0
    %1991 = vmatprep.subr.bf16.mxu0 0
    %1992 = vmatpush1.bf16.msra.mxu0 0
    %1993 = vmatprep.subr.bf16.mxu0 0
    %1994 = vmatpush1.bf16.msra.mxu0 0
    %1995 = vmatprep.subr.bf16.mxu0 0
    %1996 = vmatpush1.bf16.msra.mxu0 0
    %1997 = vmatprep.mubr.bf16.mxu0 0
    %1998 = vmatmul.mubr.bf16.gmra.mrb[0].mxu0 %v1960
    %v1999 = vpop.f32.mrb[0].mxu0
    %v2000 = vadd.f32 0.0, %v1999
    %v2001 = vpop.f32.mrb[0].mxu0
    %v2002 = vpop.f32.mrb[0].mxu0
    %v2003 = vadd.f32 0.0, %v2002
    %v2004 = vpop.f32.mrb[0].mxu0
    %2005 = vmatprep.mubr.bf16.mxu0 0
    %2006 = vmatmul.mubr.bf16.gmra.mrb[0].mxu0 %v1963
    %v2007 = vpop.f32.mrb[0].mxu0
    %v2008 = vadd.f32 0.0, %v2007
    %v2009 = vpop.f32.mrb[0].mxu0
    %v2010 = vpop.f32.mrb[0].mxu0
    %v2011 = vpop.f32.mrb[0].mxu0
    %2012 = vdwg.mxu0
    %vm2013 = vcmask 15360
    %v2014 = vsel %vm2013, %v2000, -inf
    %2015 = vmax.xlane.f32.xlu0 %v2014
    %v2016 = vpop.xlane.xlu0 %2015
    %v2017 = vsel %vm2013, %v2003, -inf
    %2018 = vmax.xlane.f32.xlu0 %v2017
    %v2019 = vpop.xlane.xlu0 %2018
    %v2020 = vsel %vm2013, %v2008, -inf
    %2021 = vmax.xlane.f32.xlu0 %v2020
    %v2022 = vpop.xlane.xlu0 %2021
    %v2023 = vmax.f32 %v2016, %v2019
    %v2024 = vmax.f32 %v2023, %v2022
    %v2025 = vrot.slane %v2024, 4
    %v2026 = vmax.f32 %v2024, %v2025
    %v2027 = vrot.slane %v2026, 2
    %v2028 = vmax.f32 %v2026, %v2027
    %v2029 = vrot.slane %v2028, 1
    %v2030 = vmax.f32 %v2028, %v2029
    %v2031 = vsub.f32 %v2000, %v2030
    %v2032 = vsub.f32 %v2003, %v2030
    %v2033 = vsub.f32 %v2008, %v2030
    %v2034 = vmul.f32 %v2031, 1.442695
    %v2035 = vpow.pop %v2034
    %v2036 = vmul.f32 %v2032, 1.442695
    %v2037 = vpow.pop %v2036
    %v2038 = vmul.f32 %v2033, 1.442695
    %v2039 = vpow.pop %v2038
    %2041 = vset.pattern.permute.xlu0 0
    %2042 = vperm.xlu0 %2041, %v2035
    %v2043 = vpop.permute.xlu0 %2042
    %2046 = vset.pattern.permute.xlu0 0
    %2047 = vperm.xlu0 %2046, %v2037
    %v2048 = vpop.permute.xlu0 %2047
    %2051 = vset.pattern.permute.xlu0 0
    %2052 = vperm.xlu0 %2051, %v2039
    %v2053 = vpop.permute.xlu0 %2052
    %2055 = vset.pattern.permute.xlu0 1
    %2056 = vperm.xlu0 %2055, %v2035
    %v2057 = vpop.permute.xlu0 %2056
    %2059 = vset.pattern.permute.xlu0 1
    %2060 = vperm.xlu0 %2059, %v2037
    %v2061 = vpop.permute.xlu0 %2060
    %2063 = vset.pattern.permute.xlu0 1
    %2064 = vperm.xlu0 %2063, %v2039
    %v2065 = vpop.permute.xlu0 %2064
    %v2067 = vsel %vm260, %v2043, %v2057
    %v2068 = vsel %vm260, %v2048, %v2061
    %v2069 = vsel %vm260, %v2053, %v2065
    %v2070 = vld [vmem:[%s11] sm:$0x1]
    %v2071 = vmul.f32 %v2067, %v1856
    %v2072 = vmul.f32 %v2068, %v1857
    %v2073 = vmul.f32 %v2069, %v1858
    %v2074 = vpack.c.bf16 %v2072, %v2071
    %v2075 = vpack.c.bf16 %v2073, %v2073
    %v2077 = vsel %vm266, %v2070, 0
    %v2080 = vsel %vm152, %v2075, 0
    %2082 = vmatprep.subr.bf16.mxu0 0
    %2083 = vmatpush1.bf16.msra.mxu0 %v2074
    %2084 = vmatprep.subr.bf16.mxu0 0
    %2085 = vmatpush1.bf16.msra.mxu0 %v2080
    %2086 = vmatprep.subr.bf16.mxu0 0
    %2087 = vmatpush1.bf16.msra.mxu0 0
    %2088 = vmatprep.subr.bf16.mxu0 0
    %2089 = vmatpush1.bf16.msra.mxu0 0
    %2090 = vmatprep.subr.bf16.mxu0 0
    %2091 = vmatpush1.bf16.msra.mxu0 0
    %2092 = vmatprep.subr.bf16.mxu0 0
    %2093 = vmatpush1.bf16.msra.mxu0 0
    %2094 = vmatprep.subr.bf16.mxu0 0
    %2095 = vmatpush1.bf16.msra.mxu0 0
    %2096 = vmatprep.subr.bf16.mxu0 0
    %2097 = vmatpush1.bf16.msra.mxu0 0
    %2098 = vmatprep.subr.bf16.mxu0 0
    %2099 = vmatpush1.bf16.msra.mxu0 0
    %2100 = vmatprep.subr.bf16.mxu0 0
    %2101 = vmatpush1.bf16.msra.mxu0 0
    %2102 = vmatprep.subr.bf16.mxu0 0
    %2103 = vmatpush1.bf16.msra.mxu0 0
    %2104 = vmatprep.subr.bf16.mxu0 0
    %2105 = vmatpush1.bf16.msra.mxu0 0
    %2106 = vmatprep.subr.bf16.mxu0 0
    %2107 = vmatpush1.bf16.msra.mxu0 0
    %2108 = vmatprep.subr.bf16.mxu0 0
    %2109 = vmatpush1.bf16.msra.mxu0 0
    %2110 = vmatprep.subr.bf16.mxu0 0
    %2111 = vmatpush1.bf16.msra.mxu0 0
    %2112 = vmatprep.subr.bf16.mxu0 0
    %2113 = vmatpush1.bf16.msra.mxu0 0
    %2114 = vmatprep.mubr.bf16.mxu0 0
    %2115 = vmatmul.mubr.bf16.gmra.mrb[0].mxu0 %v2077
    %v2116 = vpop.f32.mrb[0].mxu0
    %v2117 = vadd.f32 0.0, %v2116
    %v2118 = vpop.f32.mrb[0].mxu0
    %v2119 = vpop.f32.mrb[0].mxu0
    %v2120 = vpop.f32.mrb[0].mxu0
    %2121 = vdwg.mxu0
    %v2122 = vpack.c.bf16 %v2037, %v2035
    %v2123 = vpack.c.bf16 %v2039, %v2039
    %v2125 = vsel %vm152, %v2123, 0
    %2127 = vmatprep.subr.bf16.mxu0 0
    %2128 = vmatpush1.bf16.msra.mxu0 %v2122
    %2129 = vmatprep.subr.bf16.mxu0 0
    %2130 = vmatpush1.bf16.msra.mxu0 %v2125
    %2131 = vmatprep.subr.bf16.mxu0 0
    %2132 = vmatpush1.bf16.msra.mxu0 0
    %2133 = vmatprep.subr.bf16.mxu0 0
    %2134 = vmatpush1.bf16.msra.mxu0 0
    %2135 = vmatprep.subr.bf16.mxu0 0
    %2136 = vmatpush1.bf16.msra.mxu0 0
    %2137 = vmatprep.subr.bf16.mxu0 0
    %2138 = vmatpush1.bf16.msra.mxu0 0
    %2139 = vmatprep.subr.bf16.mxu0 0
    %2140 = vmatpush1.bf16.msra.mxu0 0
    %2141 = vmatprep.subr.bf16.mxu0 0
    %2142 = vmatpush1.bf16.msra.mxu0 0
    %2143 = vmatprep.subr.bf16.mxu0 0
    %2144 = vmatpush1.bf16.msra.mxu0 0
    %2145 = vmatprep.subr.bf16.mxu0 0
    %2146 = vmatpush1.bf16.msra.mxu0 0
    %2147 = vmatprep.subr.bf16.mxu0 0
    %2148 = vmatpush1.bf16.msra.mxu0 0
    %2149 = vmatprep.subr.bf16.mxu0 0
    %2150 = vmatpush1.bf16.msra.mxu0 0
    %2151 = vmatprep.subr.bf16.mxu0 0
    %2152 = vmatpush1.bf16.msra.mxu0 0
    %2153 = vmatprep.subr.bf16.mxu0 0
    %2154 = vmatpush1.bf16.msra.mxu0 0
    %2155 = vmatprep.subr.bf16.mxu0 0
    %2156 = vmatpush1.bf16.msra.mxu0 0
    %2157 = vmatprep.subr.bf16.mxu0 0
    %2158 = vmatpush1.bf16.msra.mxu0 0
    %2159 = vmatprep.mubr.bf16.mxu0 0
    %2160 = vmatmul.mubr.bf16.gmra.mrb[0].mxu0 %v2077
    %v2161 = vpop.f32.mrb[0].mxu0
    %v2162 = vadd.f32 0.0, %v2161
    %v2163 = vpop.f32.mrb[0].mxu0
    %v2164 = vpop.f32.mrb[0].mxu0
    %v2165 = vpop.f32.mrb[0].mxu0
    %2166 = vdwg.mxu0
    %v2167 = vrcp.pop %v2162
    %2169 = vset.pattern.permute.xlu0 0
    %2170 = vperm.xlu0 %2169, %v2167
    %v2171 = vpop.permute.xlu0 %2170
    %2173 = vset.pattern.permute.xlu0 1
    %2174 = vperm.xlu0 %2173, %v2167
    %v2175 = vpop.permute.xlu0 %2174
    %v2177 = vsel %vm260, %v2171, %v2175
    %v2178 = vmul.f32 %v2117, %v2177
    %v2179 = vpack.c.bf16 %v2178, %v2178
    %v2180 = vld [vmem:[%s12] sm:$0xf]
    %v2181 = vld [vmem:[%s12 + $0x4] sm:$0xf]
    %v2182 = vld [vmem:[%s12 + $0x8] sm:$0xf]
    %v2183 = vld [vmem:[%s12 + $0xc] sm:$0xf]
    %v2184 = vld [vmem:[#allocation7] sm:$0x1]
    %v2186 = vlaneseq
    %v2187 = vshrl.u32 %v2186, 7
    %v2188 = vsub.s32 0, %v2187
    %v2189 = vrot.slane %v2184, %v2188
    %v2195 = vunpack.c.l.b16 %v2180
    %v2196 = vunpack.c.l.b16 %v2181
    %v2197 = vunpack.c.l.b16 %v2182
    %v2198 = vunpack.c.l.b16 %v2183
    %v2199 = vpack.c.b16 %v2196, %v2195
    %v2200 = vpack.c.b16 %v2198, %v2197
    %v2204 = vsel %vm272, %v2179, 0
    %2206 = vmatprep.subr.bf16.mxu0 0
    %2207 = vmatpush1.bf16.msra.mxu0 %v2199
    %2208 = vmatprep.subr.bf16.mxu0 0
    %2209 = vmatpush1.bf16.msra.mxu0 %v2200
    %2210 = vmatprep.subr.bf16.mxu0 0
    %2211 = vmatpush1.bf16.msra.mxu0 0
    %2212 = vmatprep.subr.bf16.mxu0 0
    %2213 = vmatpush1.bf16.msra.mxu0 0
    %2214 = vmatprep.subr.bf16.mxu0 0
    %2215 = vmatpush1.bf16.msra.mxu0 0
    %2216 = vmatprep.subr.bf16.mxu0 0
    %2217 = vmatpush1.bf16.msra.mxu0 0
    %2218 = vmatprep.subr.bf16.mxu0 0
    %2219 = vmatpush1.bf16.msra.mxu0 0
    %2220 = vmatprep.subr.bf16.mxu0 0
    %2221 = vmatpush1.bf16.msra.mxu0 0
    %2222 = vmatprep.subr.bf16.mxu0 0
    %2223 = vmatpush1.bf16.msra.mxu0 0
    %2224 = vmatprep.subr.bf16.mxu0 0
    %2225 = vmatpush1.bf16.msra.mxu0 0
    %2226 = vmatprep.subr.bf16.mxu0 0
    %2227 = vmatpush1.bf16.msra.mxu0 0
    %2228 = vmatprep.subr.bf16.mxu0 0
    %2229 = vmatpush1.bf16.msra.mxu0 0
    %2230 = vmatprep.subr.bf16.mxu0 0
    %2231 = vmatpush1.bf16.msra.mxu0 0
    %2232 = vmatprep.subr.bf16.mxu0 0
    %2233 = vmatpush1.bf16.msra.mxu0 0
    %2234 = vmatprep.subr.bf16.mxu0 0
    %2235 = vmatpush1.bf16.msra.mxu0 0
    %2236 = vmatprep.subr.bf16.mxu0 0
    %2237 = vmatpush1.bf16.msra.mxu0 0
    %2238 = vmatprep.mubr.bf16.mxu0 0
    %2239 = vmatmul.mubr.bf16.gmra.mrb[0].mxu0 %v2204
    %v2240 = vpop.f32.mrb[0].mxu0
    %v2241 = vadd.f32 %v2189, %v2240
    %v2242 = vpop.f32.mrb[0].mxu0
    %v2243 = vpop.f32.mrb[0].mxu0
    %v2244 = vpop.f32.mrb[0].mxu0
    %2245 = vdwg.mxu0
    %v2246 = vmax.f32 %v2241, 0.0
    %v2247 = vpack.c.bf16 %v2246, %v2246
    %v2248 = vld [vmem:[%s14] sm:$0xf]
    %v2249 = vld [vmem:[%s14 + $0x4] sm:$0xf]
    %v2250 = vld [vmem:[%s14 + $0x8] sm:$0xf]
    %v2251 = vld [vmem:[%s14 + $0xc] sm:$0xf]
    %v2252 = vld [vmem:[#allocation8] sm:$0x1]
    %v2254 = vlaneseq
    %v2255 = vshrl.u32 %v2254, 7
    %v2256 = vsub.s32 0, %v2255
    %v2257 = vrot.slane %v2252, %v2256
    %v2263 = vunpack.c.l.b16 %v2248
    %v2264 = vunpack.c.l.b16 %v2249
    %v2265 = vunpack.c.l.b16 %v2250
    %v2266 = vunpack.c.l.b16 %v2251
    %v2267 = vpack.c.b16 %v2264, %v2263
    %v2268 = vpack.c.b16 %v2266, %v2265
    %v2272 = vsel %vm272, %v2247, 0
    %2274 = vmatprep.subr.bf16.mxu0 0
    %2275 = vmatpush1.bf16.msra.mxu0 %v2267
    %2276 = vmatprep.subr.bf16.mxu0 0
    %2277 = vmatpush1.bf16.msra.mxu0 %v2268
    %2278 = vmatprep.subr.bf16.mxu0 0
    %2279 = vmatpush1.bf16.msra.mxu0 0
    %2280 = vmatprep.subr.bf16.mxu0 0
    %2281 = vmatpush1.bf16.msra.mxu0 0
    %2282 = vmatprep.subr.bf16.mxu0 0
    %2283 = vmatpush1.bf16.msra.mxu0 0
    %2284 = vmatprep.subr.bf16.mxu0 0
    %2285 = vmatpush1.bf16.msra.mxu0 0
    %2286 = vmatprep.subr.bf16.mxu0 0
    %2287 = vmatpush1.bf16.msra.mxu0 0
    %2288 = vmatprep.subr.bf16.mxu0 0
    %2289 = vmatpush1.bf16.msra.mxu0 0
    %2290 = vmatprep.subr.bf16.mxu0 0
    %2291 = vmatpush1.bf16.msra.mxu0 0
    %2292 = vmatprep.subr.bf16.mxu0 0
    %2293 = vmatpush1.bf16.msra.mxu0 0
    %2294 = vmatprep.subr.bf16.mxu0 0
    %2295 = vmatpush1.bf16.msra.mxu0 0
    %2296 = vmatprep.subr.bf16.mxu0 0
    %2297 = vmatpush1.bf16.msra.mxu0 0
    %2298 = vmatprep.subr.bf16.mxu0 0
    %2299 = vmatpush1.bf16.msra.mxu0 0
    %2300 = vmatprep.subr.bf16.mxu0 0
    %2301 = vmatpush1.bf16.msra.mxu0 0
    %2302 = vmatprep.subr.bf16.mxu0 0
    %2303 = vmatpush1.bf16.msra.mxu0 0
    %2304 = vmatprep.subr.bf16.mxu0 0
    %2305 = vmatpush1.bf16.msra.mxu0 0
    %2306 = vmatprep.mubr.bf16.mxu0 0
    %2307 = vmatmul.mubr.bf16.gmra.mrb[0].mxu0 %v2272
    %v2308 = vpop.f32.mrb[0].mxu0
    %v2309 = vadd.f32 %v2257, %v2308
    %v2310 = vpop.f32.mrb[0].mxu0
    %v2311 = vpop.f32.mrb[0].mxu0
    %v2312 = vpop.f32.mrb[0].mxu0
    %2313 = vdwg.mxu0
    %v2314 = vmax.f32 %v2309, 0.0
    %v2315 = vpack.c.bf16 %v2314, %v2314
    %v2316 = vld [vmem:[%s16] sm:$0xf]
    %v2317 = vld [vmem:[%s16 + $0x4] sm:$0xf]
    %v2318 = vld [vmem:[%s17] sm:$0x1]
    %v2320 = vlaneseq
    %v2321 = vshrl.u32 %v2320, 7
    %v2322 = vsub.s32 0, %v2321
    %v2323 = vrot.slane %v2318, %v2322
    %v2327 = vunpack.c.l.b16 %v2316
    %v2328 = vunpack.c.l.b16 %v2317
    %v2329 = vpack.c.b16 %v2328, %v2327
    %v2332 = vsel %vm260, %v2315, 0
    %2334 = vmatprep.subr.bf16.mxu0 0
    %2335 = vmatpush1.bf16.msra.mxu0 %v2329
    %2336 = vmatprep.subr.bf16.mxu0 0
    %2337 = vmatpush1.bf16.msra.mxu0 0
    %2338 = vmatprep.subr.bf16.mxu0 0
    %2339 = vmatpush1.bf16.msra.mxu0 0
    %2340 = vmatprep.subr.bf16.mxu0 0
    %2341 = vmatpush1.bf16.msra.mxu0 0
    %2342 = vmatprep.subr.bf16.mxu0 0
    %2343 = vmatpush1.bf16.msra.mxu0 0
    %2344 = vmatprep.subr.bf16.mxu0 0
    %2345 = vmatpush1.bf16.msra.mxu0 0
    %2346 = vmatprep.subr.bf16.mxu0 0
    %2347 = vmatpush1.bf16.msra.mxu0 0
    %2348 = vmatprep.subr.bf16.mxu0 0
    %2349 = vmatpush1.bf16.msra.mxu0 0
    %2350 = vmatprep.subr.bf16.mxu0 0
    %2351 = vmatpush1.bf16.msra.mxu0 0
    %2352 = vmatprep.subr.bf16.mxu0 0
    %2353 = vmatpush1.bf16.msra.mxu0 0
    %2354 = vmatprep.subr.bf16.mxu0 0
    %2355 = vmatpush1.bf16.msra.mxu0 0
    %2356 = vmatprep.subr.bf16.mxu0 0
    %2357 = vmatpush1.bf16.msra.mxu0 0
    %2358 = vmatprep.subr.bf16.mxu0 0
    %2359 = vmatpush1.bf16.msra.mxu0 0
    %2360 = vmatprep.subr.bf16.mxu0 0
    %2361 = vmatpush1.bf16.msra.mxu0 0
    %2362 = vmatprep.subr.bf16.mxu0 0
    %2363 = vmatpush1.bf16.msra.mxu0 0
    %2364 = vmatprep.subr.bf16.mxu0 0
    %2365 = vmatpush1.bf16.msra.mxu0 0
    %2366 = vmatprep.mubr.bf16.mxu0 0
    %2367 = vmatmul.mubr.bf16.gmra.mrb[0].mxu0 %v2332
    %v2368 = vpop.f32.mrb[0].mxu0
    %v2369 = vadd.f32 %v2323, %v2368
    %v2370 = vpop.f32.mrb[0].mxu0
    %v2371 = vpop.f32.mrb[0].mxu0
    %v2372 = vpop.f32.mrb[0].mxu0
    %2373 = vdwg.mxu0
    %2374 = vst [vmem:[%s18] sm:$0x3] %v2369
    // Predicated region
    $region90: #{_lambda_.1} parent=1 // pred_check
      _
    $region91: #{_lambda_.1} parent=1 // pred_check_branch
      %2376 = sbr.rel (0) target = $region93
    $region92: #{_lambda_.1} parent=1 // pred_region
      _
    $region93: #{_lambda_.1} parent=1 // pred_fallthru
      _
    // Predicated region
    $region94: #{_lambda_.1} parent=1 // pred_check
      _
    $region95: #{_lambda_.1} parent=1 // pred_check_branch
      %2378 = sbr.rel (0) target = $region97
    $region96: #{_lambda_.1} parent=1 // pred_region
      _
    $region97: #{_lambda_.1} parent=1 // pred_fallthru
      _
    %2379 = vsyncpa [#allocation4], 1
    %2380 = vsyncpa [#allocation6], 1
    %2381 = vsyncpa [#allocation9], 1

</llo_original>
